<compile_context>
chip_gen: v6e
topology: v6e:2x2x1
jax: 0.10.0
libtpu: 0.0.40
codegen_flags: <defaults>
</compile_context>

<pallas_src>
import functools
import math

import jax
import jax.numpy as jnp
from jax import lax
from jax.experimental import pallas as pl
from jax.experimental.pallas import tpu as pltpu


def _layer_norm_f32(x, gamma, beta, eps=1e-5):
    mu = jnp.mean(x, axis=-1, keepdims=True)
    var = jnp.mean((x - mu) ** 2, axis=-1, keepdims=True)
    return (x - mu) * lax.rsqrt(var + eps) * gamma + beta


def _fused_forward_kernel(
    x_ref, emb_w_ref, emb_b_ref, fc_w_ref, fc_b_ref,
    wqkv_ref, bqkv_ref, wo_ref, bo_ref,
    g1_ref, be1_ref, w1_ref, b1_ref, w2_ref, b2_ref, g2_ref, be2_ref,
    o_ref, h_scr, *, BT, S, H, nhead):
    """grid=(batch_tiles, num_layers): step (bt, l) applies layer l to tile bt."""
    l = pl.program_id(1)
    num_layers = pl.num_programs(1)
    R = BT * S
    hd = H // nhead
    scale = 1.0 / math.sqrt(hd)
    f32 = jnp.float32
    bf16 = jnp.bfloat16

    # ---- layer 0 of each batch tile: embedding (input projection) ----------
    @pl.when(l == 0)
    def _embed():
        x2 = x_ref[...].reshape(R, x_ref.shape[-1]).astype(bf16)
        h0 = (jnp.dot(x2, emb_w_ref[...], preferred_element_type=f32)
              + emb_b_ref[...])
        h_scr[...] = h0.astype(bf16).reshape(BT, S, H)

    # ---- one post-LN TransformerEncoderLayer (weights of layer `l`) --------
    x_bf = h_scr[...].reshape(R, H)                               # bf16 (R, H)
    qkv = (jnp.dot(x_bf, wqkv_ref[0], preferred_element_type=f32)
           + bqkv_ref[0])                                         # f32 (R, 3H)

    # Per-head attention with the output projection folded in per head:
    #   ctx @ Wo == sum_h ctx_h @ Wo[h*hd:(h+1)*hd, :]
    # -> no (R, H) context scratch, no masked narrow stores, no reload/cast.
    wo = wo_ref[0]                                                # bf16 (H, H)
    attn = jnp.zeros((R, H), f32)
    for h in range(nhead):
        qh = qkv[:, 0 * H + h * hd:0 * H + (h + 1) * hd].reshape(BT, S, hd)
        kh = qkv[:, 1 * H + h * hd:1 * H + (h + 1) * hd].reshape(BT, S, hd)
        vh = qkv[:, 2 * H + h * hd:2 * H + (h + 1) * hd].reshape(BT, S, hd)
        s = jnp.einsum("bqd,bkd->bqk", qh, kh,
                       preferred_element_type=f32) * scale
        s = s - jnp.max(s, axis=-1, keepdims=True)
        p = jnp.exp(s)
        p = p * pl.reciprocal(jnp.sum(p, axis=-1, keepdims=True), approx=True)
        ctx_h = jnp.einsum("bqk,bkd->bqd", p, vh,
                           preferred_element_type=f32)            # (BT, S, hd)
        attn = attn + jnp.dot(ctx_h.reshape(R, hd).astype(bf16),
                              wo[h * hd:(h + 1) * hd, :],
                              preferred_element_type=f32)
    attn = attn + bo_ref[0]

    # TODO(synk): dropout (p=0.1) in the PyTorch layer is stochastic; treated
    # as identity (eval / inference mode).
    x1 = _layer_norm_f32(x_bf.astype(f32) + attn, g1_ref[0], be1_ref[0])

    h1 = jnp.maximum(
        jnp.dot(x1.astype(bf16), w1_ref[0], preferred_element_type=f32)
        + b1_ref[0], 0.0)                                         # ReLU
    ff = (jnp.dot(h1.astype(bf16), w2_ref[0], preferred_element_type=f32)
          + b2_ref[0])
    h_new = _layer_norm_f32(x1 + ff, g2_ref[0], be2_ref[0])
    h_scr[...] = h_new.astype(bf16).reshape(BT, S, H)

    # ---- last layer: fc head on last-token rows only, one dense store ------
    @pl.when(l == num_layers - 1)
    def _head():
        last = h_scr[:, S - 1, :]                                 # (BT, H) bf16
        o_ref[...] = (jnp.dot(last, fc_w_ref[...], preferred_element_type=f32)
                      + fc_b_ref[...])


# ----------------------------- parameters ------------------------------------
def init_params(key, input_dim, hidden_dim, num_layers, output_dim, ffn_dim):
    H, F, L = hidden_dim, ffn_dim, num_layers

    def w(k, shape, scale=0.05):
        return scale * jax.random.normal(k, shape, jnp.float32)

    k = iter(jax.random.split(key, 12))
    # TODO(synk): init is a scaled normal, not PyTorch's nn.Linear/LayerNorm
    # default init; load real weights for checkpoint parity.
    # Weight matrices are pre-transposed to (in, out) and stored bf16; biases
    # and LayerNorm params stay f32.  Per-layer params are stacked along a
    # leading L axis so the fused kernel streams one layer per grid step.
    return {
        "emb_w": w(next(k), (input_dim, H)).astype(jnp.bfloat16),
        "emb_b": w(next(k), (1, H)),
        "fc_w": w(next(k), (H, output_dim)).astype(jnp.bfloat16),
        "fc_b": w(next(k), (1, output_dim)),
        "wqkv": w(next(k), (L, H, 3 * H)).astype(jnp.bfloat16),
        "bqkv": w(next(k), (L, 1, 3 * H)),
        "wo": w(next(k), (L, H, H)).astype(jnp.bfloat16),
        "bo": w(next(k), (L, 1, H)),
        "g1": jnp.ones((L, 1, H), jnp.float32),
        "be1": jnp.zeros((L, 1, H), jnp.float32),
        "w1": w(next(k), (L, H, F)).astype(jnp.bfloat16),
        "b1": w(next(k), (L, 1, F)),
        "w2": w(next(k), (L, F, H)).astype(jnp.bfloat16),
        "b2": w(next(k), (L, 1, H)),
        "g2": jnp.ones((L, 1, H), jnp.float32),
        "be2": jnp.zeros((L, 1, H), jnp.float32),
    }


# ------------------------------- forward --------------------------------------
def transformer_forward(x, params, *, nhead, batch_tile=None):
    B, S, input_dim = x.shape
    H = params["emb_w"].shape[1]
    O = params["fc_w"].shape[1]
    L = params["wqkv"].shape[0]
    F = params["w1"].shape[2]

    # Batch tiling: "parallel" axis for v7x's 2 TCs and to bound per-TC VMEM.
    # (If batch_tile < B it must keep the out block (8,128)-legal: use the
    # full batch per tile, or a multiple of 8.)
    BT = batch_tile or B
    assert B % BT == 0, "batch must be divisible by batch_tile"
    nbt = B // BT

    def full(shape):                   # whole array, constant block index
        return pl.BlockSpec(shape, lambda bt, l, _n=len(shape): (0,) * _n)

    def stacked(shape):                # one layer slab per inner grid step
        return pl.BlockSpec((1,) + shape,
                            lambda bt, l, _n=len(shape): (l,) + (0,) * _n)

    in_specs = [
        pl.BlockSpec((BT, S, input_dim), lambda bt, l: (bt, 0, 0)),   # x
        full((input_dim, H)),          # emb_w
        full((1, H)),                  # emb_b
        full((H, O)),                  # fc_w
        full((1, O)),                  # fc_b
        stacked((H, 3 * H)),           # wqkv
        stacked((1, 3 * H)),           # bqkv
        stacked((H, H)),               # wo
        stacked((1, H)),               # bo
        stacked((1, H)),               # g1
        stacked((1, H)),               # be1
        stacked((H, F)),               # w1
        stacked((1, F)),               # b1
        stacked((F, H)),               # w2
        stacked((1, H)),               # b2
        stacked((1, H)),               # g2
        stacked((1, H)),               # be2
    ]
    out_spec = pl.BlockSpec((BT, O), lambda bt, l: (bt, 0))

    # ---- VMEM budget from the actual footprint, clamped per generation -----
    def nbytes(shape, dtype):
        return int(math.prod(shape)) * jnp.dtype(dtype).itemsize

    per_layer = (nbytes((H, 3 * H), jnp.bfloat16) + nbytes((1, 3 * H), jnp.float32)
                 + nbytes((H, H), jnp.bfloat16) + nbytes((1, H), jnp.float32)
                 + nbytes((H, F), jnp.bfloat16) + nbytes((1, F), jnp.float32)
                 + nbytes((F, H), jnp.bfloat16) + nbytes((1, H), jnp.float32)
                 + 4 * nbytes((1, H), jnp.float32))
    resident = (nbytes((BT, S, input_dim), jnp.float32)
                + nbytes((input_dim, H), jnp.bfloat16) + nbytes((1, H), jnp.float32)
                + nbytes((H, O), jnp.bfloat16) + nbytes((1, O), jnp.float32)
                + nbytes((BT, O), jnp.float32))
    scratch_bytes = nbytes((BT, S, H), jnp.bfloat16)
    need = scratch_bytes + 2 * per_layer + 2 * resident   # double-buffered slabs
    try:
        vmem_cap = int(pltpu.get_tpu_info().vmem_capacity_bytes)
    except Exception:
        vmem_cap = 64 * 1024 * 1024                       # conservative (v7x)
    vmem_limit = int(min(max(2 * need + (4 << 20), 16 << 20),
                         int(0.75 * vmem_cap)))

    # ---- advisory cost estimate --------------------------------------------
    hd = H // nhead
    flops = (2 * B * S * input_dim * H
             + L * (2 * B * S * H * 3 * H          # qkv projection
                    + 4 * B * nhead * S * S * hd   # scores + context
                    + 2 * B * S * H * H            # out projection (per head)
                    + 4 * B * S * H * F)           # FFN
             + 2 * B * H * O)                      # head on last tokens only
    leaves = jax.tree_util.tree_leaves(params)
    bytes_accessed = int(sum(a.size * a.dtype.itemsize for a in leaves)
                         + x.size * 4 + B * O * 4)
    cost = pl.CostEstimate(flops=int(flops),
                           transcendentals=int(L * B * nhead * S * S),
                           bytes_accessed=bytes_accessed)

    return pl.pallas_call(
        functools.partial(_fused_forward_kernel, BT=BT, S=S, H=H, nhead=nhead),
        out_shape=jax.ShapeDtypeStruct((B, O), jnp.float32),
        grid_spec=pltpu.PrefetchScalarGridSpec(
            num_scalar_prefetch=0,
            grid=(nbt, L),                         # batch tiles outer, layers inner
            in_specs=in_specs,
            out_specs=out_spec,
            scratch_shapes=[pltpu.VMEM((BT, S, H), jnp.bfloat16)],  # resident h
        ),
        compiler_params=pltpu.CompilerParams(
            dimension_semantics=("parallel", "arbitrary"),
            vmem_limit_bytes=vmem_limit),
        cost_estimate=cost,
    )(x, params["emb_w"], params["emb_b"], params["fc_w"], params["fc_b"],
      params["wqkv"], params["bqkv"], params["wo"], params["bo"],
      params["g1"], params["be1"], params["w1"], params["b1"],
      params["w2"], params["b2"], params["g2"], params["be2"])


if __name__ == "__main__":
    B, S = 2, 8
    INPUT_DIM, HIDDEN_DIM, NUM_LAYERS, OUTPUT_DIM = 16, 32, 2, 4
    NHEAD = 4                 # nn.TransformerEncoderLayer(nhead=4)
    FFN_DIM = 2048            # nn.TransformerEncoderLayer default dim_feedforward

    key = jax.random.PRNGKey(0)
    pkey, xkey = jax.random.split(key)
    params = init_params(pkey, INPUT_DIM, HIDDEN_DIM, NUM_LAYERS,
                         OUTPUT_DIM, FFN_DIM)
    x = jax.random.normal(xkey, (B, S, INPUT_DIM), jnp.float32)

    out = transformer_forward(x, params, nhead=NHEAD)
    jax.block_until_ready(out)
    assert out.shape == (B, OUTPUT_DIM), out.shape
    print("KERNEL_OK")
</pallas_src>

<mosaic_0001>
module attributes {stable_mosaic.version = 11 : i64} {
  func.func @_fused_forward_kernel(%arg0: i32, %arg1: i32, %arg2: memref<2x8x16xf32, #tpu.memory_space<vmem>>, %arg3: memref<16x32xbf16, #tpu.memory_space<vmem>>, %arg4: memref<1x32xf32, #tpu.memory_space<vmem>>, %arg5: memref<32x4xbf16, #tpu.memory_space<vmem>>, %arg6: memref<1x4xf32, #tpu.memory_space<vmem>>, %arg7: memref<1x32x96xbf16, #tpu.memory_space<vmem>>, %arg8: memref<1x1x96xf32, #tpu.memory_space<vmem>>, %arg9: memref<1x32x32xbf16, #tpu.memory_space<vmem>>, %arg10: memref<1x1x32xf32, #tpu.memory_space<vmem>>, %arg11: memref<1x1x32xf32, #tpu.memory_space<vmem>>, %arg12: memref<1x1x32xf32, #tpu.memory_space<vmem>>, %arg13: memref<1x32x2048xbf16, #tpu.memory_space<vmem>>, %arg14: memref<1x1x2048xf32, #tpu.memory_space<vmem>>, %arg15: memref<1x2048x32xbf16, #tpu.memory_space<vmem>>, %arg16: memref<1x1x32xf32, #tpu.memory_space<vmem>>, %arg17: memref<1x1x32xf32, #tpu.memory_space<vmem>>, %arg18: memref<1x1x32xf32, #tpu.memory_space<vmem>>, %arg19: memref<2x4xf32, #tpu.memory_space<vmem>>, %arg20: memref<2x8x32xbf16, #tpu.memory_space<vmem>>) attributes {dimension_semantics = [#tpu.dimension_semantics<parallel>, #tpu.dimension_semantics<arbitrary>], iteration_bounds = array<i64: 1, 2>, scalar_prefetch = 0 : i64, scratch_operands = 1 : i64, tpu.core_type = #tpu.core_type<tc>, window_params = [{transform_indices = @transform_0, window_bounds = array<i64: 2, 8, 16>}, {pipeline_mode = #tpu.pipeline_mode<synchronous>, transform_indices = @transform_1, window_bounds = array<i64: 16, 32>}, {pipeline_mode = #tpu.pipeline_mode<synchronous>, transform_indices = @transform_2, window_bounds = array<i64: 1, 32>}, {pipeline_mode = #tpu.pipeline_mode<synchronous>, transform_indices = @transform_3, window_bounds = array<i64: 32, 4>}, {pipeline_mode = #tpu.pipeline_mode<synchronous>, transform_indices = @transform_4, window_bounds = array<i64: 1, 4>}, {transform_indices = @transform_5, window_bounds = array<i64: 1, 32, 96>}, {transform_indices = @transform_6, window_bounds = array<i64: 1, 1, 96>}, {transform_indices = @transform_7, window_bounds = array<i64: 1, 32, 32>}, {transform_indices = @transform_8, window_bounds = array<i64: 1, 1, 32>}, {transform_indices = @transform_9, window_bounds = array<i64: 1, 1, 32>}, {transform_indices = @transform_10, window_bounds = array<i64: 1, 1, 32>}, {transform_indices = @transform_11, window_bounds = array<i64: 1, 32, 2048>}, {transform_indices = @transform_12, window_bounds = array<i64: 1, 1, 2048>}, {transform_indices = @transform_13, window_bounds = array<i64: 1, 2048, 32>}, {transform_indices = @transform_14, window_bounds = array<i64: 1, 1, 32>}, {transform_indices = @transform_15, window_bounds = array<i64: 1, 1, 32>}, {transform_indices = @transform_16, window_bounds = array<i64: 1, 1, 32>}, {transform_indices = @transform_17, window_bounds = array<i64: 2, 4>}]} {
    %c0_i32 = arith.constant 0 : i32
    %0 = arith.cmpi eq, %arg1, %c0_i32 : i32
    %1 = arith.extui %0 : i1 to i32
    %c0_i32_0 = arith.constant 0 : i32
    %2 = arith.cmpi ne, %1, %c0_i32_0 : i32
    scf.if %2 {
      %c0_81 = arith.constant 0 : index
      %c0_82 = arith.constant 0 : index
      %c0_83 = arith.constant 0 : index
      %198 = vector.load %arg2[%c0_81, %c0_82, %c0_83] : memref<2x8x16xf32, #tpu.memory_space<vmem>>, vector<2x8x16xf32>
      %199 = vector.shape_cast %198 : vector<2x8x16xf32> to vector<16x16xf32>
      %200 = arith.truncf %199 : vector<16x16xf32> to vector<16x16xbf16>
      %c0_84 = arith.constant 0 : index
      %c0_85 = arith.constant 0 : index
      %201 = vector.load %arg3[%c0_84, %c0_85] : memref<16x32xbf16, #tpu.memory_space<vmem>>, vector<16x32xbf16>
      %cst_86 = arith.constant dense<0.000000e+00> : vector<16x32xf32>
      %202 = tpu.matmul %200, %201, %cst_86 {dimension_numbers = #tpu.dot_dimension_numbers<[1], [0], [0], [1], [0, 0, 1, 1], [], []>} : vector<16x16xbf16>, vector<16x32xbf16>, vector<16x32xf32> -> vector<16x32xf32>
      %c0_87 = arith.constant 0 : index
      %c0_88 = arith.constant 0 : index
      %203 = vector.load %arg4[%c0_87, %c0_88] : memref<1x32xf32, #tpu.memory_space<vmem>>, vector<1x32xf32>
      %204 = vector.broadcast %203 : vector<1x32xf32> to vector<16x32xf32>
      %205 = arith.addf %202, %204 : vector<16x32xf32>
      %206 = arith.truncf %205 : vector<16x32xf32> to vector<16x32xbf16>
      %207 = vector.shape_cast %206 : vector<16x32xbf16> to vector<2x8x32xbf16>
      %c0_89 = arith.constant 0 : index
      %c0_90 = arith.constant 0 : index
      %c0_91 = arith.constant 0 : index
      %208 = vector.load %arg20[%c0_89, %c0_90, %c0_91] : memref<2x8x32xbf16, #tpu.memory_space<vmem>>, vector<2x8x32xbf16>
      tpu.vector_store %arg20[%c0_89, %c0_90, %c0_91], %207 {strides = array<i32>} : memref<2x8x32xbf16, #tpu.memory_space<vmem>>, vector<2x8x32xbf16>,
    } else {
    }
    %c0 = arith.constant 0 : index
    %c0_1 = arith.constant 0 : index
    %c0_2 = arith.constant 0 : index
    %3 = vector.load %arg20[%c0, %c0_1, %c0_2] : memref<2x8x32xbf16, #tpu.memory_space<vmem>>, vector<2x8x32xbf16>
    %4 = vector.shape_cast %3 : vector<2x8x32xbf16> to vector<16x32xbf16>
    %c0_3 = arith.constant 0 : index
    %c0_4 = arith.constant 0 : index
    %c0_5 = arith.constant 0 : index
    %5 = vector.load %arg7[%c0_3, %c0_4, %c0_5] : memref<1x32x96xbf16, #tpu.memory_space<vmem>>, vector<1x32x96xbf16>
    %6 = vector.shape_cast %5 : vector<1x32x96xbf16> to vector<32x96xbf16>
    %cst = arith.constant dense<0.000000e+00> : vector<16x96xf32>
    %7 = tpu.matmul %4, %6, %cst {dimension_numbers = #tpu.dot_dimension_numbers<[1], [0], [0], [1], [0, 0, 1, 1], [], []>} : vector<16x32xbf16>, vector<32x96xbf16>, vector<16x96xf32> -> vector<16x96xf32>
    %c0_6 = arith.constant 0 : index
    %c0_7 = arith.constant 0 : index
    %c0_8 = arith.constant 0 : index
    %8 = vector.load %arg8[%c0_6, %c0_7, %c0_8] : memref<1x1x96xf32, #tpu.memory_space<vmem>>, vector<1x1x96xf32>
    %9 = vector.shape_cast %8 : vector<1x1x96xf32> to vector<1x96xf32>
    %10 = vector.broadcast %9 : vector<1x96xf32> to vector<16x96xf32>
    %11 = arith.addf %7, %10 : vector<16x96xf32>
    %c0_9 = arith.constant 0 : index
    %c0_10 = arith.constant 0 : index
    %c0_11 = arith.constant 0 : index
    %12 = vector.load %arg9[%c0_9, %c0_10, %c0_11] : memref<1x32x32xbf16, #tpu.memory_space<vmem>>, vector<1x32x32xbf16>
    %13 = vector.shape_cast %12 : vector<1x32x32xbf16> to vector<32x32xbf16>
    %cst_12 = arith.constant 0.000000e+00 : f32
    %14 = vector.broadcast %cst_12 : f32 to vector<16x32xf32>
    %15 = vector.extract_strided_slice %11 {offsets = [0, 0], sizes = [16, 8], strides = [1, 1]} : vector<16x96xf32> to vector<16x8xf32>
    %16 = vector.shape_cast %15 : vector<16x8xf32> to vector<2x8x8xf32>
    %17 = vector.extract_strided_slice %11 {offsets = [0, 32], sizes = [16, 8], strides = [1, 1]} : vector<16x96xf32> to vector<16x8xf32>
    %18 = vector.shape_cast %17 : vector<16x8xf32> to vector<2x8x8xf32>
    %19 = vector.extract_strided_slice %11 {offsets = [0, 64], sizes = [16, 8], strides = [1, 1]} : vector<16x96xf32> to vector<16x8xf32>
    %20 = vector.shape_cast %19 : vector<16x8xf32> to vector<2x8x8xf32>
    "tpu.trace_start"() <{level = 10 : i32, message = "bqd,bkd->bqk"}> : () -> ()
    %cst_13 = arith.constant dense<0.000000e+00> : vector<2x8x8xf32>
    %21 = tpu.matmul %16, %18, %cst_13 {dimension_numbers = #tpu.dot_dimension_numbers<[2], [2], [1], [1], [0, 0, 0, 1, 1, 1], [0], [0]>} : vector<2x8x8xf32>, vector<2x8x8xf32>, vector<2x8x8xf32> -> vector<2x8x8xf32>
    "tpu.trace_stop"() : () -> ()
    %cst_14 = arith.constant 0.353553385 : f32
    %22 = vector.broadcast %cst_14 : f32 to vector<2x8x8xf32>
    %23 = arith.mulf %21, %22 : vector<2x8x8xf32>
    %cst_15 = arith.constant dense<0xFF800000> : vector<2x8xf32>
    %24 = vector.multi_reduction <maximumf>, %23, %cst_15 [2] : vector<2x8x8xf32> to vector<2x8xf32>
    %25 = vector.shape_cast %24 : vector<2x8xf32> to vector<2x8x1xf32>
    %26 = vector.broadcast %25 : vector<2x8x1xf32> to vector<2x8x8xf32>
    %27 = arith.subf %23, %26 : vector<2x8x8xf32>
    %28 = math.exp %27 : vector<2x8x8xf32>
    %cst_16 = arith.constant dense<0.000000e+00> : vector<2x8xf32>
    %29 = vector.multi_reduction <add>, %28, %cst_16 [2] : vector<2x8x8xf32> to vector<2x8xf32>
    %30 = vector.shape_cast %29 : vector<2x8xf32> to vector<2x8x1xf32>
    %31 = tpu.reciprocal %30 {approx = true} : vector<2x8x1xf32> -> vector<2x8x1xf32>
    %32 = vector.broadcast %31 : vector<2x8x1xf32> to vector<2x8x8xf32>
    %33 = arith.mulf %28, %32 : vector<2x8x8xf32>
    "tpu.trace_start"() <{level = 10 : i32, message = "bqk,bkd->bqd"}> : () -> ()
    %cst_17 = arith.constant dense<0.000000e+00> : vector<2x8x8xf32>
    %34 = tpu.matmul %33, %20, %cst_17 {dimension_numbers = #tpu.dot_dimension_numbers<[2], [1], [1], [2], [0, 0, 0, 1, 1, 2], [0], [0]>} : vector<2x8x8xf32>, vector<2x8x8xf32>, vector<2x8x8xf32> -> vector<2x8x8xf32>
    "tpu.trace_stop"() : () -> ()
    %35 = vector.shape_cast %34 : vector<2x8x8xf32> to vector<16x8xf32>
    %36 = arith.truncf %35 : vector<16x8xf32> to vector<16x8xbf16>
    %37 = vector.extract_strided_slice %13 {offsets = [0, 0], sizes = [8, 32], strides = [1, 1]} : vector<32x32xbf16> to vector<8x32xbf16>
    %cst_18 = arith.constant dense<0.000000e+00> : vector<16x32xf32>
    %38 = tpu.matmul %36, %37, %cst_18 {dimension_numbers = #tpu.dot_dimension_numbers<[1], [0], [0], [1], [0, 0, 1, 1], [], []>} : vector<16x8xbf16>, vector<8x32xbf16>, vector<16x32xf32> -> vector<16x32xf32>
    %39 = arith.addf %14, %38 : vector<16x32xf32>
    %40 = vector.extract_strided_slice %11 {offsets = [0, 8], sizes = [16, 8], strides = [1, 1]} : vector<16x96xf32> to vector<16x8xf32>
    %41 = vector.shape_cast %40 : vector<16x8xf32> to vector<2x8x8xf32>
    %42 = vector.extract_strided_slice %11 {offsets = [0, 40], sizes = [16, 8], strides = [1, 1]} : vector<16x96xf32> to vector<16x8xf32>
    %43 = vector.shape_cast %42 : vector<16x8xf32> to vector<2x8x8xf32>
    %44 = vector.extract_strided_slice %11 {offsets = [0, 72], sizes = [16, 8], strides = [1, 1]} : vector<16x96xf32> to vector<16x8xf32>
    %45 = vector.shape_cast %44 : vector<16x8xf32> to vector<2x8x8xf32>
    "tpu.trace_start"() <{level = 10 : i32, message = "bqd,bkd->bqk"}> : () -> ()
    %cst_19 = arith.constant dense<0.000000e+00> : vector<2x8x8xf32>
    %46 = tpu.matmul %41, %43, %cst_19 {dimension_numbers = #tpu.dot_dimension_numbers<[2], [2], [1], [1], [0, 0, 0, 1, 1, 1], [0], [0]>} : vector<2x8x8xf32>, vector<2x8x8xf32>, vector<2x8x8xf32> -> vector<2x8x8xf32>
    "tpu.trace_stop"() : () -> ()
    %cst_20 = arith.constant 0.353553385 : f32
    %47 = vector.broadcast %cst_20 : f32 to vector<2x8x8xf32>
    %48 = arith.mulf %46, %47 : vector<2x8x8xf32>
    %cst_21 = arith.constant dense<0xFF800000> : vector<2x8xf32>
    %49 = vector.multi_reduction <maximumf>, %48, %cst_21 [2] : vector<2x8x8xf32> to vector<2x8xf32>
    %50 = vector.shape_cast %49 : vector<2x8xf32> to vector<2x8x1xf32>
    %51 = vector.broadcast %50 : vector<2x8x1xf32> to vector<2x8x8xf32>
    %52 = arith.subf %48, %51 : vector<2x8x8xf32>
    %53 = math.exp %52 : vector<2x8x8xf32>
    %cst_22 = arith.constant dense<0.000000e+00> : vector<2x8xf32>
    %54 = vector.multi_reduction <add>, %53, %cst_22 [2] : vector<2x8x8xf32> to vector<2x8xf32>
    %55 = vector.shape_cast %54 : vector<2x8xf32> to vector<2x8x1xf32>
    %56 = tpu.reciprocal %55 {approx = true} : vector<2x8x1xf32> -> vector<2x8x1xf32>
    %57 = vector.broadcast %56 : vector<2x8x1xf32> to vector<2x8x8xf32>
    %58 = arith.mulf %53, %57 : vector<2x8x8xf32>
    "tpu.trace_start"() <{level = 10 : i32, message = "bqk,bkd->bqd"}> : () -> ()
    %cst_23 = arith.constant dense<0.000000e+00> : vector<2x8x8xf32>
    %59 = tpu.matmul %58, %45, %cst_23 {dimension_numbers = #tpu.dot_dimension_numbers<[2], [1], [1], [2], [0, 0, 0, 1, 1, 2], [0], [0]>} : vector<2x8x8xf32>, vector<2x8x8xf32>, vector<2x8x8xf32> -> vector<2x8x8xf32>
    "tpu.trace_stop"() : () -> ()
    %60 = vector.shape_cast %59 : vector<2x8x8xf32> to vector<16x8xf32>
    %61 = arith.truncf %60 : vector<16x8xf32> to vector<16x8xbf16>
    %62 = vector.extract_strided_slice %13 {offsets = [8, 0], sizes = [8, 32], strides = [1, 1]} : vector<32x32xbf16> to vector<8x32xbf16>
    %cst_24 = arith.constant dense<0.000000e+00> : vector<16x32xf32>
    %63 = tpu.matmul %61, %62, %cst_24 {dimension_numbers = #tpu.dot_dimension_numbers<[1], [0], [0], [1], [0, 0, 1, 1], [], []>} : vector<16x8xbf16>, vector<8x32xbf16>, vector<16x32xf32> -> vector<16x32xf32>
    %64 = arith.addf %39, %63 : vector<16x32xf32>
    %65 = vector.extract_strided_slice %11 {offsets = [0, 16], sizes = [16, 8], strides = [1, 1]} : vector<16x96xf32> to vector<16x8xf32>
    %66 = vector.shape_cast %65 : vector<16x8xf32> to vector<2x8x8xf32>
    %67 = vector.extract_strided_slice %11 {offsets = [0, 48], sizes = [16, 8], strides = [1, 1]} : vector<16x96xf32> to vector<16x8xf32>
    %68 = vector.shape_cast %67 : vector<16x8xf32> to vector<2x8x8xf32>
    %69 = vector.extract_strided_slice %11 {offsets = [0, 80], sizes = [16, 8], strides = [1, 1]} : vector<16x96xf32> to vector<16x8xf32>
    %70 = vector.shape_cast %69 : vector<16x8xf32> to vector<2x8x8xf32>
    "tpu.trace_start"() <{level = 10 : i32, message = "bqd,bkd->bqk"}> : () -> ()
    %cst_25 = arith.constant dense<0.000000e+00> : vector<2x8x8xf32>
    %71 = tpu.matmul %66, %68, %cst_25 {dimension_numbers = #tpu.dot_dimension_numbers<[2], [2], [1], [1], [0, 0, 0, 1, 1, 1], [0], [0]>} : vector<2x8x8xf32>, vector<2x8x8xf32>, vector<2x8x8xf32> -> vector<2x8x8xf32>
    "tpu.trace_stop"() : () -> ()
    %cst_26 = arith.constant 0.353553385 : f32
    %72 = vector.broadcast %cst_26 : f32 to vector<2x8x8xf32>
    %73 = arith.mulf %71, %72 : vector<2x8x8xf32>
    %cst_27 = arith.constant dense<0xFF800000> : vector<2x8xf32>
    %74 = vector.multi_reduction <maximumf>, %73, %cst_27 [2] : vector<2x8x8xf32> to vector<2x8xf32>
    %75 = vector.shape_cast %74 : vector<2x8xf32> to vector<2x8x1xf32>
    %76 = vector.broadcast %75 : vector<2x8x1xf32> to vector<2x8x8xf32>
    %77 = arith.subf %73, %76 : vector<2x8x8xf32>
    %78 = math.exp %77 : vector<2x8x8xf32>
    %cst_28 = arith.constant dense<0.000000e+00> : vector<2x8xf32>
    %79 = vector.multi_reduction <add>, %78, %cst_28 [2] : vector<2x8x8xf32> to vector<2x8xf32>
    %80 = vector.shape_cast %79 : vector<2x8xf32> to vector<2x8x1xf32>
    %81 = tpu.reciprocal %80 {approx = true} : vector<2x8x1xf32> -> vector<2x8x1xf32>
    %82 = vector.broadcast %81 : vector<2x8x1xf32> to vector<2x8x8xf32>
    %83 = arith.mulf %78, %82 : vector<2x8x8xf32>
    "tpu.trace_start"() <{level = 10 : i32, message = "bqk,bkd->bqd"}> : () -> ()
    %cst_29 = arith.constant dense<0.000000e+00> : vector<2x8x8xf32>
    %84 = tpu.matmul %83, %70, %cst_29 {dimension_numbers = #tpu.dot_dimension_numbers<[2], [1], [1], [2], [0, 0, 0, 1, 1, 2], [0], [0]>} : vector<2x8x8xf32>, vector<2x8x8xf32>, vector<2x8x8xf32> -> vector<2x8x8xf32>
    "tpu.trace_stop"() : () -> ()
    %85 = vector.shape_cast %84 : vector<2x8x8xf32> to vector<16x8xf32>
    %86 = arith.truncf %85 : vector<16x8xf32> to vector<16x8xbf16>
    %87 = vector.extract_strided_slice %13 {offsets = [16, 0], sizes = [8, 32], strides = [1, 1]} : vector<32x32xbf16> to vector<8x32xbf16>
    %cst_30 = arith.constant dense<0.000000e+00> : vector<16x32xf32>
    %88 = tpu.matmul %86, %87, %cst_30 {dimension_numbers = #tpu.dot_dimension_numbers<[1], [0], [0], [1], [0, 0, 1, 1], [], []>} : vector<16x8xbf16>, vector<8x32xbf16>, vector<16x32xf32> -> vector<16x32xf32>
    %89 = arith.addf %64, %88 : vector<16x32xf32>
    %90 = vector.extract_strided_slice %11 {offsets = [0, 24], sizes = [16, 8], strides = [1, 1]} : vector<16x96xf32> to vector<16x8xf32>
    %91 = vector.shape_cast %90 : vector<16x8xf32> to vector<2x8x8xf32>
    %92 = vector.extract_strided_slice %11 {offsets = [0, 56], sizes = [16, 8], strides = [1, 1]} : vector<16x96xf32> to vector<16x8xf32>
    %93 = vector.shape_cast %92 : vector<16x8xf32> to vector<2x8x8xf32>
    %94 = vector.extract_strided_slice %11 {offsets = [0, 88], sizes = [16, 8], strides = [1, 1]} : vector<16x96xf32> to vector<16x8xf32>
    %95 = vector.shape_cast %94 : vector<16x8xf32> to vector<2x8x8xf32>
    "tpu.trace_start"() <{level = 10 : i32, message = "bqd,bkd->bqk"}> : () -> ()
    %cst_31 = arith.constant dense<0.000000e+00> : vector<2x8x8xf32>
    %96 = tpu.matmul %91, %93, %cst_31 {dimension_numbers = #tpu.dot_dimension_numbers<[2], [2], [1], [1], [0, 0, 0, 1, 1, 1], [0], [0]>} : vector<2x8x8xf32>, vector<2x8x8xf32>, vector<2x8x8xf32> -> vector<2x8x8xf32>
    "tpu.trace_stop"() : () -> ()
    %cst_32 = arith.constant 0.353553385 : f32
    %97 = vector.broadcast %cst_32 : f32 to vector<2x8x8xf32>
    %98 = arith.mulf %96, %97 : vector<2x8x8xf32>
    %cst_33 = arith.constant dense<0xFF800000> : vector<2x8xf32>
    %99 = vector.multi_reduction <maximumf>, %98, %cst_33 [2] : vector<2x8x8xf32> to vector<2x8xf32>
    %100 = vector.shape_cast %99 : vector<2x8xf32> to vector<2x8x1xf32>
    %101 = vector.broadcast %100 : vector<2x8x1xf32> to vector<2x8x8xf32>
    %102 = arith.subf %98, %101 : vector<2x8x8xf32>
    %103 = math.exp %102 : vector<2x8x8xf32>
    %cst_34 = arith.constant dense<0.000000e+00> : vector<2x8xf32>
    %104 = vector.multi_reduction <add>, %103, %cst_34 [2] : vector<2x8x8xf32> to vector<2x8xf32>
    %105 = vector.shape_cast %104 : vector<2x8xf32> to vector<2x8x1xf32>
    %106 = tpu.reciprocal %105 {approx = true} : vector<2x8x1xf32> -> vector<2x8x1xf32>
    %107 = vector.broadcast %106 : vector<2x8x1xf32> to vector<2x8x8xf32>
    %108 = arith.mulf %103, %107 : vector<2x8x8xf32>
    "tpu.trace_start"() <{level = 10 : i32, message = "bqk,bkd->bqd"}> : () -> ()
    %cst_35 = arith.constant dense<0.000000e+00> : vector<2x8x8xf32>
    %109 = tpu.matmul %108, %95, %cst_35 {dimension_numbers = #tpu.dot_dimension_numbers<[2], [1], [1], [2], [0, 0, 0, 1, 1, 2], [0], [0]>} : vector<2x8x8xf32>, vector<2x8x8xf32>, vector<2x8x8xf32> -> vector<2x8x8xf32>
    "tpu.trace_stop"() : () -> ()
    %110 = vector.shape_cast %109 : vector<2x8x8xf32> to vector<16x8xf32>
    %111 = arith.truncf %110 : vector<16x8xf32> to vector<16x8xbf16>
    %112 = vector.extract_strided_slice %13 {offsets = [24, 0], sizes = [8, 32], strides = [1, 1]} : vector<32x32xbf16> to vector<8x32xbf16>
    %cst_36 = arith.constant dense<0.000000e+00> : vector<16x32xf32>
    %113 = tpu.matmul %111, %112, %cst_36 {dimension_numbers = #tpu.dot_dimension_numbers<[1], [0], [0], [1], [0, 0, 1, 1], [], []>} : vector<16x8xbf16>, vector<8x32xbf16>, vector<16x32xf32> -> vector<16x32xf32>
    %114 = arith.addf %89, %113 : vector<16x32xf32>
    %c0_37 = arith.constant 0 : index
    %c0_38 = arith.constant 0 : index
    %c0_39 = arith.constant 0 : index
    %115 = vector.load %arg10[%c0_37, %c0_38, %c0_39] : memref<1x1x32xf32, #tpu.memory_space<vmem>>, vector<1x1x32xf32>
    %116 = vector.shape_cast %115 : vector<1x1x32xf32> to vector<1x32xf32>
    %117 = vector.broadcast %116 : vector<1x32xf32> to vector<16x32xf32>
    %118 = arith.addf %114, %117 : vector<16x32xf32>
    %119 = arith.extf %4 : vector<16x32xbf16> to vector<16x32xf32>
    %120 = arith.addf %119, %118 : vector<16x32xf32>
    %c0_40 = arith.constant 0 : index
    %c0_41 = arith.constant 0 : index
    %c0_42 = arith.constant 0 : index
    %121 = vector.load %arg11[%c0_40, %c0_41, %c0_42] : memref<1x1x32xf32, #tpu.memory_space<vmem>>, vector<1x1x32xf32>
    %122 = vector.shape_cast %121 : vector<1x1x32xf32> to vector<1x32xf32>
    %c0_43 = arith.constant 0 : index
    %c0_44 = arith.constant 0 : index
    %c0_45 = arith.constant 0 : index
    %123 = vector.load %arg12[%c0_43, %c0_44, %c0_45] : memref<1x1x32xf32, #tpu.memory_space<vmem>>, vector<1x1x32xf32>
    %124 = vector.shape_cast %123 : vector<1x1x32xf32> to vector<1x32xf32>
    %cst_46 = arith.constant dense<0.000000e+00> : vector<16xf32>
    %125 = vector.multi_reduction <add>, %120, %cst_46 [1] : vector<16x32xf32> to vector<16xf32>
    %126 = vector.shape_cast %125 : vector<16xf32> to vector<16x1xf32>
    %cst_47 = arith.constant 3.200000e+01 : f32
    %127 = vector.broadcast %cst_47 : f32 to vector<16x1xf32>
    %128 = arith.divf %126, %127 : vector<16x1xf32>
    %129 = vector.broadcast %128 : vector<16x1xf32> to vector<16x32xf32>
    %130 = arith.subf %120, %129 : vector<16x32xf32>
    %131 = arith.mulf %130, %130 : vector<16x32xf32>
    %cst_48 = arith.constant dense<0.000000e+00> : vector<16xf32>
    %132 = vector.multi_reduction <add>, %131, %cst_48 [1] : vector<16x32xf32> to vector<16xf32>
    %133 = vector.shape_cast %132 : vector<16xf32> to vector<16x1xf32>
    %cst_49 = arith.constant 3.200000e+01 : f32
    %134 = vector.broadcast %cst_49 : f32 to vector<16x1xf32>
    %135 = arith.divf %133, %134 : vector<16x1xf32>
    %136 = vector.broadcast %128 : vector<16x1xf32> to vector<16x32xf32>
    %137 = arith.subf %120, %136 : vector<16x32xf32>
    %cst_50 = arith.constant 9.99999974E-6 : f32
    %138 = vector.broadcast %cst_50 : f32 to vector<16x1xf32>
    %139 = arith.addf %135, %138 : vector<16x1xf32>
    %140 = math.rsqrt %139 : vector<16x1xf32>
    %141 = vector.broadcast %140 : vector<16x1xf32> to vector<16x32xf32>
    %142 = arith.mulf %137, %141 : vector<16x32xf32>
    %143 = vector.broadcast %122 : vector<1x32xf32> to vector<16x32xf32>
    %144 = arith.mulf %142, %143 : vector<16x32xf32>
    %145 = vector.broadcast %124 : vector<1x32xf32> to vector<16x32xf32>
    %146 = arith.addf %144, %145 : vector<16x32xf32>
    %147 = arith.truncf %146 : vector<16x32xf32> to vector<16x32xbf16>
    %c0_51 = arith.constant 0 : index
    %c0_52 = arith.constant 0 : index
    %c0_53 = arith.constant 0 : index
    %148 = vector.load %arg13[%c0_51, %c0_52, %c0_53] : memref<1x32x2048xbf16, #tpu.memory_space<vmem>>, vector<1x32x2048xbf16>
    %149 = vector.shape_cast %148 : vector<1x32x2048xbf16> to vector<32x2048xbf16>
    %cst_54 = arith.constant dense<0.000000e+00> : vector<16x2048xf32>
    %150 = tpu.matmul %147, %149, %cst_54 {dimension_numbers = #tpu.dot_dimension_numbers<[1], [0], [0], [1], [0, 0, 1, 1], [], []>} : vector<16x32xbf16>, vector<32x2048xbf16>, vector<16x2048xf32> -> vector<16x2048xf32>
    %c0_55 = arith.constant 0 : index
    %c0_56 = arith.constant 0 : index
    %c0_57 = arith.constant 0 : index
    %151 = vector.load %arg14[%c0_55, %c0_56, %c0_57] : memref<1x1x2048xf32, #tpu.memory_space<vmem>>, vector<1x1x2048xf32>
    %152 = vector.shape_cast %151 : vector<1x1x2048xf32> to vector<1x2048xf32>
    %153 = vector.broadcast %152 : vector<1x2048xf32> to vector<16x2048xf32>
    %154 = arith.addf %150, %153 : vector<16x2048xf32>
    %cst_58 = arith.constant 0.000000e+00 : f32
    %155 = vector.broadcast %cst_58 : f32 to vector<16x2048xf32>
    %156 = arith.maximumf %154, %155 : vector<16x2048xf32>
    %157 = arith.truncf %156 : vector<16x2048xf32> to vector<16x2048xbf16>
    %c0_59 = arith.constant 0 : index
    %c0_60 = arith.constant 0 : index
    %c0_61 = arith.constant 0 : index
    %158 = vector.load %arg15[%c0_59, %c0_60, %c0_61] : memref<1x2048x32xbf16, #tpu.memory_space<vmem>>, vector<1x2048x32xbf16>
    %159 = vector.shape_cast %158 : vector<1x2048x32xbf16> to vector<2048x32xbf16>
    %cst_62 = arith.constant dense<0.000000e+00> : vector<16x32xf32>
    %160 = tpu.matmul %157, %159, %cst_62 {dimension_numbers = #tpu.dot_dimension_numbers<[1], [0], [0], [1], [0, 0, 1, 1], [], []>} : vector<16x2048xbf16>, vector<2048x32xbf16>, vector<16x32xf32> -> vector<16x32xf32>
    %c0_63 = arith.constant 0 : index
    %c0_64 = arith.constant 0 : index
    %c0_65 = arith.constant 0 : index
    %161 = vector.load %arg16[%c0_63, %c0_64, %c0_65] : memref<1x1x32xf32, #tpu.memory_space<vmem>>, vector<1x1x32xf32>
    %162 = vector.shape_cast %161 : vector<1x1x32xf32> to vector<1x32xf32>
    %163 = vector.broadcast %162 : vector<1x32xf32> to vector<16x32xf32>
    %164 = arith.addf %160, %163 : vector<16x32xf32>
    %165 = arith.addf %146, %164 : vector<16x32xf32>
    %c0_66 = arith.constant 0 : index
    %c0_67 = arith.constant 0 : index
    %c0_68 = arith.constant 0 : index
    %166 = vector.load %arg17[%c0_66, %c0_67, %c0_68] : memref<1x1x32xf32, #tpu.memory_space<vmem>>, vector<1x1x32xf32>
    %167 = vector.shape_cast %166 : vector<1x1x32xf32> to vector<1x32xf32>
    %c0_69 = arith.constant 0 : index
    %c0_70 = arith.constant 0 : index
    %c0_71 = arith.constant 0 : index
    %168 = vector.load %arg18[%c0_69, %c0_70, %c0_71] : memref<1x1x32xf32, #tpu.memory_space<vmem>>, vector<1x1x32xf32>
    %169 = vector.shape_cast %168 : vector<1x1x32xf32> to vector<1x32xf32>
    %cst_72 = arith.constant dense<0.000000e+00> : vector<16xf32>
    %170 = vector.multi_reduction <add>, %165, %cst_72 [1] : vector<16x32xf32> to vector<16xf32>
    %171 = vector.shape_cast %170 : vector<16xf32> to vector<16x1xf32>
    %cst_73 = arith.constant 3.200000e+01 : f32
    %172 = vector.broadcast %cst_73 : f32 to vector<16x1xf32>
    %173 = arith.divf %171, %172 : vector<16x1xf32>
    %174 = vector.broadcast %173 : vector<16x1xf32> to vector<16x32xf32>
    %175 = arith.subf %165, %174 : vector<16x32xf32>
    %176 = arith.mulf %175, %175 : vector<16x32xf32>
    %cst_74 = arith.constant dense<0.000000e+00> : vector<16xf32>
    %177 = vector.multi_reduction <add>, %176, %cst_74 [1] : vector<16x32xf32> to vector<16xf32>
    %178 = vector.shape_cast %177 : vector<16xf32> to vector<16x1xf32>
    %cst_75 = arith.constant 3.200000e+01 : f32
    %179 = vector.broadcast %cst_75 : f32 to vector<16x1xf32>
    %180 = arith.divf %178, %179 : vector<16x1xf32>
    %181 = vector.broadcast %173 : vector<16x1xf32> to vector<16x32xf32>
    %182 = arith.subf %165, %181 : vector<16x32xf32>
    %cst_76 = arith.constant 9.99999974E-6 : f32
    %183 = vector.broadcast %cst_76 : f32 to vector<16x1xf32>
    %184 = arith.addf %180, %183 : vector<16x1xf32>
    %185 = math.rsqrt %184 : vector<16x1xf32>
    %186 = vector.broadcast %185 : vector<16x1xf32> to vector<16x32xf32>
    %187 = arith.mulf %182, %186 : vector<16x32xf32>
    %188 = vector.broadcast %167 : vector<1x32xf32> to vector<16x32xf32>
    %189 = arith.mulf %187, %188 : vector<16x32xf32>
    %190 = vector.broadcast %169 : vector<1x32xf32> to vector<16x32xf32>
    %191 = arith.addf %189, %190 : vector<16x32xf32>
    %192 = arith.truncf %191 : vector<16x32xf32> to vector<16x32xbf16>
    %193 = vector.shape_cast %192 : vector<16x32xbf16> to vector<2x8x32xbf16>
    %c0_77 = arith.constant 0 : index
    %c0_78 = arith.constant 0 : index
    %c0_79 = arith.constant 0 : index
    %194 = vector.load %arg20[%c0_77, %c0_78, %c0_79] : memref<2x8x32xbf16, #tpu.memory_space<vmem>>, vector<2x8x32xbf16>
    tpu.vector_store %arg20[%c0_77, %c0_78, %c0_79], %193 {strides = array<i32>} : memref<2x8x32xbf16, #tpu.memory_space<vmem>>, vector<2x8x32xbf16>,
    %c1_i32 = arith.constant 1 : i32
    %195 = arith.cmpi eq, %arg1, %c1_i32 : i32
    %196 = arith.extui %195 : i1 to i32
    %c0_i32_80 = arith.constant 0 : i32
    %197 = arith.cmpi ne, %196, %c0_i32_80 : i32
    scf.if %197 {
      %c0_81 = arith.constant 0 : index
      %c7 = arith.constant 7 : index
      %c0_82 = arith.constant 0 : index
      %198 = vector.load %arg20[%c0_81, %c7, %c0_82] : memref<2x8x32xbf16, #tpu.memory_space<vmem>>, vector<2x1x32xbf16>
      %199 = vector.shape_cast %198 : vector<2x1x32xbf16> to vector<2x32xbf16>
      %c0_83 = arith.constant 0 : index
      %c0_84 = arith.constant 0 : index
      %200 = vector.load %arg5[%c0_83, %c0_84] : memref<32x4xbf16, #tpu.memory_space<vmem>>, vector<32x4xbf16>
      %cst_85 = arith.constant dense<0.000000e+00> : vector<2x4xf32>
      %201 = tpu.matmul %199, %200, %cst_85 {dimension_numbers = #tpu.dot_dimension_numbers<[1], [0], [0], [1], [0, 0, 1, 1], [], []>} : vector<2x32xbf16>, vector<32x4xbf16>, vector<2x4xf32> -> vector<2x4xf32>
      %c0_86 = arith.constant 0 : index
      %c0_87 = arith.constant 0 : index
      %202 = vector.load %arg6[%c0_86, %c0_87] : memref<1x4xf32, #tpu.memory_space<vmem>>, vector<1x4xf32>
      %203 = vector.broadcast %202 : vector<1x4xf32> to vector<2x4xf32>
      %204 = arith.addf %201, %203 : vector<2x4xf32>
      %c0_88 = arith.constant 0 : index
      %c0_89 = arith.constant 0 : index
      %205 = vector.load %arg19[%c0_88, %c0_89] : memref<2x4xf32, #tpu.memory_space<vmem>>, vector<2x4xf32>
      tpu.vector_store %arg19[%c0_88, %c0_89], %204 {strides = array<i32>} : memref<2x4xf32, #tpu.memory_space<vmem>>, vector<2x4xf32>,
    } else {
    }
    return
  }
  func.func @transform_0(%arg0: i32, %arg1: i32) -> (i32, i32, i32) {
    %c0_i32 = arith.constant 0 : i32
    %c0_i32_0 = arith.constant 0 : i32
    %c0_i32_1 = arith.constant 0 : i32
    return %arg0, %c0_i32, %c0_i32_0 : i32, i32, i32
  }
  func.func @transform_1(%arg0: i32, %arg1: i32) -> (i32, i32) {
    %c0_i32 = arith.constant 0 : i32
    %c0_i32_0 = arith.constant 0 : i32
    %c0_i32_1 = arith.constant 0 : i32
    return %c0_i32, %c0_i32_0 : i32, i32
  }
  func.func @transform_2(%arg0: i32, %arg1: i32) -> (i32, i32) {
    %c0_i32 = arith.constant 0 : i32
    %c0_i32_0 = arith.constant 0 : i32
    %c0_i32_1 = arith.constant 0 : i32
    return %c0_i32, %c0_i32_0 : i32, i32
  }
  func.func @transform_3(%arg0: i32, %arg1: i32) -> (i32, i32) {
    %c0_i32 = arith.constant 0 : i32
    %c0_i32_0 = arith.constant 0 : i32
    %c0_i32_1 = arith.constant 0 : i32
    return %c0_i32, %c0_i32_0 : i32, i32
  }
  func.func @transform_4(%arg0: i32, %arg1: i32) -> (i32, i32) {
    %c0_i32 = arith.constant 0 : i32
    %c0_i32_0 = arith.constant 0 : i32
    %c0_i32_1 = arith.constant 0 : i32
    return %c0_i32, %c0_i32_0 : i32, i32
  }
  func.func @transform_5(%arg0: i32, %arg1: i32) -> (i32, i32, i32) {
    %c0_i32 = arith.constant 0 : i32
    %c0_i32_0 = arith.constant 0 : i32
    %c0_i32_1 = arith.constant 0 : i32
    return %arg1, %c0_i32, %c0_i32_0 : i32, i32, i32
  }
  func.func @transform_6(%arg0: i32, %arg1: i32) -> (i32, i32, i32) {
    %c0_i32 = arith.constant 0 : i32
    %c0_i32_0 = arith.constant 0 : i32
    %c0_i32_1 = arith.constant 0 : i32
    return %arg1, %c0_i32, %c0_i32_0 : i32, i32, i32
  }
  func.func @transform_7(%arg0: i32, %arg1: i32) -> (i32, i32, i32) {
    %c0_i32 = arith.constant 0 : i32
    %c0_i32_0 = arith.constant 0 : i32
    %c0_i32_1 = arith.constant 0 : i32
    return %arg1, %c0_i32, %c0_i32_0 : i32, i32, i32
  }
  func.func @transform_8(%arg0: i32, %arg1: i32) -> (i32, i32, i32) {
    %c0_i32 = arith.constant 0 : i32
    %c0_i32_0 = arith.constant 0 : i32
    %c0_i32_1 = arith.constant 0 : i32
    return %arg1, %c0_i32, %c0_i32_0 : i32, i32, i32
  }
  func.func @transform_9(%arg0: i32, %arg1: i32) -> (i32, i32, i32) {
    %c0_i32 = arith.constant 0 : i32
    %c0_i32_0 = arith.constant 0 : i32
    %c0_i32_1 = arith.constant 0 : i32
    return %arg1, %c0_i32, %c0_i32_0 : i32, i32, i32
  }
  func.func @transform_10(%arg0: i32, %arg1: i32) -> (i32, i32, i32) {
    %c0_i32 = arith.constant 0 : i32
    %c0_i32_0 = arith.constant 0 : i32
    %c0_i32_1 = arith.constant 0 : i32
    return %arg1, %c0_i32, %c0_i32_0 : i32, i32, i32
  }
  func.func @transform_11(%arg0: i32, %arg1: i32) -> (i32, i32, i32) {
    %c0_i32 = arith.constant 0 : i32
    %c0_i32_0 = arith.constant 0 : i32
    %c0_i32_1 = arith.constant 0 : i32
    return %arg1, %c0_i32, %c0_i32_0 : i32, i32, i32
  }
  func.func @transform_12(%arg0: i32, %arg1: i32) -> (i32, i32, i32) {
    %c0_i32 = arith.constant 0 : i32
    %c0_i32_0 = arith.constant 0 : i32
    %c0_i32_1 = arith.constant 0 : i32
    return %arg1, %c0_i32, %c0_i32_0 : i32, i32, i32
  }
  func.func @transform_13(%arg0: i32, %arg1: i32) -> (i32, i32, i32) {
    %c0_i32 = arith.constant 0 : i32
    %c0_i32_0 = arith.constant 0 : i32
    %c0_i32_1 = arith.constant 0 : i32
    return %arg1, %c0_i32, %c0_i32_0 : i32, i32, i32
  }
  func.func @transform_14(%arg0: i32, %arg1: i32) -> (i32, i32, i32) {
    %c0_i32 = arith.constant 0 : i32
    %c0_i32_0 = arith.constant 0 : i32
    %c0_i32_1 = arith.constant 0 : i32
    return %arg1, %c0_i32, %c0_i32_0 : i32, i32, i32
  }
  func.func @transform_15(%arg0: i32, %arg1: i32) -> (i32, i32, i32) {
    %c0_i32 = arith.constant 0 : i32
    %c0_i32_0 = arith.constant 0 : i32
    %c0_i32_1 = arith.constant 0 : i32
    return %arg1, %c0_i32, %c0_i32_0 : i32, i32, i32
  }
  func.func @transform_16(%arg0: i32, %arg1: i32) -> (i32, i32, i32) {
    %c0_i32 = arith.constant 0 : i32
    %c0_i32_0 = arith.constant 0 : i32
    %c0_i32_1 = arith.constant 0 : i32
    return %arg1, %c0_i32, %c0_i32_0 : i32, i32, i32
  }
  func.func @transform_17(%arg0: i32, %arg1: i32) -> (i32, i32) {
    %c0_i32 = arith.constant 0 : i32
    %c0_i32_0 = arith.constant 0 : i32
    return %arg0, %c0_i32 : i32, i32
  }
}

</mosaic_0001>

<llo_original>
// kernel: tpu_custom_call.1
$region0: #{tpu_custom_call.1}
  #allocation0 [shape = 'u32[]', space=smem, size = 0x4, offset = 0x4, fixed_abs, tag = 'smem constant byte address 0x4 - core index']
  #allocation1 [shape = 'u32[144,128]{1,0:T(1,128)}', space=vmem, size = 0x12000, scoped, tag = 'internal scratch']
  #allocation2 [shape = 'bf16[2,8,32]{2,1,0:T(8,128)(2,1)}', space=vmem, size = 0x1000, scoped, tag = 'scratch operand']
  %s0 = inlined_call_operand.vmem [shape: f32[2,8,16], index: 0, kind: input, shape index: {}]
  %s1 = inlined_call_operand.vmem [shape: bf16[16,32], index: 1, kind: input, shape index: {}]
  %s2 = inlined_call_operand.vmem [shape: f32[1,32], index: 2, kind: input, shape index: {}]
  %s3 = inlined_call_operand.vmem [shape: bf16[32,4], index: 3, kind: input, shape index: {}]
  %s4 = inlined_call_operand.vmem [shape: f32[1,4], index: 4, kind: input, shape index: {}]
  %s5 = inlined_call_operand.vmem [shape: bf16[2,32,96], index: 5, kind: input, shape index: {}]
  %s6 = inlined_call_operand.vmem [shape: f32[2,1,96], index: 6, kind: input, shape index: {}]
  %s7 = inlined_call_operand.vmem [shape: bf16[2,32,32], index: 7, kind: input, shape index: {}]
  %s8 = inlined_call_operand.vmem [shape: f32[2,1,32], index: 8, kind: input, shape index: {}]
  %s9 = inlined_call_operand.vmem [shape: f32[2,1,32], index: 9, kind: input, shape index: {}]
  %s10 = inlined_call_operand.vmem [shape: f32[2,1,32], index: 10, kind: input, shape index: {}]
  %s11 = inlined_call_operand.vmem [shape: bf16[2,32,2048], index: 11, kind: input, shape index: {}]
  %s12 = inlined_call_operand.vmem [shape: f32[2,1,2048], index: 12, kind: input, shape index: {}]
  %s13 = inlined_call_operand.vmem [shape: bf16[2,2048,32], index: 13, kind: input, shape index: {}]
  %s14 = inlined_call_operand.vmem [shape: f32[2,1,32], index: 14, kind: input, shape index: {}]
  %s15 = inlined_call_operand.vmem [shape: f32[2,1,32], index: 15, kind: input, shape index: {}]
  %s16 = inlined_call_operand.vmem [shape: f32[2,1,32], index: 16, kind: input, shape index: {}]
  %s17 = inlined_call_operand.hbm [shape: f32[2,4], index: 17, kind: output, shape index: {}]
  %s18 = sld [smem:[#allocation0]]
  $region109: #{tpu_custom_call.1} parent=0
    _
  %s20 = ssub.s32 1, %s18
  %s21 = scalar_select 0, %s20, %s18
  $region1: #{tpu_custom_call.1} parent=0
    #allocation3 [shape = 'u8[1024]{0}', space=vmem, size = 0x400, scoped, tag = 'output window, operand 0, single buffered']
    #allocation4 [shape = 's32[2]{0}', space=sflag, size = 0x8, scoped, tag = 'scoped memory for tpu_custom_call.1']
    %22 = vsyncpa [#allocation4], 0
    loop: start=0, step=1, limit=4
    $region2: #{tpu_custom_call.1} parent=1 // loop_pre_header
      _
    $region3: #{tpu_custom_call.1} parent=1 // loop_header
      %s24 = sphi 0, %s28
      %p25 = scmp.ge.s32.totalorder %s24, 4
      %s31 = sphi 0, %s43
      %s32 = sphi 0, %s39
      %s33 = sphi 0, %s31
      %s34 = sphi 0, %s32
      %s35 = sphi 0, %s33
      %s36 = sphi 0, %s34
      %s46 = sphi 0, %s48
      %s49 = sphi 0, %s46
      %s50 = sphi 0, %s49
      %s66 = sphi 0, %s50
      %s70 = sphi 0, %s70
      %s72 = sphi 0, %s70
      %s73 = sphi 0, %s72
      %s87 = sphi 0, %s73
      %s91 = sphi 0, %s91
      %s93 = sphi 0, %s91
      %s94 = sphi 0, %s93
      %s108 = sphi 0, %s94
      %s112 = sphi 0, %s112
      %s114 = sphi 0, %s112
      %s115 = sphi 0, %s114
      %s129 = sphi 0, %s115
      %s133 = sphi 0, %s133
      %s135 = sphi 0, %s133
      %s136 = sphi 0, %s135
      %s150 = sphi 0, %s136
      %s156 = sphi 0, %s158
      %s159 = sphi 0, %s156
      %s160 = sphi 0, %s159
      %s176 = sphi 0, %s160
      %s182 = sphi 0, %s184
      %s185 = sphi 0, %s182
      %s186 = sphi 0, %s185
      %s202 = sphi 0, %s186
      %s208 = sphi 0, %s210
      %s211 = sphi 0, %s208
      %s212 = sphi 0, %s211
      %s228 = sphi 0, %s212
      %s234 = sphi 0, %s236
      %s237 = sphi 0, %s234
      %s238 = sphi 0, %s237
      %s254 = sphi 0, %s238
      %s260 = sphi 0, %s262
      %s263 = sphi 0, %s260
      %s264 = sphi 0, %s263
      %s280 = sphi 0, %s264
      %s286 = sphi 0, %s288
      %s289 = sphi 0, %s286
      %s290 = sphi 0, %s289
      %s306 = sphi 0, %s290
      %s312 = sphi 0, %s314
      %s315 = sphi 0, %s312
      %s316 = sphi 0, %s315
      %s332 = sphi 0, %s316
      %s338 = sphi 0, %s340
      %s341 = sphi 0, %s338
      %s342 = sphi 0, %s341
      %s358 = sphi 0, %s342
      %s364 = sphi 0, %s366
      %s367 = sphi 0, %s364
      %s368 = sphi 0, %s367
      %s384 = sphi 0, %s368
      %s390 = sphi 0, %s392
      %s393 = sphi 0, %s390
      %s394 = sphi 0, %s393
      %s410 = sphi 0, %s394
      %s416 = sphi 0, %s418
      %s419 = sphi 0, %s416
      %s420 = sphi 0, %s419
      %s436 = sphi 0, %s420
      %s442 = sphi 0, %s444
      %s445 = sphi 0, %s442
      %s446 = sphi 0, %s445
      %s462 = sphi 0, %s446
      %s468 = sphi 0, %s470
      %s471 = sphi 0, %s468
      %s472 = sphi 0, %s471
      %s488 = sphi 0, %s472
    $region4: #{tpu_custom_call.1} parent=1 // loop_header_branch
      %27 = sbr.rel (%p25) target = $region8
    $region5: #{tpu_custom_call.1} parent=1 // loop_body
      %s29 = ssub.s32 %s24, 1
      %s30 = ssub.s32 %s24, 2
      %s37 = sadd.s32 1, %s32
      %p38 = scmp.ge.s32.totalorder %s37, 2
      %s39 = scalar_select %p38, 0, %s37
      %s40 = sadd.s32 1, %s31
      %s41 = scalar_select %p38, %s40, %s31
      %p42 = scmp.ge.s32.totalorder %s41, 1
      %s43 = scalar_select %p42, 0, %s41
      %s44 = ssub.s32 %s31, %s43
      %p45 = scmp.eq.s32.totalorder %s44, 0
      %s47 = sadd.s32 %s46, 1
      %s48 = scalar_select %p45, %s46, %s47
      %p51 = pneg %p45
      %p52 = scmp.eq.s32.totalorder %s24, 1
      %p53 = por %p51, %p52
      %p54 = scmp.ne.s32.totalorder %s46, %s49
      %p55 = scmp.eq.s32.totalorder %s24, 0
      %p56 = por %p54, %p55
      %p57 = scmp.ne.s32.totalorder %s46, %s49
      %p58 = scmp.eq.s32.totalorder %s29, 1
      %p59 = por %p57, %p58
      %p60 = scmp.ne.s32.totalorder %s49, %s50
      %p61 = scmp.eq.s32.totalorder %s29, 0
      %p62 = por %p60, %p61
      %p63 = scmp.ne.s32.totalorder %s49, %s50
      %p64 = scmp.eq.s32.totalorder %s30, 1
      %p65 = por %p63, %p64
      %p67 = scmp.ne.s32.totalorder %s50, %s66
      %p68 = scmp.eq.s32.totalorder %s30, 0
      %p69 = por %p67, %p68
      %s71 = sadd.s32 %s70, 1
      %p74 = scmp.eq.s32.totalorder %s24, 1
      %p75 = scmp.ne.s32.totalorder %s70, %s72
      %p76 = scmp.eq.s32.totalorder %s24, 0
      %p77 = por %p75, %p76
      %p78 = scmp.ne.s32.totalorder %s70, %s72
      %p79 = scmp.eq.s32.totalorder %s29, 1
      %p80 = por %p78, %p79
      %p81 = scmp.ne.s32.totalorder %s72, %s73
      %p82 = scmp.eq.s32.totalorder %s29, 0
      %p83 = por %p81, %p82
      %p84 = scmp.ne.s32.totalorder %s72, %s73
      %p85 = scmp.eq.s32.totalorder %s30, 1
      %p86 = por %p84, %p85
      %p88 = scmp.ne.s32.totalorder %s73, %s87
      %p89 = scmp.eq.s32.totalorder %s30, 0
      %p90 = por %p88, %p89
      %s92 = sadd.s32 %s91, 1
      %p95 = scmp.eq.s32.totalorder %s24, 1
      %p96 = scmp.ne.s32.totalorder %s91, %s93
      %p97 = scmp.eq.s32.totalorder %s24, 0
      %p98 = por %p96, %p97
      %p99 = scmp.ne.s32.totalorder %s91, %s93
      %p100 = scmp.eq.s32.totalorder %s29, 1
      %p101 = por %p99, %p100
      %p102 = scmp.ne.s32.totalorder %s93, %s94
      %p103 = scmp.eq.s32.totalorder %s29, 0
      %p104 = por %p102, %p103
      %p105 = scmp.ne.s32.totalorder %s93, %s94
      %p106 = scmp.eq.s32.totalorder %s30, 1
      %p107 = por %p105, %p106
      %p109 = scmp.ne.s32.totalorder %s94, %s108
      %p110 = scmp.eq.s32.totalorder %s30, 0
      %p111 = por %p109, %p110
      %s113 = sadd.s32 %s112, 1
      %p116 = scmp.eq.s32.totalorder %s24, 1
      %p117 = scmp.ne.s32.totalorder %s112, %s114
      %p118 = scmp.eq.s32.totalorder %s24, 0
      %p119 = por %p117, %p118
      %p120 = scmp.ne.s32.totalorder %s112, %s114
      %p121 = scmp.eq.s32.totalorder %s29, 1
      %p122 = por %p120, %p121
      %p123 = scmp.ne.s32.totalorder %s114, %s115
      %p124 = scmp.eq.s32.totalorder %s29, 0
      %p125 = por %p123, %p124
      %p126 = scmp.ne.s32.totalorder %s114, %s115
      %p127 = scmp.eq.s32.totalorder %s30, 1
      %p128 = por %p126, %p127
      %p130 = scmp.ne.s32.totalorder %s115, %s129
      %p131 = scmp.eq.s32.totalorder %s30, 0
      %p132 = por %p130, %p131
      %s134 = sadd.s32 %s133, 1
      %p137 = scmp.eq.s32.totalorder %s24, 1
      %p138 = scmp.ne.s32.totalorder %s133, %s135
      %p139 = scmp.eq.s32.totalorder %s24, 0
      %p140 = por %p138, %p139
      %p141 = scmp.ne.s32.totalorder %s133, %s135
      %p142 = scmp.eq.s32.totalorder %s29, 1
      %p143 = por %p141, %p142
      %p144 = scmp.ne.s32.totalorder %s135, %s136
      %p145 = scmp.eq.s32.totalorder %s29, 0
      %p146 = por %p144, %p145
      %p147 = scmp.ne.s32.totalorder %s135, %s136
      %p148 = scmp.eq.s32.totalorder %s30, 1
      %p149 = por %p147, %p148
      %p151 = scmp.ne.s32.totalorder %s136, %s150
      %p152 = scmp.eq.s32.totalorder %s30, 0
      %p153 = por %p151, %p152
      %s154 = ssub.s32 %s32, %s39
      %p155 = scmp.eq.s32.totalorder %s154, 0
      %s157 = sadd.s32 %s156, 1
      %s158 = scalar_select %p155, %s156, %s157
      %p161 = pneg %p155
      %p162 = scmp.eq.s32.totalorder %s24, 1
      %p163 = por %p161, %p162
      %p164 = scmp.ne.s32.totalorder %s156, %s159
      %p165 = scmp.eq.s32.totalorder %s24, 0
      %p166 = por %p164, %p165
      %p167 = scmp.ne.s32.totalorder %s156, %s159
      %p168 = scmp.eq.s32.totalorder %s29, 1
      %p169 = por %p167, %p168
      %p170 = scmp.ne.s32.totalorder %s159, %s160
      %p171 = scmp.eq.s32.totalorder %s29, 0
      %p172 = por %p170, %p171
      %p173 = scmp.ne.s32.totalorder %s159, %s160
      %p174 = scmp.eq.s32.totalorder %s30, 1
      %p175 = por %p173, %p174
      %p177 = scmp.ne.s32.totalorder %s160, %s176
      %p178 = scmp.eq.s32.totalorder %s30, 0
      %p179 = por %p177, %p178
      %s180 = ssub.s32 %s32, %s39
      %p181 = scmp.eq.s32.totalorder %s180, 0
      %s183 = sadd.s32 %s182, 1
      %s184 = scalar_select %p181, %s182, %s183
      %p187 = pneg %p181
      %p188 = scmp.eq.s32.totalorder %s24, 1
      %p189 = por %p187, %p188
      %p190 = scmp.ne.s32.totalorder %s182, %s185
      %p191 = scmp.eq.s32.totalorder %s24, 0
      %p192 = por %p190, %p191
      %p193 = scmp.ne.s32.totalorder %s182, %s185
      %p194 = scmp.eq.s32.totalorder %s29, 1
      %p195 = por %p193, %p194
      %p196 = scmp.ne.s32.totalorder %s185, %s186
      %p197 = scmp.eq.s32.totalorder %s29, 0
      %p198 = por %p196, %p197
      %p199 = scmp.ne.s32.totalorder %s185, %s186
      %p200 = scmp.eq.s32.totalorder %s30, 1
      %p201 = por %p199, %p200
      %p203 = scmp.ne.s32.totalorder %s186, %s202
      %p204 = scmp.eq.s32.totalorder %s30, 0
      %p205 = por %p203, %p204
      %s206 = ssub.s32 %s32, %s39
      %p207 = scmp.eq.s32.totalorder %s206, 0
      %s209 = sadd.s32 %s208, 1
      %s210 = scalar_select %p207, %s208, %s209
      %p213 = pneg %p207
      %p214 = scmp.eq.s32.totalorder %s24, 1
      %p215 = por %p213, %p214
      %p216 = scmp.ne.s32.totalorder %s208, %s211
      %p217 = scmp.eq.s32.totalorder %s24, 0
      %p218 = por %p216, %p217
      %p219 = scmp.ne.s32.totalorder %s208, %s211
      %p220 = scmp.eq.s32.totalorder %s29, 1
      %p221 = por %p219, %p220
      %p222 = scmp.ne.s32.totalorder %s211, %s212
      %p223 = scmp.eq.s32.totalorder %s29, 0
      %p224 = por %p222, %p223
      %p225 = scmp.ne.s32.totalorder %s211, %s212
      %p226 = scmp.eq.s32.totalorder %s30, 1
      %p227 = por %p225, %p226
      %p229 = scmp.ne.s32.totalorder %s212, %s228
      %p230 = scmp.eq.s32.totalorder %s30, 0
      %p231 = por %p229, %p230
      %s232 = ssub.s32 %s32, %s39
      %p233 = scmp.eq.s32.totalorder %s232, 0
      %s235 = sadd.s32 %s234, 1
      %s236 = scalar_select %p233, %s234, %s235
      %p239 = pneg %p233
      %p240 = scmp.eq.s32.totalorder %s24, 1
      %p241 = por %p239, %p240
      %p242 = scmp.ne.s32.totalorder %s234, %s237
      %p243 = scmp.eq.s32.totalorder %s24, 0
      %p244 = por %p242, %p243
      %p245 = scmp.ne.s32.totalorder %s234, %s237
      %p246 = scmp.eq.s32.totalorder %s29, 1
      %p247 = por %p245, %p246
      %p248 = scmp.ne.s32.totalorder %s237, %s238
      %p249 = scmp.eq.s32.totalorder %s29, 0
      %p250 = por %p248, %p249
      %p251 = scmp.ne.s32.totalorder %s237, %s238
      %p252 = scmp.eq.s32.totalorder %s30, 1
      %p253 = por %p251, %p252
      %p255 = scmp.ne.s32.totalorder %s238, %s254
      %p256 = scmp.eq.s32.totalorder %s30, 0
      %p257 = por %p255, %p256
      %s258 = ssub.s32 %s32, %s39
      %p259 = scmp.eq.s32.totalorder %s258, 0
      %s261 = sadd.s32 %s260, 1
      %s262 = scalar_select %p259, %s260, %s261
      %p265 = pneg %p259
      %p266 = scmp.eq.s32.totalorder %s24, 1
      %p267 = por %p265, %p266
      %p268 = scmp.ne.s32.totalorder %s260, %s263
      %p269 = scmp.eq.s32.totalorder %s24, 0
      %p270 = por %p268, %p269
      %p271 = scmp.ne.s32.totalorder %s260, %s263
      %p272 = scmp.eq.s32.totalorder %s29, 1
      %p273 = por %p271, %p272
      %p274 = scmp.ne.s32.totalorder %s263, %s264
      %p275 = scmp.eq.s32.totalorder %s29, 0
      %p276 = por %p274, %p275
      %p277 = scmp.ne.s32.totalorder %s263, %s264
      %p278 = scmp.eq.s32.totalorder %s30, 1
      %p279 = por %p277, %p278
      %p281 = scmp.ne.s32.totalorder %s264, %s280
      %p282 = scmp.eq.s32.totalorder %s30, 0
      %p283 = por %p281, %p282
      %s284 = ssub.s32 %s32, %s39
      %p285 = scmp.eq.s32.totalorder %s284, 0
      %s287 = sadd.s32 %s286, 1
      %s288 = scalar_select %p285, %s286, %s287
      %p291 = pneg %p285
      %p292 = scmp.eq.s32.totalorder %s24, 1
      %p293 = por %p291, %p292
      %p294 = scmp.ne.s32.totalorder %s286, %s289
      %p295 = scmp.eq.s32.totalorder %s24, 0
      %p296 = por %p294, %p295
      %p297 = scmp.ne.s32.totalorder %s286, %s289
      %p298 = scmp.eq.s32.totalorder %s29, 1
      %p299 = por %p297, %p298
      %p300 = scmp.ne.s32.totalorder %s289, %s290
      %p301 = scmp.eq.s32.totalorder %s29, 0
      %p302 = por %p300, %p301
      %p303 = scmp.ne.s32.totalorder %s289, %s290
      %p304 = scmp.eq.s32.totalorder %s30, 1
      %p305 = por %p303, %p304
      %p307 = scmp.ne.s32.totalorder %s290, %s306
      %p308 = scmp.eq.s32.totalorder %s30, 0
      %p309 = por %p307, %p308
      %s310 = ssub.s32 %s32, %s39
      %p311 = scmp.eq.s32.totalorder %s310, 0
      %s313 = sadd.s32 %s312, 1
      %s314 = scalar_select %p311, %s312, %s313
      %p317 = pneg %p311
      %p318 = scmp.eq.s32.totalorder %s24, 1
      %p319 = por %p317, %p318
      %p320 = scmp.ne.s32.totalorder %s312, %s315
      %p321 = scmp.eq.s32.totalorder %s24, 0
      %p322 = por %p320, %p321
      %p323 = scmp.ne.s32.totalorder %s312, %s315
      %p324 = scmp.eq.s32.totalorder %s29, 1
      %p325 = por %p323, %p324
      %p326 = scmp.ne.s32.totalorder %s315, %s316
      %p327 = scmp.eq.s32.totalorder %s29, 0
      %p328 = por %p326, %p327
      %p329 = scmp.ne.s32.totalorder %s315, %s316
      %p330 = scmp.eq.s32.totalorder %s30, 1
      %p331 = por %p329, %p330
      %p333 = scmp.ne.s32.totalorder %s316, %s332
      %p334 = scmp.eq.s32.totalorder %s30, 0
      %p335 = por %p333, %p334
      %s336 = ssub.s32 %s32, %s39
      %p337 = scmp.eq.s32.totalorder %s336, 0
      %s339 = sadd.s32 %s338, 1
      %s340 = scalar_select %p337, %s338, %s339
      %p343 = pneg %p337
      %p344 = scmp.eq.s32.totalorder %s24, 1
      %p345 = por %p343, %p344
      %p346 = scmp.ne.s32.totalorder %s338, %s341
      %p347 = scmp.eq.s32.totalorder %s24, 0
      %p348 = por %p346, %p347
      %p349 = scmp.ne.s32.totalorder %s338, %s341
      %p350 = scmp.eq.s32.totalorder %s29, 1
      %p351 = por %p349, %p350
      %p352 = scmp.ne.s32.totalorder %s341, %s342
      %p353 = scmp.eq.s32.totalorder %s29, 0
      %p354 = por %p352, %p353
      %p355 = scmp.ne.s32.totalorder %s341, %s342
      %p356 = scmp.eq.s32.totalorder %s30, 1
      %p357 = por %p355, %p356
      %p359 = scmp.ne.s32.totalorder %s342, %s358
      %p360 = scmp.eq.s32.totalorder %s30, 0
      %p361 = por %p359, %p360
      %s362 = ssub.s32 %s32, %s39
      %p363 = scmp.eq.s32.totalorder %s362, 0
      %s365 = sadd.s32 %s364, 1
      %s366 = scalar_select %p363, %s364, %s365
      %p369 = pneg %p363
      %p370 = scmp.eq.s32.totalorder %s24, 1
      %p371 = por %p369, %p370
      %p372 = scmp.ne.s32.totalorder %s364, %s367
      %p373 = scmp.eq.s32.totalorder %s24, 0
      %p374 = por %p372, %p373
      %p375 = scmp.ne.s32.totalorder %s364, %s367
      %p376 = scmp.eq.s32.totalorder %s29, 1
      %p377 = por %p375, %p376
      %p378 = scmp.ne.s32.totalorder %s367, %s368
      %p379 = scmp.eq.s32.totalorder %s29, 0
      %p380 = por %p378, %p379
      %p381 = scmp.ne.s32.totalorder %s367, %s368
      %p382 = scmp.eq.s32.totalorder %s30, 1
      %p383 = por %p381, %p382
      %p385 = scmp.ne.s32.totalorder %s368, %s384
      %p386 = scmp.eq.s32.totalorder %s30, 0
      %p387 = por %p385, %p386
      %s388 = ssub.s32 %s32, %s39
      %p389 = scmp.eq.s32.totalorder %s388, 0
      %s391 = sadd.s32 %s390, 1
      %s392 = scalar_select %p389, %s390, %s391
      %p395 = pneg %p389
      %p396 = scmp.eq.s32.totalorder %s24, 1
      %p397 = por %p395, %p396
      %p398 = scmp.ne.s32.totalorder %s390, %s393
      %p399 = scmp.eq.s32.totalorder %s24, 0
      %p400 = por %p398, %p399
      %p401 = scmp.ne.s32.totalorder %s390, %s393
      %p402 = scmp.eq.s32.totalorder %s29, 1
      %p403 = por %p401, %p402
      %p404 = scmp.ne.s32.totalorder %s393, %s394
      %p405 = scmp.eq.s32.totalorder %s29, 0
      %p406 = por %p404, %p405
      %p407 = scmp.ne.s32.totalorder %s393, %s394
      %p408 = scmp.eq.s32.totalorder %s30, 1
      %p409 = por %p407, %p408
      %p411 = scmp.ne.s32.totalorder %s394, %s410
      %p412 = scmp.eq.s32.totalorder %s30, 0
      %p413 = por %p411, %p412
      %s414 = ssub.s32 %s32, %s39
      %p415 = scmp.eq.s32.totalorder %s414, 0
      %s417 = sadd.s32 %s416, 1
      %s418 = scalar_select %p415, %s416, %s417
      %p421 = pneg %p415
      %p422 = scmp.eq.s32.totalorder %s24, 1
      %p423 = por %p421, %p422
      %p424 = scmp.ne.s32.totalorder %s416, %s419
      %p425 = scmp.eq.s32.totalorder %s24, 0
      %p426 = por %p424, %p425
      %p427 = scmp.ne.s32.totalorder %s416, %s419
      %p428 = scmp.eq.s32.totalorder %s29, 1
      %p429 = por %p427, %p428
      %p430 = scmp.ne.s32.totalorder %s419, %s420
      %p431 = scmp.eq.s32.totalorder %s29, 0
      %p432 = por %p430, %p431
      %p433 = scmp.ne.s32.totalorder %s419, %s420
      %p434 = scmp.eq.s32.totalorder %s30, 1
      %p435 = por %p433, %p434
      %p437 = scmp.ne.s32.totalorder %s420, %s436
      %p438 = scmp.eq.s32.totalorder %s30, 0
      %p439 = por %p437, %p438
      %s440 = ssub.s32 %s32, %s39
      %p441 = scmp.eq.s32.totalorder %s440, 0
      %s443 = sadd.s32 %s442, 1
      %s444 = scalar_select %p441, %s442, %s443
      %p447 = pneg %p441
      %p448 = scmp.eq.s32.totalorder %s24, 1
      %p449 = por %p447, %p448
      %p450 = scmp.ne.s32.totalorder %s442, %s445
      %p451 = scmp.eq.s32.totalorder %s24, 0
      %p452 = por %p450, %p451
      %p453 = scmp.ne.s32.totalorder %s442, %s445
      %p454 = scmp.eq.s32.totalorder %s29, 1
      %p455 = por %p453, %p454
      %p456 = scmp.ne.s32.totalorder %s445, %s446
      %p457 = scmp.eq.s32.totalorder %s29, 0
      %p458 = por %p456, %p457
      %p459 = scmp.ne.s32.totalorder %s445, %s446
      %p460 = scmp.eq.s32.totalorder %s30, 1
      %p461 = por %p459, %p460
      %p463 = scmp.ne.s32.totalorder %s446, %s462
      %p464 = scmp.eq.s32.totalorder %s30, 0
      %p465 = por %p463, %p464
      %s466 = ssub.s32 %s31, %s43
      %p467 = scmp.eq.s32.totalorder %s466, 0
      %s469 = sadd.s32 %s468, 1
      %s470 = scalar_select %p467, %s468, %s469
      %p473 = pneg %p467
      %p474 = scmp.eq.s32.totalorder %s24, 1
      %p475 = por %p473, %p474
      %p476 = scmp.ne.s32.totalorder %s468, %s471
      %p477 = scmp.eq.s32.totalorder %s24, 0
      %p478 = por %p476, %p477
      %p479 = scmp.ne.s32.totalorder %s468, %s471
      %p480 = scmp.eq.s32.totalorder %s29, 1
      %p481 = por %p479, %p480
      %p482 = scmp.ne.s32.totalorder %s471, %s472
      %p483 = scmp.eq.s32.totalorder %s29, 0
      %p484 = por %p482, %p483
      %p485 = scmp.ne.s32.totalorder %s471, %s472
      %p486 = scmp.eq.s32.totalorder %s30, 1
      %p487 = por %p485, %p486
      %p489 = scmp.ne.s32.totalorder %s472, %s488
      %p490 = scmp.eq.s32.totalorder %s30, 0
      %p491 = por %p489, %p490
      %p492 = scmp.le.s32.totalorder 1, %s24
      %p493 = scmp.lt.s32.totalorder %s24, 3
      %p494 = pnand %p492, %p493
      %p495 = pneg %p494
      // Predicated region
      $region9: #{tpu_custom_call.1} parent=5 // pred_check
        _
      $region10: #{tpu_custom_call.1} parent=5 // pred_check_branch
        %497 = sbr.rel (%p494) target = $region12
      $region11: #{tpu_custom_call.1} parent=5 // pred_region
        %s498 = ssub.s32 %s24, 1
        // Predicated region
        $region13: #{tpu_custom_call.1} parent=11 // pred_check
          %p499 = pneg %p62
        $region14: #{tpu_custom_call.1} parent=11 // pred_check_branch
          %501 = sbr.rel (%p499) target = $region16
        $region15: #{tpu_custom_call.1} parent=11 // pred_region
          %s502 = smul.u32 2, %s33
          %p503 = scmp.lt.s32.totalorder %s502, 1
          %s504 = scalar_select %p503, %s502, 1
          %s505 = smul.addr %s504, 8
          %s506 = scalar_lea.vmem %s0, %s505
          %s507 = smul.u32 2, %s33
        $region16: #{tpu_custom_call.1} parent=11 // pred_fallthru
          _
        // Predicated region
        $region17: #{tpu_custom_call.1} parent=11 // pred_check
          %p508 = pneg %p83
        $region18: #{tpu_custom_call.1} parent=11 // pred_check_branch
          %510 = sbr.rel (%p508) target = $region20
        $region19: #{tpu_custom_call.1} parent=11 // pred_region
          _
        $region20: #{tpu_custom_call.1} parent=11 // pred_fallthru
          _
        // Predicated region
        $region21: #{tpu_custom_call.1} parent=11 // pred_check
          %p511 = pneg %p104
        $region22: #{tpu_custom_call.1} parent=11 // pred_check_branch
          %513 = sbr.rel (%p511) target = $region24
        $region23: #{tpu_custom_call.1} parent=11 // pred_region
          _
        $region24: #{tpu_custom_call.1} parent=11 // pred_fallthru
          _
        // Predicated region
        $region25: #{tpu_custom_call.1} parent=11 // pred_check
          %p514 = pneg %p125
        $region26: #{tpu_custom_call.1} parent=11 // pred_check_branch
          %516 = sbr.rel (%p514) target = $region28
        $region27: #{tpu_custom_call.1} parent=11 // pred_region
          _
        $region28: #{tpu_custom_call.1} parent=11 // pred_fallthru
          _
        // Predicated region
        $region29: #{tpu_custom_call.1} parent=11 // pred_check
          %p517 = pneg %p146
        $region30: #{tpu_custom_call.1} parent=11 // pred_check_branch
          %519 = sbr.rel (%p517) target = $region32
        $region31: #{tpu_custom_call.1} parent=11 // pred_region
          _
        $region32: #{tpu_custom_call.1} parent=11 // pred_fallthru
          _
      $region12: #{tpu_custom_call.1} parent=5 // pred_fallthru
        _
      %p520 = scmp.lt.s32.totalorder %s24, 2
      // Predicated region
      $region33: #{tpu_custom_call.1} parent=5 // pred_check
        %p521 = pneg %p520
      $region34: #{tpu_custom_call.1} parent=5 // pred_check_branch
        %523 = sbr.rel (%p521) target = $region36
      $region35: #{tpu_custom_call.1} parent=5 // pred_region
        // Predicated region
        $region37: #{tpu_custom_call.1} parent=35 // pred_check
          %p524 = pneg %p166
        $region38: #{tpu_custom_call.1} parent=35 // pred_check_branch
          %526 = sbr.rel (%p524) target = $region40
        $region39: #{tpu_custom_call.1} parent=35 // pred_region
          %p527 = scmp.lt.s32.totalorder %s32, 1
          %s528 = scalar_select %p527, %s32, 1
          %s529 = smul.addr %s528, 4
          %s530 = smul.addr %s529, 4
          %s531 = scalar_lea.vmem %s5, %s530
        $region40: #{tpu_custom_call.1} parent=35 // pred_fallthru
          _
        // Predicated region
        $region41: #{tpu_custom_call.1} parent=35 // pred_check
          %p532 = pneg %p192
        $region42: #{tpu_custom_call.1} parent=35 // pred_check_branch
          %534 = sbr.rel (%p532) target = $region44
        $region43: #{tpu_custom_call.1} parent=35 // pred_region
          %p535 = scmp.lt.s32.totalorder %s32, 1
          %s536 = scalar_select %p535, %s32, 1
          %s537 = scalar_lea.vmem %s6, %s536
        $region44: #{tpu_custom_call.1} parent=35 // pred_fallthru
          _
        // Predicated region
        $region45: #{tpu_custom_call.1} parent=35 // pred_check
          %p538 = pneg %p218
        $region46: #{tpu_custom_call.1} parent=35 // pred_check_branch
          %540 = sbr.rel (%p538) target = $region48
        $region47: #{tpu_custom_call.1} parent=35 // pred_region
          %p541 = scmp.lt.s32.totalorder %s32, 1
          %s542 = scalar_select %p541, %s32, 1
          %s543 = smul.addr %s542, 4
          %s544 = smul.addr %s543, 4
          %s545 = scalar_lea.vmem %s7, %s544
        $region48: #{tpu_custom_call.1} parent=35 // pred_fallthru
          _
        // Predicated region
        $region49: #{tpu_custom_call.1} parent=35 // pred_check
          %p546 = pneg %p244
        $region50: #{tpu_custom_call.1} parent=35 // pred_check_branch
          %548 = sbr.rel (%p546) target = $region52
        $region51: #{tpu_custom_call.1} parent=35 // pred_region
          %p549 = scmp.lt.s32.totalorder %s32, 1
          %s550 = scalar_select %p549, %s32, 1
          %s551 = scalar_lea.vmem %s8, %s550
        $region52: #{tpu_custom_call.1} parent=35 // pred_fallthru
          _
        // Predicated region
        $region53: #{tpu_custom_call.1} parent=35 // pred_check
          %p552 = pneg %p270
        $region54: #{tpu_custom_call.1} parent=35 // pred_check_branch
          %554 = sbr.rel (%p552) target = $region56
        $region55: #{tpu_custom_call.1} parent=35 // pred_region
          %p555 = scmp.lt.s32.totalorder %s32, 1
          %s556 = scalar_select %p555, %s32, 1
          %s557 = scalar_lea.vmem %s9, %s556
        $region56: #{tpu_custom_call.1} parent=35 // pred_fallthru
          _
        // Predicated region
        $region57: #{tpu_custom_call.1} parent=35 // pred_check
          %p558 = pneg %p296
        $region58: #{tpu_custom_call.1} parent=35 // pred_check_branch
          %560 = sbr.rel (%p558) target = $region60
        $region59: #{tpu_custom_call.1} parent=35 // pred_region
          %p561 = scmp.lt.s32.totalorder %s32, 1
          %s562 = scalar_select %p561, %s32, 1
          %s563 = scalar_lea.vmem %s10, %s562
        $region60: #{tpu_custom_call.1} parent=35 // pred_fallthru
          _
        // Predicated region
        $region61: #{tpu_custom_call.1} parent=35 // pred_check
          %p564 = pneg %p322
        $region62: #{tpu_custom_call.1} parent=35 // pred_check_branch
          %566 = sbr.rel (%p564) target = $region64
        $region63: #{tpu_custom_call.1} parent=35 // pred_region
          %p567 = scmp.lt.s32.totalorder %s32, 1
          %s568 = scalar_select %p567, %s32, 1
          %s569 = smul.addr %s568, 64
          %s570 = smul.addr %s569, 4
          %s571 = scalar_lea.vmem %s11, %s570
        $region64: #{tpu_custom_call.1} parent=35 // pred_fallthru
          _
        // Predicated region
        $region65: #{tpu_custom_call.1} parent=35 // pred_check
          %p572 = pneg %p348
        $region66: #{tpu_custom_call.1} parent=35 // pred_check_branch
          %574 = sbr.rel (%p572) target = $region68
        $region67: #{tpu_custom_call.1} parent=35 // pred_region
          %p575 = scmp.lt.s32.totalorder %s32, 1
          %s576 = scalar_select %p575, %s32, 1
          %s577 = smul.addr %s576, 16
          %s578 = scalar_lea.vmem %s12, %s577
        $region68: #{tpu_custom_call.1} parent=35 // pred_fallthru
          _
        // Predicated region
        $region69: #{tpu_custom_call.1} parent=35 // pred_check
          %p579 = pneg %p374
        $region70: #{tpu_custom_call.1} parent=35 // pred_check_branch
          %581 = sbr.rel (%p579) target = $region72
        $region71: #{tpu_custom_call.1} parent=35 // pred_region
          %p582 = scmp.lt.s32.totalorder %s32, 1
          %s583 = scalar_select %p582, %s32, 1
          %s584 = smul.addr %s583, 256
          %s585 = smul.addr %s584, 4
          %s586 = scalar_lea.vmem %s13, %s585
        $region72: #{tpu_custom_call.1} parent=35 // pred_fallthru
          _
        // Predicated region
        $region73: #{tpu_custom_call.1} parent=35 // pred_check
          %p587 = pneg %p400
        $region74: #{tpu_custom_call.1} parent=35 // pred_check_branch
          %589 = sbr.rel (%p587) target = $region76
        $region75: #{tpu_custom_call.1} parent=35 // pred_region
          %p590 = scmp.lt.s32.totalorder %s32, 1
          %s591 = scalar_select %p590, %s32, 1
          %s592 = scalar_lea.vmem %s14, %s591
        $region76: #{tpu_custom_call.1} parent=35 // pred_fallthru
          _
        // Predicated region
        $region77: #{tpu_custom_call.1} parent=35 // pred_check
          %p593 = pneg %p426
        $region78: #{tpu_custom_call.1} parent=35 // pred_check_branch
          %595 = sbr.rel (%p593) target = $region80
        $region79: #{tpu_custom_call.1} parent=35 // pred_region
          %p596 = scmp.lt.s32.totalorder %s32, 1
          %s597 = scalar_select %p596, %s32, 1
          %s598 = scalar_lea.vmem %s15, %s597
        $region80: #{tpu_custom_call.1} parent=35 // pred_fallthru
          _
        // Predicated region
        $region81: #{tpu_custom_call.1} parent=35 // pred_check
          %p599 = pneg %p452
        $region82: #{tpu_custom_call.1} parent=35 // pred_check_branch
          %601 = sbr.rel (%p599) target = $region84
        $region83: #{tpu_custom_call.1} parent=35 // pred_region
          %p602 = scmp.lt.s32.totalorder %s32, 1
          %s603 = scalar_select %p602, %s32, 1
          %s604 = scalar_lea.vmem %s16, %s603
        $region84: #{tpu_custom_call.1} parent=35 // pred_fallthru
          _
      $region36: #{tpu_custom_call.1} parent=5 // pred_fallthru
        _
      %p605 = scmp.le.s32.totalorder 1, %s24
      %p606 = scmp.lt.s32.totalorder %s24, 3
      %p607 = pnand %p605, %p606
      %p608 = pneg %p607
      // Predicated region
      $region85: #{tpu_custom_call.1} parent=5 // pred_check
        _
      $region86: #{tpu_custom_call.1} parent=5 // pred_check_branch
        %610 = sbr.rel (%p607) target = $region88
      $region87: #{tpu_custom_call.1} parent=5 // pred_region
        %s611 = ssub.s32 %s24, 1
        %s612 = smul.u32 2, %s33
        %p613 = scmp.lt.s32.totalorder %s612, 1
        %s614 = scalar_select %p613, %s612, 1
        %s615 = smul.addr %s614, 8
        %s616 = scalar_lea.vmem %s0, %s615
        %p617 = pneg %p62
        %p618 = pneg %p59
        %p619 = pneg %p83
        %p620 = pneg %p80
        %p621 = pneg %p104
        %p622 = pneg %p101
        %p623 = pneg %p125
        %p624 = pneg %p122
        %p625 = pneg %p146
        %p626 = pneg %p143
        %p627 = scmp.lt.s32.totalorder %s34, 1
        %s628 = scalar_select %p627, %s34, 1
        %s629 = smul.addr %s628, 4
        %s630 = smul.addr %s629, 4
        %s631 = scalar_lea.vmem %s5, %s630
        %p632 = pneg %p172
        %p633 = pneg %p169
        %p634 = scmp.lt.s32.totalorder %s34, 1
        %s635 = scalar_select %p634, %s34, 1
        %s636 = scalar_lea.vmem %s6, %s635
        %p637 = pneg %p198
        %p638 = pneg %p195
        %p639 = scmp.lt.s32.totalorder %s34, 1
        %s640 = scalar_select %p639, %s34, 1
        %s641 = smul.addr %s640, 4
        %s642 = smul.addr %s641, 4
        %s643 = scalar_lea.vmem %s7, %s642
        %p644 = pneg %p224
        %p645 = pneg %p221
        %p646 = scmp.lt.s32.totalorder %s34, 1
        %s647 = scalar_select %p646, %s34, 1
        %s648 = scalar_lea.vmem %s8, %s647
        %p649 = pneg %p250
        %p650 = pneg %p247
        %p651 = scmp.lt.s32.totalorder %s34, 1
        %s652 = scalar_select %p651, %s34, 1
        %s653 = scalar_lea.vmem %s9, %s652
        %p654 = pneg %p276
        %p655 = pneg %p273
        %p656 = scmp.lt.s32.totalorder %s34, 1
        %s657 = scalar_select %p656, %s34, 1
        %s658 = scalar_lea.vmem %s10, %s657
        %p659 = pneg %p302
        %p660 = pneg %p299
        %p661 = scmp.lt.s32.totalorder %s34, 1
        %s662 = scalar_select %p661, %s34, 1
        %s663 = smul.addr %s662, 64
        %s664 = smul.addr %s663, 4
        %s665 = scalar_lea.vmem %s11, %s664
        %p666 = pneg %p328
        %p667 = pneg %p325
        %p668 = scmp.lt.s32.totalorder %s34, 1
        %s669 = scalar_select %p668, %s34, 1
        %s670 = smul.addr %s669, 16
        %s671 = scalar_lea.vmem %s12, %s670
        %p672 = pneg %p354
        %p673 = pneg %p351
        %p674 = scmp.lt.s32.totalorder %s34, 1
        %s675 = scalar_select %p674, %s34, 1
        %s676 = smul.addr %s675, 256
        %s677 = smul.addr %s676, 4
        %s678 = scalar_lea.vmem %s13, %s677
        %p679 = pneg %p380
        %p680 = pneg %p377
        %p681 = scmp.lt.s32.totalorder %s34, 1
        %s682 = scalar_select %p681, %s34, 1
        %s683 = scalar_lea.vmem %s14, %s682
        %p684 = pneg %p406
        %p685 = pneg %p403
        %p686 = scmp.lt.s32.totalorder %s34, 1
        %s687 = scalar_select %p686, %s34, 1
        %s688 = scalar_lea.vmem %s15, %s687
        %p689 = pneg %p432
        %p690 = pneg %p429
        %p691 = scmp.lt.s32.totalorder %s34, 1
        %s692 = scalar_select %p691, %s34, 1
        %s693 = scalar_lea.vmem %s16, %s692
        %p694 = pneg %p458
        %p695 = pneg %p455
        %p696 = pneg %p484
        %p697 = pneg %p481
        %s698 = smul.u32 2, %s33
        %p699 = scmp.lt.s32.totalorder %s698, 1
        %s700 = scalar_select %p699, %s698, 1
        %s701 = smul.addr %s700, 8
        %s702 = scalar_lea.vmem %s0, %s701
        %s703 = smul.u32 2, %s33
        %p704 = scmp.lt.s32.totalorder %s34, 1
        %s705 = scalar_select %p704, %s34, 1
        %s706 = smul.addr %s705, 4
        %s707 = smul.addr %s706, 4
        %s708 = scalar_lea.vmem %s5, %s707
        %p709 = scmp.lt.s32.totalorder %s34, 1
        %s710 = scalar_select %p709, %s34, 1
        %s711 = scalar_lea.vmem %s6, %s710
        %p712 = scmp.lt.s32.totalorder %s34, 1
        %s713 = scalar_select %p712, %s34, 1
        %s714 = smul.addr %s713, 4
        %s715 = smul.addr %s714, 4
        %s716 = scalar_lea.vmem %s7, %s715
        %p717 = scmp.lt.s32.totalorder %s34, 1
        %s718 = scalar_select %p717, %s34, 1
        %s719 = scalar_lea.vmem %s8, %s718
        %p720 = scmp.lt.s32.totalorder %s34, 1
        %s721 = scalar_select %p720, %s34, 1
        %s722 = scalar_lea.vmem %s9, %s721
        %p723 = scmp.lt.s32.totalorder %s34, 1
        %s724 = scalar_select %p723, %s34, 1
        %s725 = scalar_lea.vmem %s10, %s724
        %p726 = scmp.lt.s32.totalorder %s34, 1
        %s727 = scalar_select %p726, %s34, 1
        %s728 = smul.addr %s727, 64
        %s729 = smul.addr %s728, 4
        %s730 = scalar_lea.vmem %s11, %s729
        %p731 = scmp.lt.s32.totalorder %s34, 1
        %s732 = scalar_select %p731, %s34, 1
        %s733 = smul.addr %s732, 16
        %s734 = scalar_lea.vmem %s12, %s733
        %p735 = scmp.lt.s32.totalorder %s34, 1
        %s736 = scalar_select %p735, %s34, 1
        %s737 = smul.addr %s736, 256
        %s738 = smul.addr %s737, 4
        %s739 = scalar_lea.vmem %s13, %s738
        %p740 = scmp.lt.s32.totalorder %s34, 1
        %s741 = scalar_select %p740, %s34, 1
        %s742 = scalar_lea.vmem %s14, %s741
        %p743 = scmp.lt.s32.totalorder %s34, 1
        %s744 = scalar_select %p743, %s34, 1
        %s745 = scalar_lea.vmem %s15, %s744
        %p746 = scmp.lt.s32.totalorder %s34, 1
        %s747 = scalar_select %p746, %s34, 1
        %s748 = scalar_lea.vmem %s16, %s747
        %p750 = scmp.eq.s32.totalorder %s34, 0
        // Predicated region
        $region89: #{tpu_custom_call.1} parent=87 // pred_check
          %p751 = pneg %p750
        $region90: #{tpu_custom_call.1} parent=87 // pred_check_branch
          %753 = sbr.rel (%p751) target = $region92
        $region91: #{tpu_custom_call.1} parent=87 // pred_region
          %v754 = vld [vmem:[%s702] sm:$0xff]
          %v755 = vld [vmem:[%s702 + $0x8] sm:$0xff]
          %v756 = vpack.c.bf16 %v755, %v754
          %v757 = vld [vmem:[%s1] sm:$0xf]
          %v758 = vld [vmem:[%s1 + $0x4] sm:$0xf]
          %v759 = vld [vmem:[%s2] sm:$0x1]
          %v761 = vlaneseq
          %v762 = vshrl.u32 %v761, 7
          %v763 = vsub.s32 0, %v762
          %v764 = vrot.slane %v759, %v763
          %v768 = vunpack.c.l.b16 %v757
          %v769 = vunpack.c.l.b16 %v758
          %v770 = vpack.c.b16 %v769, %v768
          %vm772 = vcmask 130048
          %v774 = vsel %vm772, %v756, 0
          %776 = vmatprep.subr.bf16.mxu0 0
          %777 = vmatpush1.bf16.msra.mxu0 0
          %778 = vmatprep.subr.bf16.mxu0 0
          %779 = vmatpush1.bf16.msra.mxu0 0
          %780 = vmatprep.subr.bf16.mxu0 0
          %781 = vmatpush1.bf16.msra.mxu0 0
          %782 = vmatprep.subr.bf16.mxu0 0
          %783 = vmatpush1.bf16.msra.mxu0 0
          %784 = vmatprep.subr.bf16.mxu0 0
          %785 = vmatpush1.bf16.msra.mxu0 0
          %786 = vmatprep.subr.bf16.mxu0 0
          %787 = vmatpush1.bf16.msra.mxu0 0
          %788 = vmatprep.subr.bf16.mxu0 0
          %789 = vmatpush1.bf16.msra.mxu0 0
          %790 = vmatprep.subr.bf16.mxu0 0
          %791 = vmatpush1.bf16.msra.mxu0 %v770
          %792 = vmatprep.subr.bf16.mxu0 0
          %793 = vmatpush2.bf16.msra.mxu0 0
          %794 = vmatprep.subr.bf16.mxu0 0
          %795 = vmatpush2.bf16.msra.mxu0 0
          %796 = vmatprep.subr.bf16.mxu0 0
          %797 = vmatpush2.bf16.msra.mxu0 0
          %798 = vmatprep.subr.bf16.mxu0 0
          %799 = vmatpush2.bf16.msra.mxu0 0
          %800 = vmatprep.subr.bf16.mxu0 0
          %801 = vmatpush2.bf16.msra.mxu0 0
          %802 = vmatprep.subr.bf16.mxu0 0
          %803 = vmatpush2.bf16.msra.mxu0 0
          %804 = vmatprep.subr.bf16.mxu0 0
          %805 = vmatpush2.bf16.msra.mxu0 0
          %806 = vmatprep.subr.bf16.mxu0 0
          %807 = vmatpush2.bf16.msra.mxu0 0
          %808 = vmatprep.mubr.bf16.mxu0 0
          %809 = vmatmul.mubr.bf16.gmra.mxu0 %v774
          %v810 = vpop.f32.mrf.mxu0
          %v811 = vadd.f32 %v764, %v810
          %v812 = vpop.f32.mrf.mxu0
          %v813 = vpop.f32.mrf.mxu0
          %v814 = vadd.f32 %v764, %v813
          %v815 = vpop.f32.mrf.mxu0
          %816 = vdwg.mxu0
          %v817 = vpack.c.bf16 %v814, %v811
          %v819 = vunpack.c.l.b16 %v817
          %v820 = vunpack.c.h.b16 %v817
          %v821 = vpack.c.b16 %v819, %v819
          %v822 = vpack.c.b16 %v820, %v820
          %vm825 = vcmask 257024
          %826 = vst.msk [vmem:[#allocation2] sm:$0xf] %vm825, %v821
          %827 = vst.msk [vmem:[#allocation2 + $0x4] sm:$0xf] %vm825, %v822
        $region92: #{tpu_custom_call.1} parent=87 // pred_fallthru
          _
        %v828 = vld [vmem:[#allocation2] sm:$0xf]
        %v829 = vld [vmem:[#allocation2 + $0x4] sm:$0xf]
        %v830 = vld [vmem:[%s708] sm:$0xf]
        %v831 = vld [vmem:[%s708 + $0x4] sm:$0xf]
        %v832 = vld [vmem:[%s708 + $0x8] sm:$0xf]
        %v833 = vld [vmem:[%s708 + $0xc] sm:$0xf]
        %v834 = vld [vmem:[%s711] sm:$0x1]
        %v836 = vlaneseq
        %v837 = vshrl.u32 %v836, 7
        %v838 = vsub.s32 0, %v837
        %v839 = vrot.slane %v834, %v838
        %v843 = vunpack.c.l.b16 %v828
        %v844 = vunpack.c.l.b16 %v829
        %v845 = vpack.c.b16 %v844, %v843
        %v850 = vunpack.c.l.b16 %v830
        %v851 = vunpack.c.l.b16 %v831
        %v852 = vunpack.c.l.b16 %v832
        %v853 = vunpack.c.l.b16 %v833
        %v854 = vpack.c.b16 %v851, %v850
        %v855 = vpack.c.b16 %v853, %v852
        %vm858 = vcmask 261120
        %v860 = vsel %vm858, %v845, 0
        %862 = vmatprep.subr.bf16.mxu0 0
        %863 = vmatpush1.bf16.msra.mxu0 0
        %864 = vmatprep.subr.bf16.mxu0 0
        %865 = vmatpush1.bf16.msra.mxu0 0
        %866 = vmatprep.subr.bf16.mxu0 0
        %867 = vmatpush1.bf16.msra.mxu0 0
        %868 = vmatprep.subr.bf16.mxu0 0
        %869 = vmatpush1.bf16.msra.mxu0 0
        %870 = vmatprep.subr.bf16.mxu0 0
        %871 = vmatpush1.bf16.msra.mxu0 0
        %872 = vmatprep.subr.bf16.mxu0 0
        %873 = vmatpush1.bf16.msra.mxu0 0
        %874 = vmatprep.subr.bf16.mxu0 0
        %875 = vmatpush1.bf16.msra.mxu0 %v855
        %876 = vmatprep.subr.bf16.mxu0 0
        %877 = vmatpush1.bf16.msra.mxu0 %v854
        %878 = vmatprep.subr.bf16.mxu0 0
        %879 = vmatpush2.bf16.msra.mxu0 0
        %880 = vmatprep.subr.bf16.mxu0 0
        %881 = vmatpush2.bf16.msra.mxu0 0
        %882 = vmatprep.subr.bf16.mxu0 0
        %883 = vmatpush2.bf16.msra.mxu0 0
        %884 = vmatprep.subr.bf16.mxu0 0
        %885 = vmatpush2.bf16.msra.mxu0 0
        %886 = vmatprep.subr.bf16.mxu0 0
        %887 = vmatpush2.bf16.msra.mxu0 0
        %888 = vmatprep.subr.bf16.mxu0 0
        %889 = vmatpush2.bf16.msra.mxu0 0
        %890 = vmatprep.subr.bf16.mxu0 0
        %891 = vmatpush2.bf16.msra.mxu0 0
        %892 = vmatprep.subr.bf16.mxu0 0
        %893 = vmatpush2.bf16.msra.mxu0 0
        %894 = vmatprep.mubr.bf16.mxu0 0
        %895 = vmatmul.mubr.bf16.gmra.mxu0 %v860
        %v896 = vpop.f32.mrf.mxu0
        %v897 = vadd.f32 %v839, %v896
        %v898 = vpop.f32.mrf.mxu0
        %v899 = vpop.f32.mrf.mxu0
        %v900 = vadd.f32 %v839, %v899
        %v901 = vpop.f32.mrf.mxu0
        %902 = vdwg.mxu0
        %v903 = vld [vmem:[%s716] sm:$0xf]
        %v904 = vld [vmem:[%s716 + $0x4] sm:$0xf]
        %v905 = vld [vmem:[%s716 + $0x8] sm:$0xf]
        %v906 = vld [vmem:[%s716 + $0xc] sm:$0xf]
        %908 = vrot.lane.b32.xlu0 %v897, 96
        %v909 = vpop.permute.xlu0 %908
        %vm910 = vcmask 64512
        %v911 = vsel %vm910, %v897, 0
        %v913 = vsel %vm910, %v909, 0
        %915 = vmatprep.subr.mxu0 0.0
        %916 = vmatpush1.xpose.msra.mxu0 0.0
        %917 = vmatprep.subr.mxu0 0.0
        %918 = vmatpush1.xpose.msra.mxu0 0.0
        %919 = vmatprep.subr.mxu0 0.0
        %920 = vmatpush1.xpose.msra.mxu0 0.0
        %921 = vmatprep.subr.mxu0 0.0
        %922 = vmatpush1.xpose.msra.mxu0 0.0
        %923 = vmatprep.subr.mxu0 0.0
        %924 = vmatpush1.xpose.msra.mxu0 0.0
        %925 = vmatprep.subr.mxu0 0.0
        %926 = vmatpush1.xpose.msra.mxu0 0.0
        %927 = vmatprep.subr.mxu0 0.0
        %928 = vmatpush1.xpose.msra.mxu0 0.0
        %929 = vmatprep.subr.mxu0 0.0
        %930 = vmatpush1.xpose.msra.mxu0 0.0
        %931 = vmatprep.subr.mxu0 0.0
        %932 = vmatpush1.xpose.msra.mxu0 0.0
        %933 = vmatprep.subr.mxu0 0.0
        %934 = vmatpush1.xpose.msra.mxu0 0.0
        %935 = vmatprep.subr.mxu0 0.0
        %936 = vmatpush1.xpose.msra.mxu0 0.0
        %937 = vmatprep.subr.mxu0 0.0
        %938 = vmatpush1.xpose.msra.mxu0 0.0
        %939 = vmatprep.subr.mxu0 0.0
        %940 = vmatpush1.xpose.msra.mxu0 0.0
        %941 = vmatprep.subr.mxu0 0.0
        %942 = vmatpush1.xpose.msra.mxu0 0.0
        %943 = vmatprep.subr.mxu0 0.0
        %944 = vmatpush1.xpose.msra.mxu0 0.0
        %945 = vmatprep.subr.mxu0 0.0
        %946 = vmatpush1.xpose.msra.mxu0 %v913
        %947 = vmatprep.subr.mxu0 0.0
        %948 = vmatpush2.xpose.msra.mxu0 0.0
        %949 = vmatprep.subr.mxu0 0.0
        %950 = vmatpush2.xpose.msra.mxu0 0.0
        %951 = vmatprep.subr.mxu0 0.0
        %952 = vmatpush2.xpose.msra.mxu0 0.0
        %953 = vmatprep.subr.mxu0 0.0
        %954 = vmatpush2.xpose.msra.mxu0 0.0
        %955 = vmatprep.subr.mxu0 0.0
        %956 = vmatpush2.xpose.msra.mxu0 0.0
        %957 = vmatprep.subr.mxu0 0.0
        %958 = vmatpush2.xpose.msra.mxu0 0.0
        %959 = vmatprep.subr.mxu0 0.0
        %960 = vmatpush2.xpose.msra.mxu0 0.0
        %961 = vmatprep.subr.mxu0 0.0
        %962 = vmatpush2.xpose.msra.mxu0 0.0
        %963 = vmatprep.subr.mxu0 0.0
        %964 = vmatpush2.xpose.msra.mxu0 0.0
        %965 = vmatprep.subr.mxu0 0.0
        %966 = vmatpush2.xpose.msra.mxu0 0.0
        %967 = vmatprep.subr.mxu0 0.0
        %968 = vmatpush2.xpose.msra.mxu0 0.0
        %969 = vmatprep.subr.mxu0 0.0
        %970 = vmatpush2.xpose.msra.mxu0 0.0
        %971 = vmatprep.subr.mxu0 0.0
        %972 = vmatpush2.xpose.msra.mxu0 0.0
        %973 = vmatprep.subr.mxu0 0.0
        %974 = vmatpush2.xpose.msra.mxu0 0.0
        %975 = vmatprep.subr.mxu0 0.0
        %976 = vmatpush2.xpose.msra.mxu0 0.0
        %977 = vmatprep.subr.mxu0 0.0
        %978 = vmatpush2.xpose.msra.mxu0 0.0
        %979 = vmatprep.mubr.f32.mxu0 0.0
        %980 = vmatmul.mubr.f32.gmra.mxu0 %v911
        %v981 = vpop.f32.mrf.mxu0
        %v982 = vadd.f32 0.0, %v981
        %v983 = vpop.f32.mrf.mxu0
        %984 = vdwg.mxu0
        %986 = vrot.lane.b32.xlu0 %v900, 96
        %v987 = vpop.permute.xlu0 %986
        %v988 = vsel %vm910, %v900, 0
        %v990 = vsel %vm910, %v987, 0
        %992 = vmatprep.subr.mxu0 0.0
        %993 = vmatpush1.xpose.msra.mxu0 0.0
        %994 = vmatprep.subr.mxu0 0.0
        %995 = vmatpush1.xpose.msra.mxu0 0.0
        %996 = vmatprep.subr.mxu0 0.0
        %997 = vmatpush1.xpose.msra.mxu0 0.0
        %998 = vmatprep.subr.mxu0 0.0
        %999 = vmatpush1.xpose.msra.mxu0 0.0
        %1000 = vmatprep.subr.mxu0 0.0
        %1001 = vmatpush1.xpose.msra.mxu0 0.0
        %1002 = vmatprep.subr.mxu0 0.0
        %1003 = vmatpush1.xpose.msra.mxu0 0.0
        %1004 = vmatprep.subr.mxu0 0.0
        %1005 = vmatpush1.xpose.msra.mxu0 0.0
        %1006 = vmatprep.subr.mxu0 0.0
        %1007 = vmatpush1.xpose.msra.mxu0 0.0
        %1008 = vmatprep.subr.mxu0 0.0
        %1009 = vmatpush1.xpose.msra.mxu0 0.0
        %1010 = vmatprep.subr.mxu0 0.0
        %1011 = vmatpush1.xpose.msra.mxu0 0.0
        %1012 = vmatprep.subr.mxu0 0.0
        %1013 = vmatpush1.xpose.msra.mxu0 0.0
        %1014 = vmatprep.subr.mxu0 0.0
        %1015 = vmatpush1.xpose.msra.mxu0 0.0
        %1016 = vmatprep.subr.mxu0 0.0
        %1017 = vmatpush1.xpose.msra.mxu0 0.0
        %1018 = vmatprep.subr.mxu0 0.0
        %1019 = vmatpush1.xpose.msra.mxu0 0.0
        %1020 = vmatprep.subr.mxu0 0.0
        %1021 = vmatpush1.xpose.msra.mxu0 0.0
        %1022 = vmatprep.subr.mxu0 0.0
        %1023 = vmatpush1.xpose.msra.mxu0 %v990
        %1024 = vmatprep.subr.mxu0 0.0
        %1025 = vmatpush2.xpose.msra.mxu0 0.0
        %1026 = vmatprep.subr.mxu0 0.0
        %1027 = vmatpush2.xpose.msra.mxu0 0.0
        %1028 = vmatprep.subr.mxu0 0.0
        %1029 = vmatpush2.xpose.msra.mxu0 0.0
        %1030 = vmatprep.subr.mxu0 0.0
        %1031 = vmatpush2.xpose.msra.mxu0 0.0
        %1032 = vmatprep.subr.mxu0 0.0
        %1033 = vmatpush2.xpose.msra.mxu0 0.0
        %1034 = vmatprep.subr.mxu0 0.0
        %1035 = vmatpush2.xpose.msra.mxu0 0.0
        %1036 = vmatprep.subr.mxu0 0.0
        %1037 = vmatpush2.xpose.msra.mxu0 0.0
        %1038 = vmatprep.subr.mxu0 0.0
        %1039 = vmatpush2.xpose.msra.mxu0 0.0
        %1040 = vmatprep.subr.mxu0 0.0
        %1041 = vmatpush2.xpose.msra.mxu0 0.0
        %1042 = vmatprep.subr.mxu0 0.0
        %1043 = vmatpush2.xpose.msra.mxu0 0.0
        %1044 = vmatprep.subr.mxu0 0.0
        %1045 = vmatpush2.xpose.msra.mxu0 0.0
        %1046 = vmatprep.subr.mxu0 0.0
        %1047 = vmatpush2.xpose.msra.mxu0 0.0
        %1048 = vmatprep.subr.mxu0 0.0
        %1049 = vmatpush2.xpose.msra.mxu0 0.0
        %1050 = vmatprep.subr.mxu0 0.0
        %1051 = vmatpush2.xpose.msra.mxu0 0.0
        %1052 = vmatprep.subr.mxu0 0.0
        %1053 = vmatpush2.xpose.msra.mxu0 0.0
        %1054 = vmatprep.subr.mxu0 0.0
        %1055 = vmatpush2.xpose.msra.mxu0 0.0
        %1056 = vmatprep.mubr.f32.mxu0 0.0
        %1057 = vmatmul.mubr.f32.gmra.mxu0 %v988
        %v1058 = vpop.f32.mrf.mxu0
        %v1059 = vadd.f32 0.0, %v1058
        %v1060 = vpop.f32.mrf.mxu0
        %1061 = vdwg.mxu0
        %v1062 = vmul.f32 %v982, 0.35355338
        %v1063 = vmul.f32 %v1059, 0.35355338
        %v1064 = vsel %vm910, %v1062, -inf
        %1065 = vmax.xlane.f32.xlu0 %v1064
        %v1066 = vpop.xlane.xlu0 %1065
        %v1067 = vsel %vm910, %v1063, -inf
        %1068 = vmax.xlane.f32.xlu0 %v1067
        %v1069 = vpop.xlane.xlu0 %1068
        %v1070 = vsub.f32 %v1062, %v1066
        %v1071 = vsub.f32 %v1063, %v1069
        %v1072 = vmul.f32 %v1070, 1.442695
        %v1073 = vpow.pop %v1072
        %v1074 = vmul.f32 %v1071, 1.442695
        %v1075 = vpow.pop %v1074
        %v1076 = vsel %vm910, %v1073, 0.0
        %1077 = vadd.xlane.f32.xlu0 %v1076
        %v1078 = vpop.xlane.xlu0 %1077
        %v1079 = vsel %vm910, %v1075, 0.0
        %1080 = vadd.xlane.f32.xlu0 %v1079
        %v1081 = vpop.xlane.xlu0 %1080
        %v1082 = vrcp.pop %v1078
        %v1083 = vrcp.pop %v1081
        %v1084 = vmul.f32 %v1073, %v1082
        %v1085 = vmul.f32 %v1075, %v1083
        %1086 = vrot.lane.b32.xlu0 %v897, 64
        %v1087 = vpop.permute.xlu0 %1086
        %v1090 = vsel %vm910, %v1084, 0
        %1092 = vmatprep.subr.mxu0 0.0
        %1093 = vmatpush1.msra.mxu0 0.0
        %1094 = vmatprep.subr.mxu0 0.0
        %1095 = vmatpush1.msra.mxu0 0.0
        %1096 = vmatprep.subr.mxu0 0.0
        %1097 = vmatpush1.msra.mxu0 0.0
        %1098 = vmatprep.subr.mxu0 0.0
        %1099 = vmatpush1.msra.mxu0 0.0
        %1100 = vmatprep.subr.mxu0 0.0
        %1101 = vmatpush1.msra.mxu0 0.0
        %1102 = vmatprep.subr.mxu0 0.0
        %1103 = vmatpush1.msra.mxu0 0.0
        %1104 = vmatprep.subr.mxu0 0.0
        %1105 = vmatpush1.msra.mxu0 0.0
        %1106 = vmatprep.subr.mxu0 0.0
        %1107 = vmatpush1.msra.mxu0 0.0
        %1108 = vmatprep.subr.mxu0 0.0
        %1109 = vmatpush1.msra.mxu0 0.0
        %1110 = vmatprep.subr.mxu0 0.0
        %1111 = vmatpush1.msra.mxu0 0.0
        %1112 = vmatprep.subr.mxu0 0.0
        %1113 = vmatpush1.msra.mxu0 0.0
        %1114 = vmatprep.subr.mxu0 0.0
        %1115 = vmatpush1.msra.mxu0 0.0
        %1116 = vmatprep.subr.mxu0 0.0
        %1117 = vmatpush1.msra.mxu0 0.0
        %1118 = vmatprep.subr.mxu0 0.0
        %1119 = vmatpush1.msra.mxu0 0.0
        %1120 = vmatprep.subr.mxu0 0.0
        %1121 = vmatpush1.msra.mxu0 0.0
        %1122 = vmatprep.subr.mxu0 0.0
        %1123 = vmatpush1.msra.mxu0 %v1087
        %1124 = vmatprep.subr.mxu0 0.0
        %1125 = vmatpush2.msra.mxu0 0.0
        %1126 = vmatprep.subr.mxu0 0.0
        %1127 = vmatpush2.msra.mxu0 0.0
        %1128 = vmatprep.subr.mxu0 0.0
        %1129 = vmatpush2.msra.mxu0 0.0
        %1130 = vmatprep.subr.mxu0 0.0
        %1131 = vmatpush2.msra.mxu0 0.0
        %1132 = vmatprep.subr.mxu0 0.0
        %1133 = vmatpush2.msra.mxu0 0.0
        %1134 = vmatprep.subr.mxu0 0.0
        %1135 = vmatpush2.msra.mxu0 0.0
        %1136 = vmatprep.subr.mxu0 0.0
        %1137 = vmatpush2.msra.mxu0 0.0
        %1138 = vmatprep.subr.mxu0 0.0
        %1139 = vmatpush2.msra.mxu0 0.0
        %1140 = vmatprep.subr.mxu0 0.0
        %1141 = vmatpush2.msra.mxu0 0.0
        %1142 = vmatprep.subr.mxu0 0.0
        %1143 = vmatpush2.msra.mxu0 0.0
        %1144 = vmatprep.subr.mxu0 0.0
        %1145 = vmatpush2.msra.mxu0 0.0
        %1146 = vmatprep.subr.mxu0 0.0
        %1147 = vmatpush2.msra.mxu0 0.0
        %1148 = vmatprep.subr.mxu0 0.0
        %1149 = vmatpush2.msra.mxu0 0.0
        %1150 = vmatprep.subr.mxu0 0.0
        %1151 = vmatpush2.msra.mxu0 0.0
        %1152 = vmatprep.subr.mxu0 0.0
        %1153 = vmatpush2.msra.mxu0 0.0
        %1154 = vmatprep.subr.mxu0 0.0
        %1155 = vmatpush2.msra.mxu0 0.0
        %1156 = vmatprep.mubr.f32.mxu0 0.0
        %1157 = vmatmul.mubr.f32.gmra.mxu0 %v1090
        %v1158 = vpop.f32.mrf.mxu0
        %v1159 = vadd.f32 0.0, %v1158
        %v1160 = vpop.f32.mrf.mxu0
        %1161 = vdwg.mxu0
        %1162 = vrot.lane.b32.xlu0 %v900, 64
        %v1163 = vpop.permute.xlu0 %1162
        %v1166 = vsel %vm910, %v1085, 0
        %1168 = vmatprep.subr.mxu0 0.0
        %1169 = vmatpush1.msra.mxu0 0.0
        %1170 = vmatprep.subr.mxu0 0.0
        %1171 = vmatpush1.msra.mxu0 0.0
        %1172 = vmatprep.subr.mxu0 0.0
        %1173 = vmatpush1.msra.mxu0 0.0
        %1174 = vmatprep.subr.mxu0 0.0
        %1175 = vmatpush1.msra.mxu0 0.0
        %1176 = vmatprep.subr.mxu0 0.0
        %1177 = vmatpush1.msra.mxu0 0.0
        %1178 = vmatprep.subr.mxu0 0.0
        %1179 = vmatpush1.msra.mxu0 0.0
        %1180 = vmatprep.subr.mxu0 0.0
        %1181 = vmatpush1.msra.mxu0 0.0
        %1182 = vmatprep.subr.mxu0 0.0
        %1183 = vmatpush1.msra.mxu0 0.0
        %1184 = vmatprep.subr.mxu0 0.0
        %1185 = vmatpush1.msra.mxu0 0.0
        %1186 = vmatprep.subr.mxu0 0.0
        %1187 = vmatpush1.msra.mxu0 0.0
        %1188 = vmatprep.subr.mxu0 0.0
        %1189 = vmatpush1.msra.mxu0 0.0
        %1190 = vmatprep.subr.mxu0 0.0
        %1191 = vmatpush1.msra.mxu0 0.0
        %1192 = vmatprep.subr.mxu0 0.0
        %1193 = vmatpush1.msra.mxu0 0.0
        %1194 = vmatprep.subr.mxu0 0.0
        %1195 = vmatpush1.msra.mxu0 0.0
        %1196 = vmatprep.subr.mxu0 0.0
        %1197 = vmatpush1.msra.mxu0 0.0
        %1198 = vmatprep.subr.mxu0 0.0
        %1199 = vmatpush1.msra.mxu0 %v1163
        %1200 = vmatprep.subr.mxu0 0.0
        %1201 = vmatpush2.msra.mxu0 0.0
        %1202 = vmatprep.subr.mxu0 0.0
        %1203 = vmatpush2.msra.mxu0 0.0
        %1204 = vmatprep.subr.mxu0 0.0
        %1205 = vmatpush2.msra.mxu0 0.0
        %1206 = vmatprep.subr.mxu0 0.0
        %1207 = vmatpush2.msra.mxu0 0.0
        %1208 = vmatprep.subr.mxu0 0.0
        %1209 = vmatpush2.msra.mxu0 0.0
        %1210 = vmatprep.subr.mxu0 0.0
        %1211 = vmatpush2.msra.mxu0 0.0
        %1212 = vmatprep.subr.mxu0 0.0
        %1213 = vmatpush2.msra.mxu0 0.0
        %1214 = vmatprep.subr.mxu0 0.0
        %1215 = vmatpush2.msra.mxu0 0.0
        %1216 = vmatprep.subr.mxu0 0.0
        %1217 = vmatpush2.msra.mxu0 0.0
        %1218 = vmatprep.subr.mxu0 0.0
        %1219 = vmatpush2.msra.mxu0 0.0
        %1220 = vmatprep.subr.mxu0 0.0
        %1221 = vmatpush2.msra.mxu0 0.0
        %1222 = vmatprep.subr.mxu0 0.0
        %1223 = vmatpush2.msra.mxu0 0.0
        %1224 = vmatprep.subr.mxu0 0.0
        %1225 = vmatpush2.msra.mxu0 0.0
        %1226 = vmatprep.subr.mxu0 0.0
        %1227 = vmatpush2.msra.mxu0 0.0
        %1228 = vmatprep.subr.mxu0 0.0
        %1229 = vmatpush2.msra.mxu0 0.0
        %1230 = vmatprep.subr.mxu0 0.0
        %1231 = vmatpush2.msra.mxu0 0.0
        %1232 = vmatprep.mubr.f32.mxu0 0.0
        %1233 = vmatmul.mubr.f32.gmra.mxu0 %v1166
        %v1234 = vpop.f32.mrf.mxu0
        %v1235 = vadd.f32 0.0, %v1234
        %v1236 = vpop.f32.mrf.mxu0
        %1237 = vdwg.mxu0
        %v1238 = vpack.c.bf16 %v1235, %v1159
        %1239 = vrot.lane.b32.xlu0 %v897, 120
        %v1240 = vpop.permute.xlu0 %1239
        %1241 = vrot.lane.b32.xlu0 %v897, 88
        %v1242 = vpop.permute.xlu0 %1241
        %v1243 = vsel %vm910, %v1240, 0
        %v1245 = vsel %vm910, %v1242, 0
        %1247 = vmatprep.subr.mxu0 0.0
        %1248 = vmatpush1.xpose.msra.mxu0 0.0
        %1249 = vmatprep.subr.mxu0 0.0
        %1250 = vmatpush1.xpose.msra.mxu0 0.0
        %1251 = vmatprep.subr.mxu0 0.0
        %1252 = vmatpush1.xpose.msra.mxu0 0.0
        %1253 = vmatprep.subr.mxu0 0.0
        %1254 = vmatpush1.xpose.msra.mxu0 0.0
        %1255 = vmatprep.subr.mxu0 0.0
        %1256 = vmatpush1.xpose.msra.mxu0 0.0
        %1257 = vmatprep.subr.mxu0 0.0
        %1258 = vmatpush1.xpose.msra.mxu0 0.0
        %1259 = vmatprep.subr.mxu0 0.0
        %1260 = vmatpush1.xpose.msra.mxu0 0.0
        %1261 = vmatprep.subr.mxu0 0.0
        %1262 = vmatpush1.xpose.msra.mxu0 0.0
        %1263 = vmatprep.subr.mxu0 0.0
        %1264 = vmatpush1.xpose.msra.mxu0 0.0
        %1265 = vmatprep.subr.mxu0 0.0
        %1266 = vmatpush1.xpose.msra.mxu0 0.0
        %1267 = vmatprep.subr.mxu0 0.0
        %1268 = vmatpush1.xpose.msra.mxu0 0.0
        %1269 = vmatprep.subr.mxu0 0.0
        %1270 = vmatpush1.xpose.msra.mxu0 0.0
        %1271 = vmatprep.subr.mxu0 0.0
        %1272 = vmatpush1.xpose.msra.mxu0 0.0
        %1273 = vmatprep.subr.mxu0 0.0
        %1274 = vmatpush1.xpose.msra.mxu0 0.0
        %1275 = vmatprep.subr.mxu0 0.0
        %1276 = vmatpush1.xpose.msra.mxu0 0.0
        %1277 = vmatprep.subr.mxu0 0.0
        %1278 = vmatpush1.xpose.msra.mxu0 %v1245
        %1279 = vmatprep.subr.mxu0 0.0
        %1280 = vmatpush2.xpose.msra.mxu0 0.0
        %1281 = vmatprep.subr.mxu0 0.0
        %1282 = vmatpush2.xpose.msra.mxu0 0.0
        %1283 = vmatprep.subr.mxu0 0.0
        %1284 = vmatpush2.xpose.msra.mxu0 0.0
        %1285 = vmatprep.subr.mxu0 0.0
        %1286 = vmatpush2.xpose.msra.mxu0 0.0
        %1287 = vmatprep.subr.mxu0 0.0
        %1288 = vmatpush2.xpose.msra.mxu0 0.0
        %1289 = vmatprep.subr.mxu0 0.0
        %1290 = vmatpush2.xpose.msra.mxu0 0.0
        %1291 = vmatprep.subr.mxu0 0.0
        %1292 = vmatpush2.xpose.msra.mxu0 0.0
        %1293 = vmatprep.subr.mxu0 0.0
        %1294 = vmatpush2.xpose.msra.mxu0 0.0
        %1295 = vmatprep.subr.mxu0 0.0
        %1296 = vmatpush2.xpose.msra.mxu0 0.0
        %1297 = vmatprep.subr.mxu0 0.0
        %1298 = vmatpush2.xpose.msra.mxu0 0.0
        %1299 = vmatprep.subr.mxu0 0.0
        %1300 = vmatpush2.xpose.msra.mxu0 0.0
        %1301 = vmatprep.subr.mxu0 0.0
        %1302 = vmatpush2.xpose.msra.mxu0 0.0
        %1303 = vmatprep.subr.mxu0 0.0
        %1304 = vmatpush2.xpose.msra.mxu0 0.0
        %1305 = vmatprep.subr.mxu0 0.0
        %1306 = vmatpush2.xpose.msra.mxu0 0.0
        %1307 = vmatprep.subr.mxu0 0.0
        %1308 = vmatpush2.xpose.msra.mxu0 0.0
        %1309 = vmatprep.subr.mxu0 0.0
        %1310 = vmatpush2.xpose.msra.mxu0 0.0
        %1311 = vmatprep.mubr.f32.mxu0 0.0
        %1312 = vmatmul.mubr.f32.gmra.mxu0 %v1243
        %v1313 = vpop.f32.mrf.mxu0
        %v1314 = vadd.f32 0.0, %v1313
        %v1315 = vpop.f32.mrf.mxu0
        %1316 = vdwg.mxu0
        %1317 = vrot.lane.b32.xlu0 %v900, 120
        %v1318 = vpop.permute.xlu0 %1317
        %1319 = vrot.lane.b32.xlu0 %v900, 88
        %v1320 = vpop.permute.xlu0 %1319
        %v1321 = vsel %vm910, %v1318, 0
        %v1323 = vsel %vm910, %v1320, 0
        %1325 = vmatprep.subr.mxu0 0.0
        %1326 = vmatpush1.xpose.msra.mxu0 0.0
        %1327 = vmatprep.subr.mxu0 0.0
        %1328 = vmatpush1.xpose.msra.mxu0 0.0
        %1329 = vmatprep.subr.mxu0 0.0
        %1330 = vmatpush1.xpose.msra.mxu0 0.0
        %1331 = vmatprep.subr.mxu0 0.0
        %1332 = vmatpush1.xpose.msra.mxu0 0.0
        %1333 = vmatprep.subr.mxu0 0.0
        %1334 = vmatpush1.xpose.msra.mxu0 0.0
        %1335 = vmatprep.subr.mxu0 0.0
        %1336 = vmatpush1.xpose.msra.mxu0 0.0
        %1337 = vmatprep.subr.mxu0 0.0
        %1338 = vmatpush1.xpose.msra.mxu0 0.0
        %1339 = vmatprep.subr.mxu0 0.0
        %1340 = vmatpush1.xpose.msra.mxu0 0.0
        %1341 = vmatprep.subr.mxu0 0.0
        %1342 = vmatpush1.xpose.msra.mxu0 0.0
        %1343 = vmatprep.subr.mxu0 0.0
        %1344 = vmatpush1.xpose.msra.mxu0 0.0
        %1345 = vmatprep.subr.mxu0 0.0
        %1346 = vmatpush1.xpose.msra.mxu0 0.0
        %1347 = vmatprep.subr.mxu0 0.0
        %1348 = vmatpush1.xpose.msra.mxu0 0.0
        %1349 = vmatprep.subr.mxu0 0.0
        %1350 = vmatpush1.xpose.msra.mxu0 0.0
        %1351 = vmatprep.subr.mxu0 0.0
        %1352 = vmatpush1.xpose.msra.mxu0 0.0
        %1353 = vmatprep.subr.mxu0 0.0
        %1354 = vmatpush1.xpose.msra.mxu0 0.0
        %1355 = vmatprep.subr.mxu0 0.0
        %1356 = vmatpush1.xpose.msra.mxu0 %v1323
        %1357 = vmatprep.subr.mxu0 0.0
        %1358 = vmatpush2.xpose.msra.mxu0 0.0
        %1359 = vmatprep.subr.mxu0 0.0
        %1360 = vmatpush2.xpose.msra.mxu0 0.0
        %1361 = vmatprep.subr.mxu0 0.0
        %1362 = vmatpush2.xpose.msra.mxu0 0.0
        %1363 = vmatprep.subr.mxu0 0.0
        %1364 = vmatpush2.xpose.msra.mxu0 0.0
        %1365 = vmatprep.subr.mxu0 0.0
        %1366 = vmatpush2.xpose.msra.mxu0 0.0
        %1367 = vmatprep.subr.mxu0 0.0
        %1368 = vmatpush2.xpose.msra.mxu0 0.0
        %1369 = vmatprep.subr.mxu0 0.0
        %1370 = vmatpush2.xpose.msra.mxu0 0.0
        %1371 = vmatprep.subr.mxu0 0.0
        %1372 = vmatpush2.xpose.msra.mxu0 0.0
        %1373 = vmatprep.subr.mxu0 0.0
        %1374 = vmatpush2.xpose.msra.mxu0 0.0
        %1375 = vmatprep.subr.mxu0 0.0
        %1376 = vmatpush2.xpose.msra.mxu0 0.0
        %1377 = vmatprep.subr.mxu0 0.0
        %1378 = vmatpush2.xpose.msra.mxu0 0.0
        %1379 = vmatprep.subr.mxu0 0.0
        %1380 = vmatpush2.xpose.msra.mxu0 0.0
        %1381 = vmatprep.subr.mxu0 0.0
        %1382 = vmatpush2.xpose.msra.mxu0 0.0
        %1383 = vmatprep.subr.mxu0 0.0
        %1384 = vmatpush2.xpose.msra.mxu0 0.0
        %1385 = vmatprep.subr.mxu0 0.0
        %1386 = vmatpush2.xpose.msra.mxu0 0.0
        %1387 = vmatprep.subr.mxu0 0.0
        %1388 = vmatpush2.xpose.msra.mxu0 0.0
        %1389 = vmatprep.mubr.f32.mxu0 0.0
        %1390 = vmatmul.mubr.f32.gmra.mxu0 %v1321
        %v1391 = vpop.f32.mrf.mxu0
        %v1392 = vadd.f32 0.0, %v1391
        %v1393 = vpop.f32.mrf.mxu0
        %1394 = vdwg.mxu0
        %v1395 = vmul.f32 %v1314, 0.35355338
        %v1396 = vmul.f32 %v1392, 0.35355338
        %v1397 = vsel %vm910, %v1395, -inf
        %1398 = vmax.xlane.f32.xlu0 %v1397
        %v1399 = vpop.xlane.xlu0 %1398
        %v1400 = vsel %vm910, %v1396, -inf
        %1401 = vmax.xlane.f32.xlu0 %v1400
        %v1402 = vpop.xlane.xlu0 %1401
        %v1403 = vsub.f32 %v1395, %v1399
        %v1404 = vsub.f32 %v1396, %v1402
        %v1405 = vmul.f32 %v1403, 1.442695
        %v1406 = vpow.pop %v1405
        %v1407 = vmul.f32 %v1404, 1.442695
        %v1408 = vpow.pop %v1407
        %v1409 = vsel %vm910, %v1406, 0.0
        %1410 = vadd.xlane.f32.xlu0 %v1409
        %v1411 = vpop.xlane.xlu0 %1410
        %v1412 = vsel %vm910, %v1408, 0.0
        %1413 = vadd.xlane.f32.xlu0 %v1412
        %v1414 = vpop.xlane.xlu0 %1413
        %v1415 = vrcp.pop %v1411
        %v1416 = vrcp.pop %v1414
        %v1417 = vmul.f32 %v1406, %v1415
        %v1418 = vmul.f32 %v1408, %v1416
        %1419 = vrot.lane.b32.xlu0 %v897, 56
        %v1420 = vpop.permute.xlu0 %1419
        %v1423 = vsel %vm910, %v1417, 0
        %1425 = vmatprep.subr.mxu0 0.0
        %1426 = vmatpush1.msra.mxu0 0.0
        %1427 = vmatprep.subr.mxu0 0.0
        %1428 = vmatpush1.msra.mxu0 0.0
        %1429 = vmatprep.subr.mxu0 0.0
        %1430 = vmatpush1.msra.mxu0 0.0
        %1431 = vmatprep.subr.mxu0 0.0
        %1432 = vmatpush1.msra.mxu0 0.0
        %1433 = vmatprep.subr.mxu0 0.0
        %1434 = vmatpush1.msra.mxu0 0.0
        %1435 = vmatprep.subr.mxu0 0.0
        %1436 = vmatpush1.msra.mxu0 0.0
        %1437 = vmatprep.subr.mxu0 0.0
        %1438 = vmatpush1.msra.mxu0 0.0
        %1439 = vmatprep.subr.mxu0 0.0
        %1440 = vmatpush1.msra.mxu0 0.0
        %1441 = vmatprep.subr.mxu0 0.0
        %1442 = vmatpush1.msra.mxu0 0.0
        %1443 = vmatprep.subr.mxu0 0.0
        %1444 = vmatpush1.msra.mxu0 0.0
        %1445 = vmatprep.subr.mxu0 0.0
        %1446 = vmatpush1.msra.mxu0 0.0
        %1447 = vmatprep.subr.mxu0 0.0
        %1448 = vmatpush1.msra.mxu0 0.0
        %1449 = vmatprep.subr.mxu0 0.0
        %1450 = vmatpush1.msra.mxu0 0.0
        %1451 = vmatprep.subr.mxu0 0.0
        %1452 = vmatpush1.msra.mxu0 0.0
        %1453 = vmatprep.subr.mxu0 0.0
        %1454 = vmatpush1.msra.mxu0 0.0
        %1455 = vmatprep.subr.mxu0 0.0
        %1456 = vmatpush1.msra.mxu0 %v1420
        %1457 = vmatprep.subr.mxu0 0.0
        %1458 = vmatpush2.msra.mxu0 0.0
        %1459 = vmatprep.subr.mxu0 0.0
        %1460 = vmatpush2.msra.mxu0 0.0
        %1461 = vmatprep.subr.mxu0 0.0
        %1462 = vmatpush2.msra.mxu0 0.0
        %1463 = vmatprep.subr.mxu0 0.0
        %1464 = vmatpush2.msra.mxu0 0.0
        %1465 = vmatprep.subr.mxu0 0.0
        %1466 = vmatpush2.msra.mxu0 0.0
        %1467 = vmatprep.subr.mxu0 0.0
        %1468 = vmatpush2.msra.mxu0 0.0
        %1469 = vmatprep.subr.mxu0 0.0
        %1470 = vmatpush2.msra.mxu0 0.0
        %1471 = vmatprep.subr.mxu0 0.0
        %1472 = vmatpush2.msra.mxu0 0.0
        %1473 = vmatprep.subr.mxu0 0.0
        %1474 = vmatpush2.msra.mxu0 0.0
        %1475 = vmatprep.subr.mxu0 0.0
        %1476 = vmatpush2.msra.mxu0 0.0
        %1477 = vmatprep.subr.mxu0 0.0
        %1478 = vmatpush2.msra.mxu0 0.0
        %1479 = vmatprep.subr.mxu0 0.0
        %1480 = vmatpush2.msra.mxu0 0.0
        %1481 = vmatprep.subr.mxu0 0.0
        %1482 = vmatpush2.msra.mxu0 0.0
        %1483 = vmatprep.subr.mxu0 0.0
        %1484 = vmatpush2.msra.mxu0 0.0
        %1485 = vmatprep.subr.mxu0 0.0
        %1486 = vmatpush2.msra.mxu0 0.0
        %1487 = vmatprep.subr.mxu0 0.0
        %1488 = vmatpush2.msra.mxu0 0.0
        %1489 = vmatprep.mubr.f32.mxu0 0.0
        %1490 = vmatmul.mubr.f32.gmra.mxu0 %v1423
        %v1491 = vpop.f32.mrf.mxu0
        %v1492 = vadd.f32 0.0, %v1491
        %v1493 = vpop.f32.mrf.mxu0
        %1494 = vdwg.mxu0
        %1495 = vrot.lane.b32.xlu0 %v900, 56
        %v1496 = vpop.permute.xlu0 %1495
        %v1499 = vsel %vm910, %v1418, 0
        %1501 = vmatprep.subr.mxu0 0.0
        %1502 = vmatpush1.msra.mxu0 0.0
        %1503 = vmatprep.subr.mxu0 0.0
        %1504 = vmatpush1.msra.mxu0 0.0
        %1505 = vmatprep.subr.mxu0 0.0
        %1506 = vmatpush1.msra.mxu0 0.0
        %1507 = vmatprep.subr.mxu0 0.0
        %1508 = vmatpush1.msra.mxu0 0.0
        %1509 = vmatprep.subr.mxu0 0.0
        %1510 = vmatpush1.msra.mxu0 0.0
        %1511 = vmatprep.subr.mxu0 0.0
        %1512 = vmatpush1.msra.mxu0 0.0
        %1513 = vmatprep.subr.mxu0 0.0
        %1514 = vmatpush1.msra.mxu0 0.0
        %1515 = vmatprep.subr.mxu0 0.0
        %1516 = vmatpush1.msra.mxu0 0.0
        %1517 = vmatprep.subr.mxu0 0.0
        %1518 = vmatpush1.msra.mxu0 0.0
        %1519 = vmatprep.subr.mxu0 0.0
        %1520 = vmatpush1.msra.mxu0 0.0
        %1521 = vmatprep.subr.mxu0 0.0
        %1522 = vmatpush1.msra.mxu0 0.0
        %1523 = vmatprep.subr.mxu0 0.0
        %1524 = vmatpush1.msra.mxu0 0.0
        %1525 = vmatprep.subr.mxu0 0.0
        %1526 = vmatpush1.msra.mxu0 0.0
        %1527 = vmatprep.subr.mxu0 0.0
        %1528 = vmatpush1.msra.mxu0 0.0
        %1529 = vmatprep.subr.mxu0 0.0
        %1530 = vmatpush1.msra.mxu0 0.0
        %1531 = vmatprep.subr.mxu0 0.0
        %1532 = vmatpush1.msra.mxu0 %v1496
        %1533 = vmatprep.subr.mxu0 0.0
        %1534 = vmatpush2.msra.mxu0 0.0
        %1535 = vmatprep.subr.mxu0 0.0
        %1536 = vmatpush2.msra.mxu0 0.0
        %1537 = vmatprep.subr.mxu0 0.0
        %1538 = vmatpush2.msra.mxu0 0.0
        %1539 = vmatprep.subr.mxu0 0.0
        %1540 = vmatpush2.msra.mxu0 0.0
        %1541 = vmatprep.subr.mxu0 0.0
        %1542 = vmatpush2.msra.mxu0 0.0
        %1543 = vmatprep.subr.mxu0 0.0
        %1544 = vmatpush2.msra.mxu0 0.0
        %1545 = vmatprep.subr.mxu0 0.0
        %1546 = vmatpush2.msra.mxu0 0.0
        %1547 = vmatprep.subr.mxu0 0.0
        %1548 = vmatpush2.msra.mxu0 0.0
        %1549 = vmatprep.subr.mxu0 0.0
        %1550 = vmatpush2.msra.mxu0 0.0
        %1551 = vmatprep.subr.mxu0 0.0
        %1552 = vmatpush2.msra.mxu0 0.0
        %1553 = vmatprep.subr.mxu0 0.0
        %1554 = vmatpush2.msra.mxu0 0.0
        %1555 = vmatprep.subr.mxu0 0.0
        %1556 = vmatpush2.msra.mxu0 0.0
        %1557 = vmatprep.subr.mxu0 0.0
        %1558 = vmatpush2.msra.mxu0 0.0
        %1559 = vmatprep.subr.mxu0 0.0
        %1560 = vmatpush2.msra.mxu0 0.0
        %1561 = vmatprep.subr.mxu0 0.0
        %1562 = vmatpush2.msra.mxu0 0.0
        %1563 = vmatprep.subr.mxu0 0.0
        %1564 = vmatpush2.msra.mxu0 0.0
        %1565 = vmatprep.mubr.f32.mxu0 0.0
        %1566 = vmatmul.mubr.f32.gmra.mxu0 %v1499
        %v1567 = vpop.f32.mrf.mxu0
        %v1568 = vadd.f32 0.0, %v1567
        %v1569 = vpop.f32.mrf.mxu0
        %1570 = vdwg.mxu0
        %v1571 = vpack.c.bf16 %v1568, %v1492
        %v1573 = vsel %vm910, %v1571, 0
        %vm1575 = vcmask 1043456
        %v1577 = vsel %vm1575, %v904, 0
        %1579 = vmatprep.subr.bf16.mxu0 0
        %1580 = vmatpush1.bf16.msra.mxu0 0
        %1581 = vmatprep.subr.bf16.mxu0 0
        %1582 = vmatpush1.bf16.msra.mxu0 0
        %1583 = vmatprep.subr.bf16.mxu0 0
        %1584 = vmatpush1.bf16.msra.mxu0 0
        %1585 = vmatprep.subr.bf16.mxu0 0
        %1586 = vmatpush1.bf16.msra.mxu0 0
        %1587 = vmatprep.subr.bf16.mxu0 0
        %1588 = vmatpush1.bf16.msra.mxu0 0
        %1589 = vmatprep.subr.bf16.mxu0 0
        %1590 = vmatpush1.bf16.msra.mxu0 0
        %1591 = vmatprep.subr.bf16.mxu0 0
        %1592 = vmatpush1.bf16.msra.mxu0 0
        %1593 = vmatprep.subr.bf16.mxu0 0
        %1594 = vmatpush1.bf16.msra.mxu0 %v1577
        %1595 = vmatprep.subr.bf16.mxu0 0
        %1596 = vmatpush2.bf16.msra.mxu0 0
        %1597 = vmatprep.subr.bf16.mxu0 0
        %1598 = vmatpush2.bf16.msra.mxu0 0
        %1599 = vmatprep.subr.bf16.mxu0 0
        %1600 = vmatpush2.bf16.msra.mxu0 0
        %1601 = vmatprep.subr.bf16.mxu0 0
        %1602 = vmatpush2.bf16.msra.mxu0 0
        %1603 = vmatprep.subr.bf16.mxu0 0
        %1604 = vmatpush2.bf16.msra.mxu0 0
        %1605 = vmatprep.subr.bf16.mxu0 0
        %1606 = vmatpush2.bf16.msra.mxu0 0
        %1607 = vmatprep.subr.bf16.mxu0 0
        %1608 = vmatpush2.bf16.msra.mxu0 0
        %1609 = vmatprep.subr.bf16.mxu0 0
        %1610 = vmatpush2.bf16.msra.mxu0 0
        %1611 = vmatprep.mubr.bf16.mxu0 0
        %1612 = vmatmul.mubr.bf16.gmra.mxu0 %v1573
        %v1613 = vpop.f32.mrf.mxu0
        %v1614 = vadd.f32 0.0, %v1613
        %v1615 = vpop.f32.mrf.mxu0
        %v1616 = vpop.f32.mrf.mxu0
        %v1617 = vadd.f32 0.0, %v1616
        %v1618 = vpop.f32.mrf.mxu0
        %1619 = vdwg.mxu0
        %v1621 = vsel %vm910, %v1238, 0
        %v1624 = vsel %vm1575, %v903, 0
        %1626 = vmatprep.subr.bf16.mxu0 0
        %1627 = vmatpush1.bf16.msra.mxu0 0
        %1628 = vmatprep.subr.bf16.mxu0 0
        %1629 = vmatpush1.bf16.msra.mxu0 0
        %1630 = vmatprep.subr.bf16.mxu0 0
        %1631 = vmatpush1.bf16.msra.mxu0 0
        %1632 = vmatprep.subr.bf16.mxu0 0
        %1633 = vmatpush1.bf16.msra.mxu0 0
        %1634 = vmatprep.subr.bf16.mxu0 0
        %1635 = vmatpush1.bf16.msra.mxu0 0
        %1636 = vmatprep.subr.bf16.mxu0 0
        %1637 = vmatpush1.bf16.msra.mxu0 0
        %1638 = vmatprep.subr.bf16.mxu0 0
        %1639 = vmatpush1.bf16.msra.mxu0 0
        %1640 = vmatprep.subr.bf16.mxu0 0
        %1641 = vmatpush1.bf16.msra.mxu0 %v1624
        %1642 = vmatprep.subr.bf16.mxu0 0
        %1643 = vmatpush2.bf16.msra.mxu0 0
        %1644 = vmatprep.subr.bf16.mxu0 0
        %1645 = vmatpush2.bf16.msra.mxu0 0
        %1646 = vmatprep.subr.bf16.mxu0 0
        %1647 = vmatpush2.bf16.msra.mxu0 0
        %1648 = vmatprep.subr.bf16.mxu0 0
        %1649 = vmatpush2.bf16.msra.mxu0 0
        %1650 = vmatprep.subr.bf16.mxu0 0
        %1651 = vmatpush2.bf16.msra.mxu0 0
        %1652 = vmatprep.subr.bf16.mxu0 0
        %1653 = vmatpush2.bf16.msra.mxu0 0
        %1654 = vmatprep.subr.bf16.mxu0 0
        %1655 = vmatpush2.bf16.msra.mxu0 0
        %1656 = vmatprep.subr.bf16.mxu0 0
        %1657 = vmatpush2.bf16.msra.mxu0 0
        %1658 = vmatprep.mubr.bf16.mxu0 0
        %1659 = vmatmul.mubr.bf16.gmra.mxu0 %v1621
        %v1660 = vpop.f32.mrf.mxu0
        %v1661 = vadd.f32 %v1614, %v1660
        %v1662 = vpop.f32.mrf.mxu0
        %v1663 = vpop.f32.mrf.mxu0
        %v1664 = vadd.f32 %v1617, %v1663
        %v1665 = vpop.f32.mrf.mxu0
        %1666 = vdwg.mxu0
        %1667 = vrot.lane.b32.xlu0 %v897, 112
        %v1668 = vpop.permute.xlu0 %1667
        %1669 = vrot.lane.b32.xlu0 %v897, 80
        %v1670 = vpop.permute.xlu0 %1669
        %v1671 = vsel %vm910, %v1668, 0
        %v1673 = vsel %vm910, %v1670, 0
        %1675 = vmatprep.subr.mxu0 0.0
        %1676 = vmatpush1.xpose.msra.mxu0 0.0
        %1677 = vmatprep.subr.mxu0 0.0
        %1678 = vmatpush1.xpose.msra.mxu0 0.0
        %1679 = vmatprep.subr.mxu0 0.0
        %1680 = vmatpush1.xpose.msra.mxu0 0.0
        %1681 = vmatprep.subr.mxu0 0.0
        %1682 = vmatpush1.xpose.msra.mxu0 0.0
        %1683 = vmatprep.subr.mxu0 0.0
        %1684 = vmatpush1.xpose.msra.mxu0 0.0
        %1685 = vmatprep.subr.mxu0 0.0
        %1686 = vmatpush1.xpose.msra.mxu0 0.0
        %1687 = vmatprep.subr.mxu0 0.0
        %1688 = vmatpush1.xpose.msra.mxu0 0.0
        %1689 = vmatprep.subr.mxu0 0.0
        %1690 = vmatpush1.xpose.msra.mxu0 0.0
        %1691 = vmatprep.subr.mxu0 0.0
        %1692 = vmatpush1.xpose.msra.mxu0 0.0
        %1693 = vmatprep.subr.mxu0 0.0
        %1694 = vmatpush1.xpose.msra.mxu0 0.0
        %1695 = vmatprep.subr.mxu0 0.0
        %1696 = vmatpush1.xpose.msra.mxu0 0.0
        %1697 = vmatprep.subr.mxu0 0.0
        %1698 = vmatpush1.xpose.msra.mxu0 0.0
        %1699 = vmatprep.subr.mxu0 0.0
        %1700 = vmatpush1.xpose.msra.mxu0 0.0
        %1701 = vmatprep.subr.mxu0 0.0
        %1702 = vmatpush1.xpose.msra.mxu0 0.0
        %1703 = vmatprep.subr.mxu0 0.0
        %1704 = vmatpush1.xpose.msra.mxu0 0.0
        %1705 = vmatprep.subr.mxu0 0.0
        %1706 = vmatpush1.xpose.msra.mxu0 %v1673
        %1707 = vmatprep.subr.mxu0 0.0
        %1708 = vmatpush2.xpose.msra.mxu0 0.0
        %1709 = vmatprep.subr.mxu0 0.0
        %1710 = vmatpush2.xpose.msra.mxu0 0.0
        %1711 = vmatprep.subr.mxu0 0.0
        %1712 = vmatpush2.xpose.msra.mxu0 0.0
        %1713 = vmatprep.subr.mxu0 0.0
        %1714 = vmatpush2.xpose.msra.mxu0 0.0
        %1715 = vmatprep.subr.mxu0 0.0
        %1716 = vmatpush2.xpose.msra.mxu0 0.0
        %1717 = vmatprep.subr.mxu0 0.0
        %1718 = vmatpush2.xpose.msra.mxu0 0.0
        %1719 = vmatprep.subr.mxu0 0.0
        %1720 = vmatpush2.xpose.msra.mxu0 0.0
        %1721 = vmatprep.subr.mxu0 0.0
        %1722 = vmatpush2.xpose.msra.mxu0 0.0
        %1723 = vmatprep.subr.mxu0 0.0
        %1724 = vmatpush2.xpose.msra.mxu0 0.0
        %1725 = vmatprep.subr.mxu0 0.0
        %1726 = vmatpush2.xpose.msra.mxu0 0.0
        %1727 = vmatprep.subr.mxu0 0.0
        %1728 = vmatpush2.xpose.msra.mxu0 0.0
        %1729 = vmatprep.subr.mxu0 0.0
        %1730 = vmatpush2.xpose.msra.mxu0 0.0
        %1731 = vmatprep.subr.mxu0 0.0
        %1732 = vmatpush2.xpose.msra.mxu0 0.0
        %1733 = vmatprep.subr.mxu0 0.0
        %1734 = vmatpush2.xpose.msra.mxu0 0.0
        %1735 = vmatprep.subr.mxu0 0.0
        %1736 = vmatpush2.xpose.msra.mxu0 0.0
        %1737 = vmatprep.subr.mxu0 0.0
        %1738 = vmatpush2.xpose.msra.mxu0 0.0
        %1739 = vmatprep.mubr.f32.mxu0 0.0
        %1740 = vmatmul.mubr.f32.gmra.mxu0 %v1671
        %v1741 = vpop.f32.mrf.mxu0
        %v1742 = vadd.f32 0.0, %v1741
        %v1743 = vpop.f32.mrf.mxu0
        %1744 = vdwg.mxu0
        %1745 = vrot.lane.b32.xlu0 %v900, 112
        %v1746 = vpop.permute.xlu0 %1745
        %1747 = vrot.lane.b32.xlu0 %v900, 80
        %v1748 = vpop.permute.xlu0 %1747
        %v1749 = vsel %vm910, %v1746, 0
        %v1751 = vsel %vm910, %v1748, 0
        %1753 = vmatprep.subr.mxu0 0.0
        %1754 = vmatpush1.xpose.msra.mxu0 0.0
        %1755 = vmatprep.subr.mxu0 0.0
        %1756 = vmatpush1.xpose.msra.mxu0 0.0
        %1757 = vmatprep.subr.mxu0 0.0
        %1758 = vmatpush1.xpose.msra.mxu0 0.0
        %1759 = vmatprep.subr.mxu0 0.0
        %1760 = vmatpush1.xpose.msra.mxu0 0.0
        %1761 = vmatprep.subr.mxu0 0.0
        %1762 = vmatpush1.xpose.msra.mxu0 0.0
        %1763 = vmatprep.subr.mxu0 0.0
        %1764 = vmatpush1.xpose.msra.mxu0 0.0
        %1765 = vmatprep.subr.mxu0 0.0
        %1766 = vmatpush1.xpose.msra.mxu0 0.0
        %1767 = vmatprep.subr.mxu0 0.0
        %1768 = vmatpush1.xpose.msra.mxu0 0.0
        %1769 = vmatprep.subr.mxu0 0.0
        %1770 = vmatpush1.xpose.msra.mxu0 0.0
        %1771 = vmatprep.subr.mxu0 0.0
        %1772 = vmatpush1.xpose.msra.mxu0 0.0
        %1773 = vmatprep.subr.mxu0 0.0
        %1774 = vmatpush1.xpose.msra.mxu0 0.0
        %1775 = vmatprep.subr.mxu0 0.0
        %1776 = vmatpush1.xpose.msra.mxu0 0.0
        %1777 = vmatprep.subr.mxu0 0.0
        %1778 = vmatpush1.xpose.msra.mxu0 0.0
        %1779 = vmatprep.subr.mxu0 0.0
        %1780 = vmatpush1.xpose.msra.mxu0 0.0
        %1781 = vmatprep.subr.mxu0 0.0
        %1782 = vmatpush1.xpose.msra.mxu0 0.0
        %1783 = vmatprep.subr.mxu0 0.0
        %1784 = vmatpush1.xpose.msra.mxu0 %v1751
        %1785 = vmatprep.subr.mxu0 0.0
        %1786 = vmatpush2.xpose.msra.mxu0 0.0
        %1787 = vmatprep.subr.mxu0 0.0
        %1788 = vmatpush2.xpose.msra.mxu0 0.0
        %1789 = vmatprep.subr.mxu0 0.0
        %1790 = vmatpush2.xpose.msra.mxu0 0.0
        %1791 = vmatprep.subr.mxu0 0.0
        %1792 = vmatpush2.xpose.msra.mxu0 0.0
        %1793 = vmatprep.subr.mxu0 0.0
        %1794 = vmatpush2.xpose.msra.mxu0 0.0
        %1795 = vmatprep.subr.mxu0 0.0
        %1796 = vmatpush2.xpose.msra.mxu0 0.0
        %1797 = vmatprep.subr.mxu0 0.0
        %1798 = vmatpush2.xpose.msra.mxu0 0.0
        %1799 = vmatprep.subr.mxu0 0.0
        %1800 = vmatpush2.xpose.msra.mxu0 0.0
        %1801 = vmatprep.subr.mxu0 0.0
        %1802 = vmatpush2.xpose.msra.mxu0 0.0
        %1803 = vmatprep.subr.mxu0 0.0
        %1804 = vmatpush2.xpose.msra.mxu0 0.0
        %1805 = vmatprep.subr.mxu0 0.0
        %1806 = vmatpush2.xpose.msra.mxu0 0.0
        %1807 = vmatprep.subr.mxu0 0.0
        %1808 = vmatpush2.xpose.msra.mxu0 0.0
        %1809 = vmatprep.subr.mxu0 0.0
        %1810 = vmatpush2.xpose.msra.mxu0 0.0
        %1811 = vmatprep.subr.mxu0 0.0
        %1812 = vmatpush2.xpose.msra.mxu0 0.0
        %1813 = vmatprep.subr.mxu0 0.0
        %1814 = vmatpush2.xpose.msra.mxu0 0.0
        %1815 = vmatprep.subr.mxu0 0.0
        %1816 = vmatpush2.xpose.msra.mxu0 0.0
        %1817 = vmatprep.mubr.f32.mxu0 0.0
        %1818 = vmatmul.mubr.f32.gmra.mxu0 %v1749
        %v1819 = vpop.f32.mrf.mxu0
        %v1820 = vadd.f32 0.0, %v1819
        %v1821 = vpop.f32.mrf.mxu0
        %1822 = vdwg.mxu0
        %v1823 = vmul.f32 %v1742, 0.35355338
        %v1824 = vmul.f32 %v1820, 0.35355338
        %v1825 = vsel %vm910, %v1823, -inf
        %1826 = vmax.xlane.f32.xlu0 %v1825
        %v1827 = vpop.xlane.xlu0 %1826
        %v1828 = vsel %vm910, %v1824, -inf
        %1829 = vmax.xlane.f32.xlu0 %v1828
        %v1830 = vpop.xlane.xlu0 %1829
        %v1831 = vsub.f32 %v1823, %v1827
        %v1832 = vsub.f32 %v1824, %v1830
        %v1833 = vmul.f32 %v1831, 1.442695
        %v1834 = vpow.pop %v1833
        %v1835 = vmul.f32 %v1832, 1.442695
        %v1836 = vpow.pop %v1835
        %v1837 = vsel %vm910, %v1834, 0.0
        %1838 = vadd.xlane.f32.xlu0 %v1837
        %v1839 = vpop.xlane.xlu0 %1838
        %v1840 = vsel %vm910, %v1836, 0.0
        %1841 = vadd.xlane.f32.xlu0 %v1840
        %v1842 = vpop.xlane.xlu0 %1841
        %v1843 = vrcp.pop %v1839
        %v1844 = vrcp.pop %v1842
        %v1845 = vmul.f32 %v1834, %v1843
        %v1846 = vmul.f32 %v1836, %v1844
        %1847 = vrot.lane.b32.xlu0 %v897, 48
        %v1848 = vpop.permute.xlu0 %1847
        %v1851 = vsel %vm910, %v1845, 0
        %1853 = vmatprep.subr.mxu0 0.0
        %1854 = vmatpush1.msra.mxu0 0.0
        %1855 = vmatprep.subr.mxu0 0.0
        %1856 = vmatpush1.msra.mxu0 0.0
        %1857 = vmatprep.subr.mxu0 0.0
        %1858 = vmatpush1.msra.mxu0 0.0
        %1859 = vmatprep.subr.mxu0 0.0
        %1860 = vmatpush1.msra.mxu0 0.0
        %1861 = vmatprep.subr.mxu0 0.0
        %1862 = vmatpush1.msra.mxu0 0.0
        %1863 = vmatprep.subr.mxu0 0.0
        %1864 = vmatpush1.msra.mxu0 0.0
        %1865 = vmatprep.subr.mxu0 0.0
        %1866 = vmatpush1.msra.mxu0 0.0
        %1867 = vmatprep.subr.mxu0 0.0
        %1868 = vmatpush1.msra.mxu0 0.0
        %1869 = vmatprep.subr.mxu0 0.0
        %1870 = vmatpush1.msra.mxu0 0.0
        %1871 = vmatprep.subr.mxu0 0.0
        %1872 = vmatpush1.msra.mxu0 0.0
        %1873 = vmatprep.subr.mxu0 0.0
        %1874 = vmatpush1.msra.mxu0 0.0
        %1875 = vmatprep.subr.mxu0 0.0
        %1876 = vmatpush1.msra.mxu0 0.0
        %1877 = vmatprep.subr.mxu0 0.0
        %1878 = vmatpush1.msra.mxu0 0.0
        %1879 = vmatprep.subr.mxu0 0.0
        %1880 = vmatpush1.msra.mxu0 0.0
        %1881 = vmatprep.subr.mxu0 0.0
        %1882 = vmatpush1.msra.mxu0 0.0
        %1883 = vmatprep.subr.mxu0 0.0
        %1884 = vmatpush1.msra.mxu0 %v1848
        %1885 = vmatprep.subr.mxu0 0.0
        %1886 = vmatpush2.msra.mxu0 0.0
        %1887 = vmatprep.subr.mxu0 0.0
        %1888 = vmatpush2.msra.mxu0 0.0
        %1889 = vmatprep.subr.mxu0 0.0
        %1890 = vmatpush2.msra.mxu0 0.0
        %1891 = vmatprep.subr.mxu0 0.0
        %1892 = vmatpush2.msra.mxu0 0.0
        %1893 = vmatprep.subr.mxu0 0.0
        %1894 = vmatpush2.msra.mxu0 0.0
        %1895 = vmatprep.subr.mxu0 0.0
        %1896 = vmatpush2.msra.mxu0 0.0
        %1897 = vmatprep.subr.mxu0 0.0
        %1898 = vmatpush2.msra.mxu0 0.0
        %1899 = vmatprep.subr.mxu0 0.0
        %1900 = vmatpush2.msra.mxu0 0.0
        %1901 = vmatprep.subr.mxu0 0.0
        %1902 = vmatpush2.msra.mxu0 0.0
        %1903 = vmatprep.subr.mxu0 0.0
        %1904 = vmatpush2.msra.mxu0 0.0
        %1905 = vmatprep.subr.mxu0 0.0
        %1906 = vmatpush2.msra.mxu0 0.0
        %1907 = vmatprep.subr.mxu0 0.0
        %1908 = vmatpush2.msra.mxu0 0.0
        %1909 = vmatprep.subr.mxu0 0.0
        %1910 = vmatpush2.msra.mxu0 0.0
        %1911 = vmatprep.subr.mxu0 0.0
        %1912 = vmatpush2.msra.mxu0 0.0
        %1913 = vmatprep.subr.mxu0 0.0
        %1914 = vmatpush2.msra.mxu0 0.0
        %1915 = vmatprep.subr.mxu0 0.0
        %1916 = vmatpush2.msra.mxu0 0.0
        %1917 = vmatprep.mubr.f32.mxu0 0.0
        %1918 = vmatmul.mubr.f32.gmra.mxu0 %v1851
        %v1919 = vpop.f32.mrf.mxu0
        %v1920 = vadd.f32 0.0, %v1919
        %v1921 = vpop.f32.mrf.mxu0
        %1922 = vdwg.mxu0
        %1923 = vrot.lane.b32.xlu0 %v900, 48
        %v1924 = vpop.permute.xlu0 %1923
        %v1927 = vsel %vm910, %v1846, 0
        %1929 = vmatprep.subr.mxu0 0.0
        %1930 = vmatpush1.msra.mxu0 0.0
        %1931 = vmatprep.subr.mxu0 0.0
        %1932 = vmatpush1.msra.mxu0 0.0
        %1933 = vmatprep.subr.mxu0 0.0
        %1934 = vmatpush1.msra.mxu0 0.0
        %1935 = vmatprep.subr.mxu0 0.0
        %1936 = vmatpush1.msra.mxu0 0.0
        %1937 = vmatprep.subr.mxu0 0.0
        %1938 = vmatpush1.msra.mxu0 0.0
        %1939 = vmatprep.subr.mxu0 0.0
        %1940 = vmatpush1.msra.mxu0 0.0
        %1941 = vmatprep.subr.mxu0 0.0
        %1942 = vmatpush1.msra.mxu0 0.0
        %1943 = vmatprep.subr.mxu0 0.0
        %1944 = vmatpush1.msra.mxu0 0.0
        %1945 = vmatprep.subr.mxu0 0.0
        %1946 = vmatpush1.msra.mxu0 0.0
        %1947 = vmatprep.subr.mxu0 0.0
        %1948 = vmatpush1.msra.mxu0 0.0
        %1949 = vmatprep.subr.mxu0 0.0
        %1950 = vmatpush1.msra.mxu0 0.0
        %1951 = vmatprep.subr.mxu0 0.0
        %1952 = vmatpush1.msra.mxu0 0.0
        %1953 = vmatprep.subr.mxu0 0.0
        %1954 = vmatpush1.msra.mxu0 0.0
        %1955 = vmatprep.subr.mxu0 0.0
        %1956 = vmatpush1.msra.mxu0 0.0
        %1957 = vmatprep.subr.mxu0 0.0
        %1958 = vmatpush1.msra.mxu0 0.0
        %1959 = vmatprep.subr.mxu0 0.0
        %1960 = vmatpush1.msra.mxu0 %v1924
        %1961 = vmatprep.subr.mxu0 0.0
        %1962 = vmatpush2.msra.mxu0 0.0
        %1963 = vmatprep.subr.mxu0 0.0
        %1964 = vmatpush2.msra.mxu0 0.0
        %1965 = vmatprep.subr.mxu0 0.0
        %1966 = vmatpush2.msra.mxu0 0.0
        %1967 = vmatprep.subr.mxu0 0.0
        %1968 = vmatpush2.msra.mxu0 0.0
        %1969 = vmatprep.subr.mxu0 0.0
        %1970 = vmatpush2.msra.mxu0 0.0
        %1971 = vmatprep.subr.mxu0 0.0
        %1972 = vmatpush2.msra.mxu0 0.0
        %1973 = vmatprep.subr.mxu0 0.0
        %1974 = vmatpush2.msra.mxu0 0.0
        %1975 = vmatprep.subr.mxu0 0.0
        %1976 = vmatpush2.msra.mxu0 0.0
        %1977 = vmatprep.subr.mxu0 0.0
        %1978 = vmatpush2.msra.mxu0 0.0
        %1979 = vmatprep.subr.mxu0 0.0
        %1980 = vmatpush2.msra.mxu0 0.0
        %1981 = vmatprep.subr.mxu0 0.0
        %1982 = vmatpush2.msra.mxu0 0.0
        %1983 = vmatprep.subr.mxu0 0.0
        %1984 = vmatpush2.msra.mxu0 0.0
        %1985 = vmatprep.subr.mxu0 0.0
        %1986 = vmatpush2.msra.mxu0 0.0
        %1987 = vmatprep.subr.mxu0 0.0
        %1988 = vmatpush2.msra.mxu0 0.0
        %1989 = vmatprep.subr.mxu0 0.0
        %1990 = vmatpush2.msra.mxu0 0.0
        %1991 = vmatprep.subr.mxu0 0.0
        %1992 = vmatpush2.msra.mxu0 0.0
        %1993 = vmatprep.mubr.f32.mxu0 0.0
        %1994 = vmatmul.mubr.f32.gmra.mxu0 %v1927
        %v1995 = vpop.f32.mrf.mxu0
        %v1996 = vadd.f32 0.0, %v1995
        %v1997 = vpop.f32.mrf.mxu0
        %1998 = vdwg.mxu0
        %v1999 = vpack.c.bf16 %v1996, %v1920
        %v2001 = vsel %vm910, %v1999, 0
        %v2004 = vsel %vm1575, %v905, 0
        %2006 = vmatprep.subr.bf16.mxu0 0
        %2007 = vmatpush1.bf16.msra.mxu0 0
        %2008 = vmatprep.subr.bf16.mxu0 0
        %2009 = vmatpush1.bf16.msra.mxu0 0
        %2010 = vmatprep.subr.bf16.mxu0 0
        %2011 = vmatpush1.bf16.msra.mxu0 0
        %2012 = vmatprep.subr.bf16.mxu0 0
        %2013 = vmatpush1.bf16.msra.mxu0 0
        %2014 = vmatprep.subr.bf16.mxu0 0
        %2015 = vmatpush1.bf16.msra.mxu0 0
        %2016 = vmatprep.subr.bf16.mxu0 0
        %2017 = vmatpush1.bf16.msra.mxu0 0
        %2018 = vmatprep.subr.bf16.mxu0 0
        %2019 = vmatpush1.bf16.msra.mxu0 0
        %2020 = vmatprep.subr.bf16.mxu0 0
        %2021 = vmatpush1.bf16.msra.mxu0 %v2004
        %2022 = vmatprep.subr.bf16.mxu0 0
        %2023 = vmatpush2.bf16.msra.mxu0 0
        %2024 = vmatprep.subr.bf16.mxu0 0
        %2025 = vmatpush2.bf16.msra.mxu0 0
        %2026 = vmatprep.subr.bf16.mxu0 0
        %2027 = vmatpush2.bf16.msra.mxu0 0
        %2028 = vmatprep.subr.bf16.mxu0 0
        %2029 = vmatpush2.bf16.msra.mxu0 0
        %2030 = vmatprep.subr.bf16.mxu0 0
        %2031 = vmatpush2.bf16.msra.mxu0 0
        %2032 = vmatprep.subr.bf16.mxu0 0
        %2033 = vmatpush2.bf16.msra.mxu0 0
        %2034 = vmatprep.subr.bf16.mxu0 0
        %2035 = vmatpush2.bf16.msra.mxu0 0
        %2036 = vmatprep.subr.bf16.mxu0 0
        %2037 = vmatpush2.bf16.msra.mxu0 0
        %2038 = vmatprep.mubr.bf16.mxu0 0
        %2039 = vmatmul.mubr.bf16.gmra.mxu0 %v2001
        %v2040 = vpop.f32.mrf.mxu0
        %v2041 = vadd.f32 0.0, %v2040
        %v2042 = vpop.f32.mrf.mxu0
        %v2043 = vpop.f32.mrf.mxu0
        %v2044 = vadd.f32 0.0, %v2043
        %v2045 = vpop.f32.mrf.mxu0
        %2046 = vdwg.mxu0
        %v2047 = vadd.f32 %v1661, %v2041
        %v2048 = vadd.f32 %v1664, %v2044
        %2049 = vrot.lane.b32.xlu0 %v897, 104
        %v2050 = vpop.permute.xlu0 %2049
        %2051 = vrot.lane.b32.xlu0 %v897, 72
        %v2052 = vpop.permute.xlu0 %2051
        %v2053 = vsel %vm910, %v2050, 0
        %v2055 = vsel %vm910, %v2052, 0
        %2057 = vmatprep.subr.mxu0 0.0
        %2058 = vmatpush1.xpose.msra.mxu0 0.0
        %2059 = vmatprep.subr.mxu0 0.0
        %2060 = vmatpush1.xpose.msra.mxu0 0.0
        %2061 = vmatprep.subr.mxu0 0.0
        %2062 = vmatpush1.xpose.msra.mxu0 0.0
        %2063 = vmatprep.subr.mxu0 0.0
        %2064 = vmatpush1.xpose.msra.mxu0 0.0
        %2065 = vmatprep.subr.mxu0 0.0
        %2066 = vmatpush1.xpose.msra.mxu0 0.0
        %2067 = vmatprep.subr.mxu0 0.0
        %2068 = vmatpush1.xpose.msra.mxu0 0.0
        %2069 = vmatprep.subr.mxu0 0.0
        %2070 = vmatpush1.xpose.msra.mxu0 0.0
        %2071 = vmatprep.subr.mxu0 0.0
        %2072 = vmatpush1.xpose.msra.mxu0 0.0
        %2073 = vmatprep.subr.mxu0 0.0
        %2074 = vmatpush1.xpose.msra.mxu0 0.0
        %2075 = vmatprep.subr.mxu0 0.0
        %2076 = vmatpush1.xpose.msra.mxu0 0.0
        %2077 = vmatprep.subr.mxu0 0.0
        %2078 = vmatpush1.xpose.msra.mxu0 0.0
        %2079 = vmatprep.subr.mxu0 0.0
        %2080 = vmatpush1.xpose.msra.mxu0 0.0
        %2081 = vmatprep.subr.mxu0 0.0
        %2082 = vmatpush1.xpose.msra.mxu0 0.0
        %2083 = vmatprep.subr.mxu0 0.0
        %2084 = vmatpush1.xpose.msra.mxu0 0.0
        %2085 = vmatprep.subr.mxu0 0.0
        %2086 = vmatpush1.xpose.msra.mxu0 0.0
        %2087 = vmatprep.subr.mxu0 0.0
        %2088 = vmatpush1.xpose.msra.mxu0 %v2055
        %2089 = vmatprep.subr.mxu0 0.0
        %2090 = vmatpush2.xpose.msra.mxu0 0.0
        %2091 = vmatprep.subr.mxu0 0.0
        %2092 = vmatpush2.xpose.msra.mxu0 0.0
        %2093 = vmatprep.subr.mxu0 0.0
        %2094 = vmatpush2.xpose.msra.mxu0 0.0
        %2095 = vmatprep.subr.mxu0 0.0
        %2096 = vmatpush2.xpose.msra.mxu0 0.0
        %2097 = vmatprep.subr.mxu0 0.0
        %2098 = vmatpush2.xpose.msra.mxu0 0.0
        %2099 = vmatprep.subr.mxu0 0.0
        %2100 = vmatpush2.xpose.msra.mxu0 0.0
        %2101 = vmatprep.subr.mxu0 0.0
        %2102 = vmatpush2.xpose.msra.mxu0 0.0
        %2103 = vmatprep.subr.mxu0 0.0
        %2104 = vmatpush2.xpose.msra.mxu0 0.0
        %2105 = vmatprep.subr.mxu0 0.0
        %2106 = vmatpush2.xpose.msra.mxu0 0.0
        %2107 = vmatprep.subr.mxu0 0.0
        %2108 = vmatpush2.xpose.msra.mxu0 0.0
        %2109 = vmatprep.subr.mxu0 0.0
        %2110 = vmatpush2.xpose.msra.mxu0 0.0
        %2111 = vmatprep.subr.mxu0 0.0
        %2112 = vmatpush2.xpose.msra.mxu0 0.0
        %2113 = vmatprep.subr.mxu0 0.0
        %2114 = vmatpush2.xpose.msra.mxu0 0.0
        %2115 = vmatprep.subr.mxu0 0.0
        %2116 = vmatpush2.xpose.msra.mxu0 0.0
        %2117 = vmatprep.subr.mxu0 0.0
        %2118 = vmatpush2.xpose.msra.mxu0 0.0
        %2119 = vmatprep.subr.mxu0 0.0
        %2120 = vmatpush2.xpose.msra.mxu0 0.0
        %2121 = vmatprep.mubr.f32.mxu0 0.0
        %2122 = vmatmul.mubr.f32.gmra.mxu0 %v2053
        %v2123 = vpop.f32.mrf.mxu0
        %v2124 = vadd.f32 0.0, %v2123
        %v2125 = vpop.f32.mrf.mxu0
        %2126 = vdwg.mxu0
        %2127 = vrot.lane.b32.xlu0 %v900, 104
        %v2128 = vpop.permute.xlu0 %2127
        %2129 = vrot.lane.b32.xlu0 %v900, 72
        %v2130 = vpop.permute.xlu0 %2129
        %v2131 = vsel %vm910, %v2128, 0
        %v2133 = vsel %vm910, %v2130, 0
        %2135 = vmatprep.subr.mxu0 0.0
        %2136 = vmatpush1.xpose.msra.mxu0 0.0
        %2137 = vmatprep.subr.mxu0 0.0
        %2138 = vmatpush1.xpose.msra.mxu0 0.0
        %2139 = vmatprep.subr.mxu0 0.0
        %2140 = vmatpush1.xpose.msra.mxu0 0.0
        %2141 = vmatprep.subr.mxu0 0.0
        %2142 = vmatpush1.xpose.msra.mxu0 0.0
        %2143 = vmatprep.subr.mxu0 0.0
        %2144 = vmatpush1.xpose.msra.mxu0 0.0
        %2145 = vmatprep.subr.mxu0 0.0
        %2146 = vmatpush1.xpose.msra.mxu0 0.0
        %2147 = vmatprep.subr.mxu0 0.0
        %2148 = vmatpush1.xpose.msra.mxu0 0.0
        %2149 = vmatprep.subr.mxu0 0.0
        %2150 = vmatpush1.xpose.msra.mxu0 0.0
        %2151 = vmatprep.subr.mxu0 0.0
        %2152 = vmatpush1.xpose.msra.mxu0 0.0
        %2153 = vmatprep.subr.mxu0 0.0
        %2154 = vmatpush1.xpose.msra.mxu0 0.0
        %2155 = vmatprep.subr.mxu0 0.0
        %2156 = vmatpush1.xpose.msra.mxu0 0.0
        %2157 = vmatprep.subr.mxu0 0.0
        %2158 = vmatpush1.xpose.msra.mxu0 0.0
        %2159 = vmatprep.subr.mxu0 0.0
        %2160 = vmatpush1.xpose.msra.mxu0 0.0
        %2161 = vmatprep.subr.mxu0 0.0
        %2162 = vmatpush1.xpose.msra.mxu0 0.0
        %2163 = vmatprep.subr.mxu0 0.0
        %2164 = vmatpush1.xpose.msra.mxu0 0.0
        %2165 = vmatprep.subr.mxu0 0.0
        %2166 = vmatpush1.xpose.msra.mxu0 %v2133
        %2167 = vmatprep.subr.mxu0 0.0
        %2168 = vmatpush2.xpose.msra.mxu0 0.0
        %2169 = vmatprep.subr.mxu0 0.0
        %2170 = vmatpush2.xpose.msra.mxu0 0.0
        %2171 = vmatprep.subr.mxu0 0.0
        %2172 = vmatpush2.xpose.msra.mxu0 0.0
        %2173 = vmatprep.subr.mxu0 0.0
        %2174 = vmatpush2.xpose.msra.mxu0 0.0
        %2175 = vmatprep.subr.mxu0 0.0
        %2176 = vmatpush2.xpose.msra.mxu0 0.0
        %2177 = vmatprep.subr.mxu0 0.0
        %2178 = vmatpush2.xpose.msra.mxu0 0.0
        %2179 = vmatprep.subr.mxu0 0.0
        %2180 = vmatpush2.xpose.msra.mxu0 0.0
        %2181 = vmatprep.subr.mxu0 0.0
        %2182 = vmatpush2.xpose.msra.mxu0 0.0
        %2183 = vmatprep.subr.mxu0 0.0
        %2184 = vmatpush2.xpose.msra.mxu0 0.0
        %2185 = vmatprep.subr.mxu0 0.0
        %2186 = vmatpush2.xpose.msra.mxu0 0.0
        %2187 = vmatprep.subr.mxu0 0.0
        %2188 = vmatpush2.xpose.msra.mxu0 0.0
        %2189 = vmatprep.subr.mxu0 0.0
        %2190 = vmatpush2.xpose.msra.mxu0 0.0
        %2191 = vmatprep.subr.mxu0 0.0
        %2192 = vmatpush2.xpose.msra.mxu0 0.0
        %2193 = vmatprep.subr.mxu0 0.0
        %2194 = vmatpush2.xpose.msra.mxu0 0.0
        %2195 = vmatprep.subr.mxu0 0.0
        %2196 = vmatpush2.xpose.msra.mxu0 0.0
        %2197 = vmatprep.subr.mxu0 0.0
        %2198 = vmatpush2.xpose.msra.mxu0 0.0
        %2199 = vmatprep.mubr.f32.mxu0 0.0
        %2200 = vmatmul.mubr.f32.gmra.mxu0 %v2131
        %v2201 = vpop.f32.mrf.mxu0
        %v2202 = vadd.f32 0.0, %v2201
        %v2203 = vpop.f32.mrf.mxu0
        %2204 = vdwg.mxu0
        %v2205 = vmul.f32 %v2124, 0.35355338
        %v2206 = vmul.f32 %v2202, 0.35355338
        %v2207 = vsel %vm910, %v2205, -inf
        %2208 = vmax.xlane.f32.xlu0 %v2207
        %v2209 = vpop.xlane.xlu0 %2208
        %v2210 = vsel %vm910, %v2206, -inf
        %2211 = vmax.xlane.f32.xlu0 %v2210
        %v2212 = vpop.xlane.xlu0 %2211
        %v2213 = vsub.f32 %v2205, %v2209
        %v2214 = vsub.f32 %v2206, %v2212
        %v2215 = vmul.f32 %v2213, 1.442695
        %v2216 = vpow.pop %v2215
        %v2217 = vmul.f32 %v2214, 1.442695
        %v2218 = vpow.pop %v2217
        %v2219 = vsel %vm910, %v2216, 0.0
        %2220 = vadd.xlane.f32.xlu0 %v2219
        %v2221 = vpop.xlane.xlu0 %2220
        %v2222 = vsel %vm910, %v2218, 0.0
        %2223 = vadd.xlane.f32.xlu0 %v2222
        %v2224 = vpop.xlane.xlu0 %2223
        %v2225 = vrcp.pop %v2221
        %v2226 = vrcp.pop %v2224
        %v2227 = vmul.f32 %v2216, %v2225
        %v2228 = vmul.f32 %v2218, %v2226
        %2229 = vrot.lane.b32.xlu0 %v897, 40
        %v2230 = vpop.permute.xlu0 %2229
        %v2233 = vsel %vm910, %v2227, 0
        %2235 = vmatprep.subr.mxu0 0.0
        %2236 = vmatpush1.msra.mxu0 0.0
        %2237 = vmatprep.subr.mxu0 0.0
        %2238 = vmatpush1.msra.mxu0 0.0
        %2239 = vmatprep.subr.mxu0 0.0
        %2240 = vmatpush1.msra.mxu0 0.0
        %2241 = vmatprep.subr.mxu0 0.0
        %2242 = vmatpush1.msra.mxu0 0.0
        %2243 = vmatprep.subr.mxu0 0.0
        %2244 = vmatpush1.msra.mxu0 0.0
        %2245 = vmatprep.subr.mxu0 0.0
        %2246 = vmatpush1.msra.mxu0 0.0
        %2247 = vmatprep.subr.mxu0 0.0
        %2248 = vmatpush1.msra.mxu0 0.0
        %2249 = vmatprep.subr.mxu0 0.0
        %2250 = vmatpush1.msra.mxu0 0.0
        %2251 = vmatprep.subr.mxu0 0.0
        %2252 = vmatpush1.msra.mxu0 0.0
        %2253 = vmatprep.subr.mxu0 0.0
        %2254 = vmatpush1.msra.mxu0 0.0
        %2255 = vmatprep.subr.mxu0 0.0
        %2256 = vmatpush1.msra.mxu0 0.0
        %2257 = vmatprep.subr.mxu0 0.0
        %2258 = vmatpush1.msra.mxu0 0.0
        %2259 = vmatprep.subr.mxu0 0.0
        %2260 = vmatpush1.msra.mxu0 0.0
        %2261 = vmatprep.subr.mxu0 0.0
        %2262 = vmatpush1.msra.mxu0 0.0
        %2263 = vmatprep.subr.mxu0 0.0
        %2264 = vmatpush1.msra.mxu0 0.0
        %2265 = vmatprep.subr.mxu0 0.0
        %2266 = vmatpush1.msra.mxu0 %v2230
        %2267 = vmatprep.subr.mxu0 0.0
        %2268 = vmatpush2.msra.mxu0 0.0
        %2269 = vmatprep.subr.mxu0 0.0
        %2270 = vmatpush2.msra.mxu0 0.0
        %2271 = vmatprep.subr.mxu0 0.0
        %2272 = vmatpush2.msra.mxu0 0.0
        %2273 = vmatprep.subr.mxu0 0.0
        %2274 = vmatpush2.msra.mxu0 0.0
        %2275 = vmatprep.subr.mxu0 0.0
        %2276 = vmatpush2.msra.mxu0 0.0
        %2277 = vmatprep.subr.mxu0 0.0
        %2278 = vmatpush2.msra.mxu0 0.0
        %2279 = vmatprep.subr.mxu0 0.0
        %2280 = vmatpush2.msra.mxu0 0.0
        %2281 = vmatprep.subr.mxu0 0.0
        %2282 = vmatpush2.msra.mxu0 0.0
        %2283 = vmatprep.subr.mxu0 0.0
        %2284 = vmatpush2.msra.mxu0 0.0
        %2285 = vmatprep.subr.mxu0 0.0
        %2286 = vmatpush2.msra.mxu0 0.0
        %2287 = vmatprep.subr.mxu0 0.0
        %2288 = vmatpush2.msra.mxu0 0.0
        %2289 = vmatprep.subr.mxu0 0.0
        %2290 = vmatpush2.msra.mxu0 0.0
        %2291 = vmatprep.subr.mxu0 0.0
        %2292 = vmatpush2.msra.mxu0 0.0
        %2293 = vmatprep.subr.mxu0 0.0
        %2294 = vmatpush2.msra.mxu0 0.0
        %2295 = vmatprep.subr.mxu0 0.0
        %2296 = vmatpush2.msra.mxu0 0.0
        %2297 = vmatprep.subr.mxu0 0.0
        %2298 = vmatpush2.msra.mxu0 0.0
        %2299 = vmatprep.mubr.f32.mxu0 0.0
        %2300 = vmatmul.mubr.f32.gmra.mxu0 %v2233
        %v2301 = vpop.f32.mrf.mxu0
        %v2302 = vadd.f32 0.0, %v2301
        %v2303 = vpop.f32.mrf.mxu0
        %2304 = vdwg.mxu0
        %2305 = vrot.lane.b32.xlu0 %v900, 40
        %v2306 = vpop.permute.xlu0 %2305
        %v2309 = vsel %vm910, %v2228, 0
        %2311 = vmatprep.subr.mxu0 0.0
        %2312 = vmatpush1.msra.mxu0 0.0
        %2313 = vmatprep.subr.mxu0 0.0
        %2314 = vmatpush1.msra.mxu0 0.0
        %2315 = vmatprep.subr.mxu0 0.0
        %2316 = vmatpush1.msra.mxu0 0.0
        %2317 = vmatprep.subr.mxu0 0.0
        %2318 = vmatpush1.msra.mxu0 0.0
        %2319 = vmatprep.subr.mxu0 0.0
        %2320 = vmatpush1.msra.mxu0 0.0
        %2321 = vmatprep.subr.mxu0 0.0
        %2322 = vmatpush1.msra.mxu0 0.0
        %2323 = vmatprep.subr.mxu0 0.0
        %2324 = vmatpush1.msra.mxu0 0.0
        %2325 = vmatprep.subr.mxu0 0.0
        %2326 = vmatpush1.msra.mxu0 0.0
        %2327 = vmatprep.subr.mxu0 0.0
        %2328 = vmatpush1.msra.mxu0 0.0
        %2329 = vmatprep.subr.mxu0 0.0
        %2330 = vmatpush1.msra.mxu0 0.0
        %2331 = vmatprep.subr.mxu0 0.0
        %2332 = vmatpush1.msra.mxu0 0.0
        %2333 = vmatprep.subr.mxu0 0.0
        %2334 = vmatpush1.msra.mxu0 0.0
        %2335 = vmatprep.subr.mxu0 0.0
        %2336 = vmatpush1.msra.mxu0 0.0
        %2337 = vmatprep.subr.mxu0 0.0
        %2338 = vmatpush1.msra.mxu0 0.0
        %2339 = vmatprep.subr.mxu0 0.0
        %2340 = vmatpush1.msra.mxu0 0.0
        %2341 = vmatprep.subr.mxu0 0.0
        %2342 = vmatpush1.msra.mxu0 %v2306
        %2343 = vmatprep.subr.mxu0 0.0
        %2344 = vmatpush2.msra.mxu0 0.0
        %2345 = vmatprep.subr.mxu0 0.0
        %2346 = vmatpush2.msra.mxu0 0.0
        %2347 = vmatprep.subr.mxu0 0.0
        %2348 = vmatpush2.msra.mxu0 0.0
        %2349 = vmatprep.subr.mxu0 0.0
        %2350 = vmatpush2.msra.mxu0 0.0
        %2351 = vmatprep.subr.mxu0 0.0
        %2352 = vmatpush2.msra.mxu0 0.0
        %2353 = vmatprep.subr.mxu0 0.0
        %2354 = vmatpush2.msra.mxu0 0.0
        %2355 = vmatprep.subr.mxu0 0.0
        %2356 = vmatpush2.msra.mxu0 0.0
        %2357 = vmatprep.subr.mxu0 0.0
        %2358 = vmatpush2.msra.mxu0 0.0
        %2359 = vmatprep.subr.mxu0 0.0
        %2360 = vmatpush2.msra.mxu0 0.0
        %2361 = vmatprep.subr.mxu0 0.0
        %2362 = vmatpush2.msra.mxu0 0.0
        %2363 = vmatprep.subr.mxu0 0.0
        %2364 = vmatpush2.msra.mxu0 0.0
        %2365 = vmatprep.subr.mxu0 0.0
        %2366 = vmatpush2.msra.mxu0 0.0
        %2367 = vmatprep.subr.mxu0 0.0
        %2368 = vmatpush2.msra.mxu0 0.0
        %2369 = vmatprep.subr.mxu0 0.0
        %2370 = vmatpush2.msra.mxu0 0.0
        %2371 = vmatprep.subr.mxu0 0.0
        %2372 = vmatpush2.msra.mxu0 0.0
        %2373 = vmatprep.subr.mxu0 0.0
        %2374 = vmatpush2.msra.mxu0 0.0
        %2375 = vmatprep.mubr.f32.mxu0 0.0
        %2376 = vmatmul.mubr.f32.gmra.mxu0 %v2309
        %v2377 = vpop.f32.mrf.mxu0
        %v2378 = vadd.f32 0.0, %v2377
        %v2379 = vpop.f32.mrf.mxu0
        %2380 = vdwg.mxu0
        %v2381 = vpack.c.bf16 %v2378, %v2302
        %v2383 = vsel %vm910, %v2381, 0
        %v2386 = vsel %vm1575, %v906, 0
        %2388 = vmatprep.subr.bf16.mxu0 0
        %2389 = vmatpush1.bf16.msra.mxu0 0
        %2390 = vmatprep.subr.bf16.mxu0 0
        %2391 = vmatpush1.bf16.msra.mxu0 0
        %2392 = vmatprep.subr.bf16.mxu0 0
        %2393 = vmatpush1.bf16.msra.mxu0 0
        %2394 = vmatprep.subr.bf16.mxu0 0
        %2395 = vmatpush1.bf16.msra.mxu0 0
        %2396 = vmatprep.subr.bf16.mxu0 0
        %2397 = vmatpush1.bf16.msra.mxu0 0
        %2398 = vmatprep.subr.bf16.mxu0 0
        %2399 = vmatpush1.bf16.msra.mxu0 0
        %2400 = vmatprep.subr.bf16.mxu0 0
        %2401 = vmatpush1.bf16.msra.mxu0 0
        %2402 = vmatprep.subr.bf16.mxu0 0
        %2403 = vmatpush1.bf16.msra.mxu0 %v2386
        %2404 = vmatprep.subr.bf16.mxu0 0
        %2405 = vmatpush2.bf16.msra.mxu0 0
        %2406 = vmatprep.subr.bf16.mxu0 0
        %2407 = vmatpush2.bf16.msra.mxu0 0
        %2408 = vmatprep.subr.bf16.mxu0 0
        %2409 = vmatpush2.bf16.msra.mxu0 0
        %2410 = vmatprep.subr.bf16.mxu0 0
        %2411 = vmatpush2.bf16.msra.mxu0 0
        %2412 = vmatprep.subr.bf16.mxu0 0
        %2413 = vmatpush2.bf16.msra.mxu0 0
        %2414 = vmatprep.subr.bf16.mxu0 0
        %2415 = vmatpush2.bf16.msra.mxu0 0
        %2416 = vmatprep.subr.bf16.mxu0 0
        %2417 = vmatpush2.bf16.msra.mxu0 0
        %2418 = vmatprep.subr.bf16.mxu0 0
        %2419 = vmatpush2.bf16.msra.mxu0 0
        %2420 = vmatprep.mubr.bf16.mxu0 0
        %2421 = vmatmul.mubr.bf16.gmra.mxu0 %v2383
        %v2422 = vpop.f32.mrf.mxu0
        %v2423 = vadd.f32 0.0, %v2422
        %v2424 = vpop.f32.mrf.mxu0
        %v2425 = vpop.f32.mrf.mxu0
        %v2426 = vadd.f32 0.0, %v2425
        %v2427 = vpop.f32.mrf.mxu0
        %2428 = vdwg.mxu0
        %v2429 = vadd.f32 %v2047, %v2423
        %v2430 = vadd.f32 %v2048, %v2426
        %v2431 = vld [vmem:[%s719] sm:$0x1]
        %v2433 = vlaneseq
        %v2434 = vshrl.u32 %v2433, 7
        %v2435 = vsub.s32 0, %v2434
        %v2436 = vrot.slane %v2431, %v2435
        %v2438 = vadd.f32 %v2429, %v2436
        %v2439 = vadd.f32 %v2430, %v2436
        %v2440 = vunpack.c.l.bf16 %v828
        %v2441 = vunpack.c.l.bf16 %v829
        %v2442 = vadd.f32 %v2440, %v2438
        %v2443 = vadd.f32 %v2441, %v2439
        %v2444 = vld [vmem:[%s722] sm:$0x1]
        %v2445 = vld [vmem:[%s725] sm:$0x1]
        %v2446 = vsel %vm858, %v2442, 0.0
        %2447 = vadd.xlane.f32.xlu0 %v2446
        %v2448 = vpop.xlane.xlu0 %2447
        %v2449 = vsel %vm858, %v2443, 0.0
        %2450 = vadd.xlane.f32.xlu0 %v2449
        %v2451 = vpop.xlane.xlu0 %2450
        %v2452 = vrcp.pop 32.0
        %v2453 = vmul.f32 %v2448, %v2452
        %v2454 = vmul.f32 %v2451, %v2452
        %v2455 = vsub.f32 %v2442, %v2453
        %v2456 = vsub.f32 %v2443, %v2454
        %v2457 = vmul.f32 %v2455, %v2455
        %v2458 = vmul.f32 %v2456, %v2456
        %v2459 = vsel %vm858, %v2457, 0.0
        %2460 = vadd.xlane.f32.xlu0 %v2459
        %v2461 = vpop.xlane.xlu0 %2460
        %v2462 = vsel %vm858, %v2458, 0.0
        %2463 = vadd.xlane.f32.xlu0 %v2462
        %v2464 = vpop.xlane.xlu0 %2463
        %v2465 = vmul.f32 %v2461, %v2452
        %v2466 = vmul.f32 %v2464, %v2452
        %v2467 = vadd.f32 %v2465, 1e-05
        %v2468 = vadd.f32 %v2466, 1e-05
        %v2469 = vrsqrt.pop %v2467
        %v2470 = vrsqrt.pop %v2468
        %v2471 = vmul.f32 %v2455, %v2469
        %v2472 = vmul.f32 %v2456, %v2470
        %v2474 = vlaneseq
        %v2475 = vshrl.u32 %v2474, 7
        %v2476 = vsub.s32 0, %v2475
        %v2477 = vrot.slane %v2444, %v2476
        %v2479 = vmul.f32 %v2471, %v2477
        %v2480 = vmul.f32 %v2472, %v2477
        %v2482 = vlaneseq
        %v2483 = vshrl.u32 %v2482, 7
        %v2484 = vsub.s32 0, %v2483
        %v2485 = vrot.slane %v2445, %v2484
        %v2487 = vadd.f32 %v2479, %v2485
        %v2488 = vadd.f32 %v2480, %v2485
        %v2489 = vpack.c.bf16 %v2488, %v2487
        %v2490 = vld [vmem:[%s730] sm:$0xff]
        %v2491 = vld [vmem:[%s730 + $0x8] sm:$0xff]
        %v2492 = vld [vmem:[%s730 + $0x10] sm:$0xff]
        %v2493 = vld [vmem:[%s730 + $0x18] sm:$0xff]
        %v2494 = vld [vmem:[%s730 + $0x20] sm:$0xff]
        %v2495 = vld [vmem:[%s730 + $0x28] sm:$0xff]
        %v2496 = vld [vmem:[%s730 + $0x30] sm:$0xff]
        %v2497 = vld [vmem:[%s730 + $0x38] sm:$0xff]
        %v2498 = vld [vmem:[%s730 + $0x40] sm:$0xff]
        %v2499 = vld [vmem:[%s730 + $0x48] sm:$0xff]
        %v2500 = vld [vmem:[%s730 + $0x50] sm:$0xff]
        %v2501 = vld [vmem:[%s730 + $0x58] sm:$0xff]
        %v2502 = vld [vmem:[%s730 + $0x60] sm:$0xff]
        %v2503 = vld [vmem:[%s730 + $0x68] sm:$0xff]
        %v2504 = vld [vmem:[%s730 + $0x70] sm:$0xff]
        %v2505 = vld [vmem:[%s730 + $0x78] sm:$0xff]
        %v2506 = vld [vmem:[%s730 + $0x80] sm:$0xff]
        %v2507 = vld [vmem:[%s730 + $0x88] sm:$0xff]
        %v2508 = vld [vmem:[%s730 + $0x90] sm:$0xff]
        %v2509 = vld [vmem:[%s730 + $0x98] sm:$0xff]
        %v2510 = vld [vmem:[%s730 + $0xa0] sm:$0xff]
        %v2511 = vld [vmem:[%s730 + $0xa8] sm:$0xff]
        %v2512 = vld [vmem:[%s730 + $0xb0] sm:$0xff]
        %v2513 = vld [vmem:[%s730 + $0xb8] sm:$0xff]
        %v2514 = vld [vmem:[%s730 + $0xc0] sm:$0xff]
        %v2515 = vld [vmem:[%s730 + $0xc8] sm:$0xff]
        %v2516 = vld [vmem:[%s730 + $0xd0] sm:$0xff]
        %v2517 = vld [vmem:[%s730 + $0xd8] sm:$0xff]
        %v2518 = vld [vmem:[%s730 + $0xe0] sm:$0xff]
        %v2519 = vld [vmem:[%s730 + $0xe8] sm:$0xff]
        %v2520 = vld [vmem:[%s730 + $0xf0] sm:$0xff]
        %v2521 = vld [vmem:[%s730 + $0xf8] sm:$0xff]
        %v2522 = vld [vmem:[%s734] sm:$0xff]
        %v2523 = vld [vmem:[%s734 + $0x8] sm:$0xff]
        %v2526 = vlaneseq
        %v2527 = vshrl.u32 %v2526, 7
        %v2528 = vsub.s32 0, %v2527
        %v2529 = vrot.slane %v2522, %v2528
        %v2530 = vlaneseq
        %v2531 = vshrl.u32 %v2530, 7
        %v2532 = vsub.s32 1, %v2531
        %v2533 = vrot.slane %v2522, %v2532
        %v2534 = vlaneseq
        %v2535 = vshrl.u32 %v2534, 7
        %v2536 = vsub.s32 2, %v2535
        %v2537 = vrot.slane %v2522, %v2536
        %v2538 = vlaneseq
        %v2539 = vshrl.u32 %v2538, 7
        %v2540 = vsub.s32 3, %v2539
        %v2541 = vrot.slane %v2522, %v2540
        %v2542 = vlaneseq
        %v2543 = vshrl.u32 %v2542, 7
        %v2544 = vsub.s32 4, %v2543
        %v2545 = vrot.slane %v2522, %v2544
        %v2546 = vlaneseq
        %v2547 = vshrl.u32 %v2546, 7
        %v2548 = vsub.s32 5, %v2547
        %v2549 = vrot.slane %v2522, %v2548
        %v2550 = vlaneseq
        %v2551 = vshrl.u32 %v2550, 7
        %v2552 = vsub.s32 6, %v2551
        %v2553 = vrot.slane %v2522, %v2552
        %v2554 = vlaneseq
        %v2555 = vshrl.u32 %v2554, 7
        %v2556 = vsub.s32 7, %v2555
        %v2557 = vrot.slane %v2522, %v2556
        %v2558 = vlaneseq
        %v2559 = vshrl.u32 %v2558, 7
        %v2560 = vsub.s32 0, %v2559
        %v2561 = vrot.slane %v2523, %v2560
        %v2562 = vlaneseq
        %v2563 = vshrl.u32 %v2562, 7
        %v2564 = vsub.s32 1, %v2563
        %v2565 = vrot.slane %v2523, %v2564
        %v2566 = vlaneseq
        %v2567 = vshrl.u32 %v2566, 7
        %v2568 = vsub.s32 2, %v2567
        %v2569 = vrot.slane %v2523, %v2568
        %v2570 = vlaneseq
        %v2571 = vshrl.u32 %v2570, 7
        %v2572 = vsub.s32 3, %v2571
        %v2573 = vrot.slane %v2523, %v2572
        %v2574 = vlaneseq
        %v2575 = vshrl.u32 %v2574, 7
        %v2576 = vsub.s32 4, %v2575
        %v2577 = vrot.slane %v2523, %v2576
        %v2578 = vlaneseq
        %v2579 = vshrl.u32 %v2578, 7
        %v2580 = vsub.s32 5, %v2579
        %v2581 = vrot.slane %v2523, %v2580
        %v2582 = vlaneseq
        %v2583 = vshrl.u32 %v2582, 7
        %v2584 = vsub.s32 6, %v2583
        %v2585 = vrot.slane %v2523, %v2584
        %v2586 = vlaneseq
        %v2587 = vshrl.u32 %v2586, 7
        %v2588 = vsub.s32 7, %v2587
        %v2589 = vrot.slane %v2523, %v2588
        %v2638 = vunpack.c.l.b16 %v2490
        %v2639 = vunpack.c.h.b16 %v2490
        %v2640 = vunpack.c.l.b16 %v2491
        %v2641 = vunpack.c.h.b16 %v2491
        %v2642 = vunpack.c.l.b16 %v2492
        %v2643 = vunpack.c.h.b16 %v2492
        %v2644 = vunpack.c.l.b16 %v2493
        %v2645 = vunpack.c.h.b16 %v2493
        %v2646 = vunpack.c.l.b16 %v2494
        %v2647 = vunpack.c.h.b16 %v2494
        %v2648 = vunpack.c.l.b16 %v2495
        %v2649 = vunpack.c.h.b16 %v2495
        %v2650 = vunpack.c.l.b16 %v2496
        %v2651 = vunpack.c.h.b16 %v2496
        %v2652 = vunpack.c.l.b16 %v2497
        %v2653 = vunpack.c.h.b16 %v2497
        %v2654 = vunpack.c.l.b16 %v2498
        %v2655 = vunpack.c.h.b16 %v2498
        %v2656 = vunpack.c.l.b16 %v2499
        %v2657 = vunpack.c.h.b16 %v2499
        %v2658 = vunpack.c.l.b16 %v2500
        %v2659 = vunpack.c.h.b16 %v2500
        %v2660 = vunpack.c.l.b16 %v2501
        %v2661 = vunpack.c.h.b16 %v2501
        %v2662 = vunpack.c.l.b16 %v2502
        %v2663 = vunpack.c.h.b16 %v2502
        %v2664 = vunpack.c.l.b16 %v2503
        %v2665 = vunpack.c.h.b16 %v2503
        %v2666 = vunpack.c.l.b16 %v2504
        %v2667 = vunpack.c.h.b16 %v2504
        %v2668 = vunpack.c.l.b16 %v2505
        %v2669 = vunpack.c.h.b16 %v2505
        %v2670 = vunpack.c.l.b16 %v2506
        %v2671 = vunpack.c.h.b16 %v2506
        %v2672 = vunpack.c.l.b16 %v2507
        %v2673 = vunpack.c.h.b16 %v2507
        %v2674 = vunpack.c.l.b16 %v2508
        %v2675 = vunpack.c.h.b16 %v2508
        %v2676 = vunpack.c.l.b16 %v2509
        %v2677 = vunpack.c.h.b16 %v2509
        %v2678 = vunpack.c.l.b16 %v2510
        %v2679 = vunpack.c.h.b16 %v2510
        %v2680 = vunpack.c.l.b16 %v2511
        %v2681 = vunpack.c.h.b16 %v2511
        %v2682 = vunpack.c.l.b16 %v2512
        %v2683 = vunpack.c.h.b16 %v2512
        %v2684 = vunpack.c.l.b16 %v2513
        %v2685 = vunpack.c.h.b16 %v2513
        %v2686 = vunpack.c.l.b16 %v2514
        %v2687 = vunpack.c.h.b16 %v2514
        %v2688 = vunpack.c.l.b16 %v2515
        %v2689 = vunpack.c.h.b16 %v2515
        %v2690 = vunpack.c.l.b16 %v2516
        %v2691 = vunpack.c.h.b16 %v2516
        %v2692 = vunpack.c.l.b16 %v2517
        %v2693 = vunpack.c.h.b16 %v2517
        %v2694 = vunpack.c.l.b16 %v2518
        %v2695 = vunpack.c.h.b16 %v2518
        %v2696 = vunpack.c.l.b16 %v2519
        %v2697 = vunpack.c.h.b16 %v2519
        %v2698 = vunpack.c.l.b16 %v2520
        %v2699 = vunpack.c.h.b16 %v2520
        %v2700 = vunpack.c.l.b16 %v2521
        %v2701 = vunpack.c.h.b16 %v2521
        %v2702 = vpack.c.b16 %v2654, %v2638
        %v2703 = vpack.c.b16 %v2655, %v2639
        %v2704 = vpack.c.b16 %v2656, %v2640
        %v2705 = vpack.c.b16 %v2657, %v2641
        %v2706 = vpack.c.b16 %v2658, %v2642
        %v2707 = vpack.c.b16 %v2659, %v2643
        %v2708 = vpack.c.b16 %v2660, %v2644
        %v2709 = vpack.c.b16 %v2661, %v2645
        %v2710 = vpack.c.b16 %v2662, %v2646
        %v2711 = vpack.c.b16 %v2663, %v2647
        %v2712 = vpack.c.b16 %v2664, %v2648
        %v2713 = vpack.c.b16 %v2665, %v2649
        %v2714 = vpack.c.b16 %v2666, %v2650
        %v2715 = vpack.c.b16 %v2667, %v2651
        %v2716 = vpack.c.b16 %v2668, %v2652
        %v2717 = vpack.c.b16 %v2669, %v2653
        %v2718 = vpack.c.b16 %v2686, %v2670
        %v2719 = vpack.c.b16 %v2687, %v2671
        %v2720 = vpack.c.b16 %v2688, %v2672
        %v2721 = vpack.c.b16 %v2689, %v2673
        %v2722 = vpack.c.b16 %v2690, %v2674
        %v2723 = vpack.c.b16 %v2691, %v2675
        %v2724 = vpack.c.b16 %v2692, %v2676
        %v2725 = vpack.c.b16 %v2693, %v2677
        %v2726 = vpack.c.b16 %v2694, %v2678
        %v2727 = vpack.c.b16 %v2695, %v2679
        %v2728 = vpack.c.b16 %v2696, %v2680
        %v2729 = vpack.c.b16 %v2697, %v2681
        %v2730 = vpack.c.b16 %v2698, %v2682
        %v2731 = vpack.c.b16 %v2699, %v2683
        %v2732 = vpack.c.b16 %v2700, %v2684
        %v2733 = vpack.c.b16 %v2701, %v2685
        %v2767 = vsel %vm858, %v2489, 0
        %2769 = vmatprep.subr.bf16.mxu0 0
        %2770 = vmatpush1.bf16.msra.mxu0 0
        %2771 = vmatprep.subr.bf16.mxu0 0
        %2772 = vmatpush1.bf16.msra.mxu0 0
        %2773 = vmatprep.subr.bf16.mxu0 0
        %2774 = vmatpush1.bf16.msra.mxu0 0
        %2775 = vmatprep.subr.bf16.mxu0 0
        %2776 = vmatpush1.bf16.msra.mxu0 0
        %2777 = vmatprep.subr.bf16.mxu0 0
        %2778 = vmatpush1.bf16.msra.mxu0 0
        %2779 = vmatprep.subr.bf16.mxu0 0
        %2780 = vmatpush1.bf16.msra.mxu0 0
        %2781 = vmatprep.subr.bf16.mxu0 %v2719
        %2782 = vmatpush1.bf16.msra.mxu0 %v2718
        %2783 = vmatprep.subr.bf16.mxu0 %v2703
        %2784 = vmatpush1.bf16.msra.mxu0 %v2702
        %2785 = vmatprep.subr.bf16.mxu0 0
        %2786 = vmatpush2.bf16.msra.mxu0 0
        %2787 = vmatprep.subr.bf16.mxu0 0
        %2788 = vmatpush2.bf16.msra.mxu0 0
        %2789 = vmatprep.subr.bf16.mxu0 0
        %2790 = vmatpush2.bf16.msra.mxu0 0
        %2791 = vmatprep.subr.bf16.mxu0 0
        %2792 = vmatpush2.bf16.msra.mxu0 0
        %2793 = vmatprep.subr.bf16.mxu0 0
        %2794 = vmatpush2.bf16.msra.mxu0 0
        %2795 = vmatprep.subr.bf16.mxu0 0
        %2796 = vmatpush2.bf16.msra.mxu0 0
        %2797 = vmatprep.subr.bf16.mxu0 0
        %2798 = vmatpush2.bf16.msra.mxu0 0
        %2799 = vmatprep.subr.bf16.mxu0 0
        %2800 = vmatpush2.bf16.msra.mxu0 0
        %2801 = vmatprep.mubr.bf16.mxu0 0
        %2802 = vmatmul.mubr.bf16.gmra.mxu0 %v2767
        %v2803 = vpop.f32.mrf.mxu0
        %v2804 = vadd.f32 %v2529, %v2803
        %v2805 = vpop.f32.mrf.mxu0
        %v2806 = vadd.f32 %v2533, %v2805
        %v2807 = vpop.f32.mrf.mxu0
        %v2808 = vadd.f32 %v2529, %v2807
        %v2809 = vpop.f32.mrf.mxu0
        %v2810 = vadd.f32 %v2533, %v2809
        %2811 = vdwg.mxu0
        %2812 = vmatprep.subr.bf16.mxu0 0
        %2813 = vmatpush1.bf16.msra.mxu0 0
        %2814 = vmatprep.subr.bf16.mxu0 0
        %2815 = vmatpush1.bf16.msra.mxu0 0
        %2816 = vmatprep.subr.bf16.mxu0 0
        %2817 = vmatpush1.bf16.msra.mxu0 0
        %2818 = vmatprep.subr.bf16.mxu0 0
        %2819 = vmatpush1.bf16.msra.mxu0 0
        %2820 = vmatprep.subr.bf16.mxu0 0
        %2821 = vmatpush1.bf16.msra.mxu0 0
        %2822 = vmatprep.subr.bf16.mxu0 0
        %2823 = vmatpush1.bf16.msra.mxu0 0
        %2824 = vmatprep.subr.bf16.mxu0 %v2721
        %2825 = vmatpush1.bf16.msra.mxu0 %v2720
        %2826 = vmatprep.subr.bf16.mxu0 %v2705
        %2827 = vmatpush1.bf16.msra.mxu0 %v2704
        %2828 = vmatprep.subr.bf16.mxu0 0
        %2829 = vmatpush2.bf16.msra.mxu0 0
        %2830 = vmatprep.subr.bf16.mxu0 0
        %2831 = vmatpush2.bf16.msra.mxu0 0
        %2832 = vmatprep.subr.bf16.mxu0 0
        %2833 = vmatpush2.bf16.msra.mxu0 0
        %2834 = vmatprep.subr.bf16.mxu0 0
        %2835 = vmatpush2.bf16.msra.mxu0 0
        %2836 = vmatprep.subr.bf16.mxu0 0
        %2837 = vmatpush2.bf16.msra.mxu0 0
        %2838 = vmatprep.subr.bf16.mxu0 0
        %2839 = vmatpush2.bf16.msra.mxu0 0
        %2840 = vmatprep.subr.bf16.mxu0 0
        %2841 = vmatpush2.bf16.msra.mxu0 0
        %2842 = vmatprep.subr.bf16.mxu0 0
        %2843 = vmatpush2.bf16.msra.mxu0 0
        %2844 = vmatprep.mubr.bf16.mxu0 0
        %2845 = vmatmul.mubr.bf16.gmra.mxu0 %v2767
        %v2846 = vpop.f32.mrf.mxu0
        %v2847 = vadd.f32 %v2537, %v2846
        %v2848 = vpop.f32.mrf.mxu0
        %v2849 = vadd.f32 %v2541, %v2848
        %v2850 = vpop.f32.mrf.mxu0
        %v2851 = vadd.f32 %v2537, %v2850
        %v2852 = vpop.f32.mrf.mxu0
        %v2853 = vadd.f32 %v2541, %v2852
        %2854 = vdwg.mxu0
        %2855 = vmatprep.subr.bf16.mxu0 0
        %2856 = vmatpush1.bf16.msra.mxu0 0
        %2857 = vmatprep.subr.bf16.mxu0 0
        %2858 = vmatpush1.bf16.msra.mxu0 0
        %2859 = vmatprep.subr.bf16.mxu0 0
        %2860 = vmatpush1.bf16.msra.mxu0 0
        %2861 = vmatprep.subr.bf16.mxu0 0
        %2862 = vmatpush1.bf16.msra.mxu0 0
        %2863 = vmatprep.subr.bf16.mxu0 0
        %2864 = vmatpush1.bf16.msra.mxu0 0
        %2865 = vmatprep.subr.bf16.mxu0 0
        %2866 = vmatpush1.bf16.msra.mxu0 0
        %2867 = vmatprep.subr.bf16.mxu0 %v2723
        %2868 = vmatpush1.bf16.msra.mxu0 %v2722
        %2869 = vmatprep.subr.bf16.mxu0 %v2707
        %2870 = vmatpush1.bf16.msra.mxu0 %v2706
        %2871 = vmatprep.subr.bf16.mxu0 0
        %2872 = vmatpush2.bf16.msra.mxu0 0
        %2873 = vmatprep.subr.bf16.mxu0 0
        %2874 = vmatpush2.bf16.msra.mxu0 0
        %2875 = vmatprep.subr.bf16.mxu0 0
        %2876 = vmatpush2.bf16.msra.mxu0 0
        %2877 = vmatprep.subr.bf16.mxu0 0
        %2878 = vmatpush2.bf16.msra.mxu0 0
        %2879 = vmatprep.subr.bf16.mxu0 0
        %2880 = vmatpush2.bf16.msra.mxu0 0
        %2881 = vmatprep.subr.bf16.mxu0 0
        %2882 = vmatpush2.bf16.msra.mxu0 0
        %2883 = vmatprep.subr.bf16.mxu0 0
        %2884 = vmatpush2.bf16.msra.mxu0 0
        %2885 = vmatprep.subr.bf16.mxu0 0
        %2886 = vmatpush2.bf16.msra.mxu0 0
        %2887 = vmatprep.mubr.bf16.mxu0 0
        %2888 = vmatmul.mubr.bf16.gmra.mxu0 %v2767
        %v2889 = vpop.f32.mrf.mxu0
        %v2890 = vadd.f32 %v2545, %v2889
        %v2891 = vpop.f32.mrf.mxu0
        %v2892 = vadd.f32 %v2549, %v2891
        %v2893 = vpop.f32.mrf.mxu0
        %v2894 = vadd.f32 %v2545, %v2893
        %v2895 = vpop.f32.mrf.mxu0
        %v2896 = vadd.f32 %v2549, %v2895
        %2897 = vdwg.mxu0
        %2898 = vmatprep.subr.bf16.mxu0 0
        %2899 = vmatpush1.bf16.msra.mxu0 0
        %2900 = vmatprep.subr.bf16.mxu0 0
        %2901 = vmatpush1.bf16.msra.mxu0 0
        %2902 = vmatprep.subr.bf16.mxu0 0
        %2903 = vmatpush1.bf16.msra.mxu0 0
        %2904 = vmatprep.subr.bf16.mxu0 0
        %2905 = vmatpush1.bf16.msra.mxu0 0
        %2906 = vmatprep.subr.bf16.mxu0 0
        %2907 = vmatpush1.bf16.msra.mxu0 0
        %2908 = vmatprep.subr.bf16.mxu0 0
        %2909 = vmatpush1.bf16.msra.mxu0 0
        %2910 = vmatprep.subr.bf16.mxu0 %v2725
        %2911 = vmatpush1.bf16.msra.mxu0 %v2724
        %2912 = vmatprep.subr.bf16.mxu0 %v2709
        %2913 = vmatpush1.bf16.msra.mxu0 %v2708
        %2914 = vmatprep.subr.bf16.mxu0 0
        %2915 = vmatpush2.bf16.msra.mxu0 0
        %2916 = vmatprep.subr.bf16.mxu0 0
        %2917 = vmatpush2.bf16.msra.mxu0 0
        %2918 = vmatprep.subr.bf16.mxu0 0
        %2919 = vmatpush2.bf16.msra.mxu0 0
        %2920 = vmatprep.subr.bf16.mxu0 0
        %2921 = vmatpush2.bf16.msra.mxu0 0
        %2922 = vmatprep.subr.bf16.mxu0 0
        %2923 = vmatpush2.bf16.msra.mxu0 0
        %2924 = vmatprep.subr.bf16.mxu0 0
        %2925 = vmatpush2.bf16.msra.mxu0 0
        %2926 = vmatprep.subr.bf16.mxu0 0
        %2927 = vmatpush2.bf16.msra.mxu0 0
        %2928 = vmatprep.subr.bf16.mxu0 0
        %2929 = vmatpush2.bf16.msra.mxu0 0
        %2930 = vmatprep.mubr.bf16.mxu0 0
        %2931 = vmatmul.mubr.bf16.gmra.mxu0 %v2767
        %v2932 = vpop.f32.mrf.mxu0
        %v2933 = vadd.f32 %v2553, %v2932
        %v2934 = vpop.f32.mrf.mxu0
        %v2935 = vadd.f32 %v2557, %v2934
        %v2936 = vpop.f32.mrf.mxu0
        %v2937 = vadd.f32 %v2553, %v2936
        %v2938 = vpop.f32.mrf.mxu0
        %v2939 = vadd.f32 %v2557, %v2938
        %2940 = vdwg.mxu0
        %2941 = vmatprep.subr.bf16.mxu0 0
        %2942 = vmatpush1.bf16.msra.mxu0 0
        %2943 = vmatprep.subr.bf16.mxu0 0
        %2944 = vmatpush1.bf16.msra.mxu0 0
        %2945 = vmatprep.subr.bf16.mxu0 0
        %2946 = vmatpush1.bf16.msra.mxu0 0
        %2947 = vmatprep.subr.bf16.mxu0 0
        %2948 = vmatpush1.bf16.msra.mxu0 0
        %2949 = vmatprep.subr.bf16.mxu0 0
        %2950 = vmatpush1.bf16.msra.mxu0 0
        %2951 = vmatprep.subr.bf16.mxu0 0
        %2952 = vmatpush1.bf16.msra.mxu0 0
        %2953 = vmatprep.subr.bf16.mxu0 %v2727
        %2954 = vmatpush1.bf16.msra.mxu0 %v2726
        %2955 = vmatprep.subr.bf16.mxu0 %v2711
        %2956 = vmatpush1.bf16.msra.mxu0 %v2710
        %2957 = vmatprep.subr.bf16.mxu0 0
        %2958 = vmatpush2.bf16.msra.mxu0 0
        %2959 = vmatprep.subr.bf16.mxu0 0
        %2960 = vmatpush2.bf16.msra.mxu0 0
        %2961 = vmatprep.subr.bf16.mxu0 0
        %2962 = vmatpush2.bf16.msra.mxu0 0
        %2963 = vmatprep.subr.bf16.mxu0 0
        %2964 = vmatpush2.bf16.msra.mxu0 0
        %2965 = vmatprep.subr.bf16.mxu0 0
        %2966 = vmatpush2.bf16.msra.mxu0 0
        %2967 = vmatprep.subr.bf16.mxu0 0
        %2968 = vmatpush2.bf16.msra.mxu0 0
        %2969 = vmatprep.subr.bf16.mxu0 0
        %2970 = vmatpush2.bf16.msra.mxu0 0
        %2971 = vmatprep.subr.bf16.mxu0 0
        %2972 = vmatpush2.bf16.msra.mxu0 0
        %2973 = vmatprep.mubr.bf16.mxu0 0
        %2974 = vmatmul.mubr.bf16.gmra.mxu0 %v2767
        %v2975 = vpop.f32.mrf.mxu0
        %v2976 = vadd.f32 %v2561, %v2975
        %v2977 = vpop.f32.mrf.mxu0
        %v2978 = vadd.f32 %v2565, %v2977
        %v2979 = vpop.f32.mrf.mxu0
        %v2980 = vadd.f32 %v2561, %v2979
        %v2981 = vpop.f32.mrf.mxu0
        %v2982 = vadd.f32 %v2565, %v2981
        %2983 = vdwg.mxu0
        %2984 = vmatprep.subr.bf16.mxu0 0
        %2985 = vmatpush1.bf16.msra.mxu0 0
        %2986 = vmatprep.subr.bf16.mxu0 0
        %2987 = vmatpush1.bf16.msra.mxu0 0
        %2988 = vmatprep.subr.bf16.mxu0 0
        %2989 = vmatpush1.bf16.msra.mxu0 0
        %2990 = vmatprep.subr.bf16.mxu0 0
        %2991 = vmatpush1.bf16.msra.mxu0 0
        %2992 = vmatprep.subr.bf16.mxu0 0
        %2993 = vmatpush1.bf16.msra.mxu0 0
        %2994 = vmatprep.subr.bf16.mxu0 0
        %2995 = vmatpush1.bf16.msra.mxu0 0
        %2996 = vmatprep.subr.bf16.mxu0 %v2729
        %2997 = vmatpush1.bf16.msra.mxu0 %v2728
        %2998 = vmatprep.subr.bf16.mxu0 %v2713
        %2999 = vmatpush1.bf16.msra.mxu0 %v2712
        %3000 = vmatprep.subr.bf16.mxu0 0
        %3001 = vmatpush2.bf16.msra.mxu0 0
        %3002 = vmatprep.subr.bf16.mxu0 0
        %3003 = vmatpush2.bf16.msra.mxu0 0
        %3004 = vmatprep.subr.bf16.mxu0 0
        %3005 = vmatpush2.bf16.msra.mxu0 0
        %3006 = vmatprep.subr.bf16.mxu0 0
        %3007 = vmatpush2.bf16.msra.mxu0 0
        %3008 = vmatprep.subr.bf16.mxu0 0
        %3009 = vmatpush2.bf16.msra.mxu0 0
        %3010 = vmatprep.subr.bf16.mxu0 0
        %3011 = vmatpush2.bf16.msra.mxu0 0
        %3012 = vmatprep.subr.bf16.mxu0 0
        %3013 = vmatpush2.bf16.msra.mxu0 0
        %3014 = vmatprep.subr.bf16.mxu0 0
        %3015 = vmatpush2.bf16.msra.mxu0 0
        %3016 = vmatprep.mubr.bf16.mxu0 0
        %3017 = vmatmul.mubr.bf16.gmra.mxu0 %v2767
        %v3018 = vpop.f32.mrf.mxu0
        %v3019 = vadd.f32 %v2569, %v3018
        %v3020 = vpop.f32.mrf.mxu0
        %v3021 = vadd.f32 %v2573, %v3020
        %v3022 = vpop.f32.mrf.mxu0
        %v3023 = vadd.f32 %v2569, %v3022
        %v3024 = vpop.f32.mrf.mxu0
        %v3025 = vadd.f32 %v2573, %v3024
        %3026 = vdwg.mxu0
        %3027 = vmatprep.subr.bf16.mxu0 0
        %3028 = vmatpush1.bf16.msra.mxu0 0
        %3029 = vmatprep.subr.bf16.mxu0 0
        %3030 = vmatpush1.bf16.msra.mxu0 0
        %3031 = vmatprep.subr.bf16.mxu0 0
        %3032 = vmatpush1.bf16.msra.mxu0 0
        %3033 = vmatprep.subr.bf16.mxu0 0
        %3034 = vmatpush1.bf16.msra.mxu0 0
        %3035 = vmatprep.subr.bf16.mxu0 0
        %3036 = vmatpush1.bf16.msra.mxu0 0
        %3037 = vmatprep.subr.bf16.mxu0 0
        %3038 = vmatpush1.bf16.msra.mxu0 0
        %3039 = vmatprep.subr.bf16.mxu0 %v2731
        %3040 = vmatpush1.bf16.msra.mxu0 %v2730
        %3041 = vmatprep.subr.bf16.mxu0 %v2715
        %3042 = vmatpush1.bf16.msra.mxu0 %v2714
        %3043 = vmatprep.subr.bf16.mxu0 0
        %3044 = vmatpush2.bf16.msra.mxu0 0
        %3045 = vmatprep.subr.bf16.mxu0 0
        %3046 = vmatpush2.bf16.msra.mxu0 0
        %3047 = vmatprep.subr.bf16.mxu0 0
        %3048 = vmatpush2.bf16.msra.mxu0 0
        %3049 = vmatprep.subr.bf16.mxu0 0
        %3050 = vmatpush2.bf16.msra.mxu0 0
        %3051 = vmatprep.subr.bf16.mxu0 0
        %3052 = vmatpush2.bf16.msra.mxu0 0
        %3053 = vmatprep.subr.bf16.mxu0 0
        %3054 = vmatpush2.bf16.msra.mxu0 0
        %3055 = vmatprep.subr.bf16.mxu0 0
        %3056 = vmatpush2.bf16.msra.mxu0 0
        %3057 = vmatprep.subr.bf16.mxu0 0
        %3058 = vmatpush2.bf16.msra.mxu0 0
        %3059 = vmatprep.mubr.bf16.mxu0 0
        %3060 = vmatmul.mubr.bf16.gmra.mxu0 %v2767
        %v3061 = vpop.f32.mrf.mxu0
        %v3062 = vadd.f32 %v2577, %v3061
        %v3063 = vpop.f32.mrf.mxu0
        %v3064 = vadd.f32 %v2581, %v3063
        %v3065 = vpop.f32.mrf.mxu0
        %v3066 = vadd.f32 %v2577, %v3065
        %v3067 = vpop.f32.mrf.mxu0
        %v3068 = vadd.f32 %v2581, %v3067
        %3069 = vdwg.mxu0
        %3070 = vmatprep.subr.bf16.mxu0 0
        %3071 = vmatpush1.bf16.msra.mxu0 0
        %3072 = vmatprep.subr.bf16.mxu0 0
        %3073 = vmatpush1.bf16.msra.mxu0 0
        %3074 = vmatprep.subr.bf16.mxu0 0
        %3075 = vmatpush1.bf16.msra.mxu0 0
        %3076 = vmatprep.subr.bf16.mxu0 0
        %3077 = vmatpush1.bf16.msra.mxu0 0
        %3078 = vmatprep.subr.bf16.mxu0 0
        %3079 = vmatpush1.bf16.msra.mxu0 0
        %3080 = vmatprep.subr.bf16.mxu0 0
        %3081 = vmatpush1.bf16.msra.mxu0 0
        %3082 = vmatprep.subr.bf16.mxu0 %v2733
        %3083 = vmatpush1.bf16.msra.mxu0 %v2732
        %3084 = vmatprep.subr.bf16.mxu0 %v2717
        %3085 = vmatpush1.bf16.msra.mxu0 %v2716
        %3086 = vmatprep.subr.bf16.mxu0 0
        %3087 = vmatpush2.bf16.msra.mxu0 0
        %3088 = vmatprep.subr.bf16.mxu0 0
        %3089 = vmatpush2.bf16.msra.mxu0 0
        %3090 = vmatprep.subr.bf16.mxu0 0
        %3091 = vmatpush2.bf16.msra.mxu0 0
        %3092 = vmatprep.subr.bf16.mxu0 0
        %3093 = vmatpush2.bf16.msra.mxu0 0
        %3094 = vmatprep.subr.bf16.mxu0 0
        %3095 = vmatpush2.bf16.msra.mxu0 0
        %3096 = vmatprep.subr.bf16.mxu0 0
        %3097 = vmatpush2.bf16.msra.mxu0 0
        %3098 = vmatprep.subr.bf16.mxu0 0
        %3099 = vmatpush2.bf16.msra.mxu0 0
        %3100 = vmatprep.subr.bf16.mxu0 0
        %3101 = vmatpush2.bf16.msra.mxu0 0
        %3102 = vmatprep.mubr.bf16.mxu0 0
        %3103 = vmatmul.mubr.bf16.gmra.mxu0 %v2767
        %v3104 = vpop.f32.mrf.mxu0
        %v3105 = vadd.f32 %v2585, %v3104
        %v3106 = vpop.f32.mrf.mxu0
        %v3107 = vadd.f32 %v2589, %v3106
        %v3108 = vpop.f32.mrf.mxu0
        %v3109 = vadd.f32 %v2585, %v3108
        %v3110 = vpop.f32.mrf.mxu0
        %v3111 = vadd.f32 %v2589, %v3110
        %3112 = vdwg.mxu0
        %v3113 = vmax.f32 %v2804, 0.0
        %v3114 = vmax.f32 %v2806, 0.0
        %v3115 = vmax.f32 %v2847, 0.0
        %v3116 = vmax.f32 %v2849, 0.0
        %v3117 = vmax.f32 %v2890, 0.0
        %v3118 = vmax.f32 %v2892, 0.0
        %v3119 = vmax.f32 %v2933, 0.0
        %v3120 = vmax.f32 %v2935, 0.0
        %v3121 = vmax.f32 %v2976, 0.0
        %v3122 = vmax.f32 %v2978, 0.0
        %v3123 = vmax.f32 %v3019, 0.0
        %v3124 = vmax.f32 %v3021, 0.0
        %v3125 = vmax.f32 %v3062, 0.0
        %v3126 = vmax.f32 %v3064, 0.0
        %v3127 = vmax.f32 %v3105, 0.0
        %v3128 = vmax.f32 %v3107, 0.0
        %v3129 = vmax.f32 %v2808, 0.0
        %v3130 = vmax.f32 %v2810, 0.0
        %v3131 = vmax.f32 %v2851, 0.0
        %v3132 = vmax.f32 %v2853, 0.0
        %v3133 = vmax.f32 %v2894, 0.0
        %v3134 = vmax.f32 %v2896, 0.0
        %v3135 = vmax.f32 %v2937, 0.0
        %v3136 = vmax.f32 %v2939, 0.0
        %v3137 = vmax.f32 %v2980, 0.0
        %v3138 = vmax.f32 %v2982, 0.0
        %v3139 = vmax.f32 %v3023, 0.0
        %v3140 = vmax.f32 %v3025, 0.0
        %v3141 = vmax.f32 %v3066, 0.0
        %v3142 = vmax.f32 %v3068, 0.0
        %v3143 = vmax.f32 %v3109, 0.0
        %v3144 = vmax.f32 %v3111, 0.0
        %v3145 = vpack.c.bf16 %v3129, %v3113
        %v3146 = vpack.c.bf16 %v3130, %v3114
        %v3147 = vpack.c.bf16 %v3131, %v3115
        %v3148 = vpack.c.bf16 %v3132, %v3116
        %v3149 = vpack.c.bf16 %v3133, %v3117
        %v3150 = vpack.c.bf16 %v3134, %v3118
        %v3151 = vpack.c.bf16 %v3135, %v3119
        %v3152 = vpack.c.bf16 %v3136, %v3120
        %v3153 = vpack.c.bf16 %v3137, %v3121
        %v3154 = vpack.c.bf16 %v3138, %v3122
        %v3155 = vpack.c.bf16 %v3139, %v3123
        %v3156 = vpack.c.bf16 %v3140, %v3124
        %v3157 = vpack.c.bf16 %v3141, %v3125
        %v3158 = vpack.c.bf16 %v3142, %v3126
        %v3159 = vpack.c.bf16 %v3143, %v3127
        %v3160 = vpack.c.bf16 %v3144, %v3128
        %v3161 = vld [vmem:[%s739] sm:$0xf]
        %v3162 = vld [vmem:[%s739 + $0x4] sm:$0xf]
        %v3163 = vld [vmem:[%s739 + $0x8] sm:$0xf]
        %v3164 = vld [vmem:[%s739 + $0xc] sm:$0xf]
        %v3165 = vld [vmem:[%s739 + $0x10] sm:$0xf]
        %v3166 = vld [vmem:[%s739 + $0x14] sm:$0xf]
        %v3167 = vld [vmem:[%s739 + $0x18] sm:$0xf]
        %v3168 = vld [vmem:[%s739 + $0x1c] sm:$0xf]
        %v3169 = vld [vmem:[%s739 + $0x20] sm:$0xf]
        %v3170 = vld [vmem:[%s739 + $0x24] sm:$0xf]
        %v3171 = vld [vmem:[%s739 + $0x28] sm:$0xf]
        %v3172 = vld [vmem:[%s739 + $0x2c] sm:$0xf]
        %v3173 = vld [vmem:[%s739 + $0x30] sm:$0xf]
        %v3174 = vld [vmem:[%s739 + $0x34] sm:$0xf]
        %v3175 = vld [vmem:[%s739 + $0x38] sm:$0xf]
        %v3176 = vld [vmem:[%s739 + $0x3c] sm:$0xf]
        %v3177 = vld [vmem:[%s739 + $0x40] sm:$0xf]
        %v3178 = vld [vmem:[%s739 + $0x44] sm:$0xf]
        %v3179 = vld [vmem:[%s739 + $0x48] sm:$0xf]
        %v3180 = vld [vmem:[%s739 + $0x4c] sm:$0xf]
        %v3181 = vld [vmem:[%s739 + $0x50] sm:$0xf]
        %v3182 = vld [vmem:[%s739 + $0x54] sm:$0xf]
        %v3183 = vld [vmem:[%s739 + $0x58] sm:$0xf]
        %v3184 = vld [vmem:[%s739 + $0x5c] sm:$0xf]
        %v3185 = vld [vmem:[%s739 + $0x60] sm:$0xf]
        %v3186 = vld [vmem:[%s739 + $0x64] sm:$0xf]
        %v3187 = vld [vmem:[%s739 + $0x68] sm:$0xf]
        %v3188 = vld [vmem:[%s739 + $0x6c] sm:$0xf]
        %v3189 = vld [vmem:[%s739 + $0x70] sm:$0xf]
        %v3190 = vld [vmem:[%s739 + $0x74] sm:$0xf]
        %v3191 = vld [vmem:[%s739 + $0x78] sm:$0xf]
        %v3192 = vld [vmem:[%s739 + $0x7c] sm:$0xf]
        %v3193 = vld [vmem:[%s739 + $0x80] sm:$0xf]
        %v3194 = vld [vmem:[%s739 + $0x84] sm:$0xf]
        %v3195 = vld [vmem:[%s739 + $0x88] sm:$0xf]
        %v3196 = vld [vmem:[%s739 + $0x8c] sm:$0xf]
        %v3197 = vld [vmem:[%s739 + $0x90] sm:$0xf]
        %v3198 = vld [vmem:[%s739 + $0x94] sm:$0xf]
        %v3199 = vld [vmem:[%s739 + $0x98] sm:$0xf]
        %v3200 = vld [vmem:[%s739 + $0x9c] sm:$0xf]
        %v3201 = vld [vmem:[%s739 + $0xa0] sm:$0xf]
        %v3202 = vld [vmem:[%s739 + $0xa4] sm:$0xf]
        %v3203 = vld [vmem:[%s739 + $0xa8] sm:$0xf]
        %v3204 = vld [vmem:[%s739 + $0xac] sm:$0xf]
        %v3205 = vld [vmem:[%s739 + $0xb0] sm:$0xf]
        %v3206 = vld [vmem:[%s739 + $0xb4] sm:$0xf]
        %v3207 = vld [vmem:[%s739 + $0xb8] sm:$0xf]
        %v3208 = vld [vmem:[%s739 + $0xbc] sm:$0xf]
        %v3209 = vld [vmem:[%s739 + $0xc0] sm:$0xf]
        %v3210 = vld [vmem:[%s739 + $0xc4] sm:$0xf]
        %v3211 = vld [vmem:[%s739 + $0xc8] sm:$0xf]
        %v3212 = vld [vmem:[%s739 + $0xcc] sm:$0xf]
        %v3213 = vld [vmem:[%s739 + $0xd0] sm:$0xf]
        %v3214 = vld [vmem:[%s739 + $0xd4] sm:$0xf]
        %v3215 = vld [vmem:[%s739 + $0xd8] sm:$0xf]
        %v3216 = vld [vmem:[%s739 + $0xdc] sm:$0xf]
        %v3217 = vld [vmem:[%s739 + $0xe0] sm:$0xf]
        %v3218 = vld [vmem:[%s739 + $0xe4] sm:$0xf]
        %v3219 = vld [vmem:[%s739 + $0xe8] sm:$0xf]
        %v3220 = vld [vmem:[%s739 + $0xec] sm:$0xf]
        %v3221 = vld [vmem:[%s739 + $0xf0] sm:$0xf]
        %v3222 = vld [vmem:[%s739 + $0xf4] sm:$0xf]
        %v3223 = vld [vmem:[%s739 + $0xf8] sm:$0xf]
        %v3224 = vld [vmem:[%s739 + $0xfc] sm:$0xf]
        %v3225 = vld [vmem:[%s739 + $0x100] sm:$0xf]
        %v3226 = vld [vmem:[%s739 + $0x104] sm:$0xf]
        %v3227 = vld [vmem:[%s739 + $0x108] sm:$0xf]
        %v3228 = vld [vmem:[%s739 + $0x10c] sm:$0xf]
        %v3229 = vld [vmem:[%s739 + $0x110] sm:$0xf]
        %v3230 = vld [vmem:[%s739 + $0x114] sm:$0xf]
        %v3231 = vld [vmem:[%s739 + $0x118] sm:$0xf]
        %v3232 = vld [vmem:[%s739 + $0x11c] sm:$0xf]
        %v3233 = vld [vmem:[%s739 + $0x120] sm:$0xf]
        %v3234 = vld [vmem:[%s739 + $0x124] sm:$0xf]
        %v3235 = vld [vmem:[%s739 + $0x128] sm:$0xf]
        %v3236 = vld [vmem:[%s739 + $0x12c] sm:$0xf]
        %v3237 = vld [vmem:[%s739 + $0x130] sm:$0xf]
        %v3238 = vld [vmem:[%s739 + $0x134] sm:$0xf]
        %v3239 = vld [vmem:[%s739 + $0x138] sm:$0xf]
        %v3240 = vld [vmem:[%s739 + $0x13c] sm:$0xf]
        %v3241 = vld [vmem:[%s739 + $0x140] sm:$0xf]
        %v3242 = vld [vmem:[%s739 + $0x144] sm:$0xf]
        %v3243 = vld [vmem:[%s739 + $0x148] sm:$0xf]
        %v3244 = vld [vmem:[%s739 + $0x14c] sm:$0xf]
        %v3245 = vld [vmem:[%s739 + $0x150] sm:$0xf]
        %v3246 = vld [vmem:[%s739 + $0x154] sm:$0xf]
        %v3247 = vld [vmem:[%s739 + $0x158] sm:$0xf]
        %v3248 = vld [vmem:[%s739 + $0x15c] sm:$0xf]
        %v3249 = vld [vmem:[%s739 + $0x160] sm:$0xf]
        %v3250 = vld [vmem:[%s739 + $0x164] sm:$0xf]
        %v3251 = vld [vmem:[%s739 + $0x168] sm:$0xf]
        %v3252 = vld [vmem:[%s739 + $0x16c] sm:$0xf]
        %v3253 = vld [vmem:[%s739 + $0x170] sm:$0xf]
        %v3254 = vld [vmem:[%s739 + $0x174] sm:$0xf]
        %v3255 = vld [vmem:[%s739 + $0x178] sm:$0xf]
        %v3256 = vld [vmem:[%s739 + $0x17c] sm:$0xf]
        %v3257 = vld [vmem:[%s739 + $0x180] sm:$0xf]
        %v3258 = vld [vmem:[%s739 + $0x184] sm:$0xf]
        %v3259 = vld [vmem:[%s739 + $0x188] sm:$0xf]
        %v3260 = vld [vmem:[%s739 + $0x18c] sm:$0xf]
        %v3261 = vld [vmem:[%s739 + $0x190] sm:$0xf]
        %v3262 = vld [vmem:[%s739 + $0x194] sm:$0xf]
        %v3263 = vld [vmem:[%s739 + $0x198] sm:$0xf]
        %v3264 = vld [vmem:[%s739 + $0x19c] sm:$0xf]
        %v3265 = vld [vmem:[%s739 + $0x1a0] sm:$0xf]
        %v3266 = vld [vmem:[%s739 + $0x1a4] sm:$0xf]
        %v3267 = vld [vmem:[%s739 + $0x1a8] sm:$0xf]
        %v3268 = vld [vmem:[%s739 + $0x1ac] sm:$0xf]
        %v3269 = vld [vmem:[%s739 + $0x1b0] sm:$0xf]
        %v3270 = vld [vmem:[%s739 + $0x1b4] sm:$0xf]
        %v3271 = vld [vmem:[%s739 + $0x1b8] sm:$0xf]
        %v3272 = vld [vmem:[%s739 + $0x1bc] sm:$0xf]
        %v3273 = vld [vmem:[%s739 + $0x1c0] sm:$0xf]
        %v3274 = vld [vmem:[%s739 + $0x1c4] sm:$0xf]
        %v3275 = vld [vmem:[%s739 + $0x1c8] sm:$0xf]
        %v3276 = vld [vmem:[%s739 + $0x1cc] sm:$0xf]
        %v3277 = vld [vmem:[%s739 + $0x1d0] sm:$0xf]
        %v3278 = vld [vmem:[%s739 + $0x1d4] sm:$0xf]
        %v3279 = vld [vmem:[%s739 + $0x1d8] sm:$0xf]
        %v3280 = vld [vmem:[%s739 + $0x1dc] sm:$0xf]
        %v3281 = vld [vmem:[%s739 + $0x1e0] sm:$0xf]
        %v3282 = vld [vmem:[%s739 + $0x1e4] sm:$0xf]
        %v3283 = vld [vmem:[%s739 + $0x1e8] sm:$0xf]
        %v3284 = vld [vmem:[%s739 + $0x1ec] sm:$0xf]
        %v3285 = vld [vmem:[%s739 + $0x1f0] sm:$0xf]
        %v3286 = vld [vmem:[%s739 + $0x1f4] sm:$0xf]
        %v3287 = vld [vmem:[%s739 + $0x1f8] sm:$0xf]
        %v3288 = vld [vmem:[%s739 + $0x1fc] sm:$0xf]
        %v3289 = vld [vmem:[%s739 + $0x200] sm:$0xf]
        %v3290 = vld [vmem:[%s739 + $0x204] sm:$0xf]
        %v3291 = vld [vmem:[%s739 + $0x208] sm:$0xf]
        %v3292 = vld [vmem:[%s739 + $0x20c] sm:$0xf]
        %v3293 = vld [vmem:[%s739 + $0x210] sm:$0xf]
        %v3294 = vld [vmem:[%s739 + $0x214] sm:$0xf]
        %v3295 = vld [vmem:[%s739 + $0x218] sm:$0xf]
        %v3296 = vld [vmem:[%s739 + $0x21c] sm:$0xf]
        %v3297 = vld [vmem:[%s739 + $0x220] sm:$0xf]
        %v3298 = vld [vmem:[%s739 + $0x224] sm:$0xf]
        %v3299 = vld [vmem:[%s739 + $0x228] sm:$0xf]
        %v3300 = vld [vmem:[%s739 + $0x22c] sm:$0xf]
        %v3301 = vld [vmem:[%s739 + $0x230] sm:$0xf]
        %v3302 = vld [vmem:[%s739 + $0x234] sm:$0xf]
        %v3303 = vld [vmem:[%s739 + $0x238] sm:$0xf]
        %v3304 = vld [vmem:[%s739 + $0x23c] sm:$0xf]
        %v3305 = vld [vmem:[%s739 + $0x240] sm:$0xf]
        %v3306 = vld [vmem:[%s739 + $0x244] sm:$0xf]
        %v3307 = vld [vmem:[%s739 + $0x248] sm:$0xf]
        %v3308 = vld [vmem:[%s739 + $0x24c] sm:$0xf]
        %v3309 = vld [vmem:[%s739 + $0x250] sm:$0xf]
        %v3310 = vld [vmem:[%s739 + $0x254] sm:$0xf]
        %v3311 = vld [vmem:[%s739 + $0x258] sm:$0xf]
        %v3312 = vld [vmem:[%s739 + $0x25c] sm:$0xf]
        %v3313 = vld [vmem:[%s739 + $0x260] sm:$0xf]
        %v3314 = vld [vmem:[%s739 + $0x264] sm:$0xf]
        %v3315 = vld [vmem:[%s739 + $0x268] sm:$0xf]
        %v3316 = vld [vmem:[%s739 + $0x26c] sm:$0xf]
        %v3317 = vld [vmem:[%s739 + $0x270] sm:$0xf]
        %v3318 = vld [vmem:[%s739 + $0x274] sm:$0xf]
        %v3319 = vld [vmem:[%s739 + $0x278] sm:$0xf]
        %v3320 = vld [vmem:[%s739 + $0x27c] sm:$0xf]
        %v3321 = vld [vmem:[%s739 + $0x280] sm:$0xf]
        %v3322 = vld [vmem:[%s739 + $0x284] sm:$0xf]
        %v3323 = vld [vmem:[%s739 + $0x288] sm:$0xf]
        %v3324 = vld [vmem:[%s739 + $0x28c] sm:$0xf]
        %v3325 = vld [vmem:[%s739 + $0x290] sm:$0xf]
        %v3326 = vld [vmem:[%s739 + $0x294] sm:$0xf]
        %v3327 = vld [vmem:[%s739 + $0x298] sm:$0xf]
        %v3328 = vld [vmem:[%s739 + $0x29c] sm:$0xf]
        %v3329 = vld [vmem:[%s739 + $0x2a0] sm:$0xf]
        %v3330 = vld [vmem:[%s739 + $0x2a4] sm:$0xf]
        %v3331 = vld [vmem:[%s739 + $0x2a8] sm:$0xf]
        %v3332 = vld [vmem:[%s739 + $0x2ac] sm:$0xf]
        %v3333 = vld [vmem:[%s739 + $0x2b0] sm:$0xf]
        %v3334 = vld [vmem:[%s739 + $0x2b4] sm:$0xf]
        %v3335 = vld [vmem:[%s739 + $0x2b8] sm:$0xf]
        %v3336 = vld [vmem:[%s739 + $0x2bc] sm:$0xf]
        %v3337 = vld [vmem:[%s739 + $0x2c0] sm:$0xf]
        %v3338 = vld [vmem:[%s739 + $0x2c4] sm:$0xf]
        %v3339 = vld [vmem:[%s739 + $0x2c8] sm:$0xf]
        %v3340 = vld [vmem:[%s739 + $0x2cc] sm:$0xf]
        %v3341 = vld [vmem:[%s739 + $0x2d0] sm:$0xf]
        %v3342 = vld [vmem:[%s739 + $0x2d4] sm:$0xf]
        %v3343 = vld [vmem:[%s739 + $0x2d8] sm:$0xf]
        %v3344 = vld [vmem:[%s739 + $0x2dc] sm:$0xf]
        %v3345 = vld [vmem:[%s739 + $0x2e0] sm:$0xf]
        %v3346 = vld [vmem:[%s739 + $0x2e4] sm:$0xf]
        %v3347 = vld [vmem:[%s739 + $0x2e8] sm:$0xf]
        %v3348 = vld [vmem:[%s739 + $0x2ec] sm:$0xf]
        %v3349 = vld [vmem:[%s739 + $0x2f0] sm:$0xf]
        %v3350 = vld [vmem:[%s739 + $0x2f4] sm:$0xf]
        %v3351 = vld [vmem:[%s739 + $0x2f8] sm:$0xf]
        %v3352 = vld [vmem:[%s739 + $0x2fc] sm:$0xf]
        %v3353 = vld [vmem:[%s739 + $0x300] sm:$0xf]
        %v3354 = vld [vmem:[%s739 + $0x304] sm:$0xf]
        %v3355 = vld [vmem:[%s739 + $0x308] sm:$0xf]
        %v3356 = vld [vmem:[%s739 + $0x30c] sm:$0xf]
        %v3357 = vld [vmem:[%s739 + $0x310] sm:$0xf]
        %v3358 = vld [vmem:[%s739 + $0x314] sm:$0xf]
        %v3359 = vld [vmem:[%s739 + $0x318] sm:$0xf]
        %v3360 = vld [vmem:[%s739 + $0x31c] sm:$0xf]
        %v3361 = vld [vmem:[%s739 + $0x320] sm:$0xf]
        %v3362 = vld [vmem:[%s739 + $0x324] sm:$0xf]
        %v3363 = vld [vmem:[%s739 + $0x328] sm:$0xf]
        %v3364 = vld [vmem:[%s739 + $0x32c] sm:$0xf]
        %v3365 = vld [vmem:[%s739 + $0x330] sm:$0xf]
        %v3366 = vld [vmem:[%s739 + $0x334] sm:$0xf]
        %v3367 = vld [vmem:[%s739 + $0x338] sm:$0xf]
        %v3368 = vld [vmem:[%s739 + $0x33c] sm:$0xf]
        %v3369 = vld [vmem:[%s739 + $0x340] sm:$0xf]
        %v3370 = vld [vmem:[%s739 + $0x344] sm:$0xf]
        %v3371 = vld [vmem:[%s739 + $0x348] sm:$0xf]
        %v3372 = vld [vmem:[%s739 + $0x34c] sm:$0xf]
        %v3373 = vld [vmem:[%s739 + $0x350] sm:$0xf]
        %v3374 = vld [vmem:[%s739 + $0x354] sm:$0xf]
        %v3375 = vld [vmem:[%s739 + $0x358] sm:$0xf]
        %v3376 = vld [vmem:[%s739 + $0x35c] sm:$0xf]
        %v3377 = vld [vmem:[%s739 + $0x360] sm:$0xf]
        %v3378 = vld [vmem:[%s739 + $0x364] sm:$0xf]
        %v3379 = vld [vmem:[%s739 + $0x368] sm:$0xf]
        %v3380 = vld [vmem:[%s739 + $0x36c] sm:$0xf]
        %v3381 = vld [vmem:[%s739 + $0x370] sm:$0xf]
        %v3382 = vld [vmem:[%s739 + $0x374] sm:$0xf]
        %v3383 = vld [vmem:[%s739 + $0x378] sm:$0xf]
        %v3384 = vld [vmem:[%s739 + $0x37c] sm:$0xf]
        %v3385 = vld [vmem:[%s739 + $0x380] sm:$0xf]
        %v3386 = vld [vmem:[%s739 + $0x384] sm:$0xf]
        %v3387 = vld [vmem:[%s739 + $0x388] sm:$0xf]
        %v3388 = vld [vmem:[%s739 + $0x38c] sm:$0xf]
        %v3389 = vld [vmem:[%s739 + $0x390] sm:$0xf]
        %v3390 = vld [vmem:[%s739 + $0x394] sm:$0xf]
        %v3391 = vld [vmem:[%s739 + $0x398] sm:$0xf]
        %v3392 = vld [vmem:[%s739 + $0x39c] sm:$0xf]
        %v3393 = vld [vmem:[%s739 + $0x3a0] sm:$0xf]
        %v3394 = vld [vmem:[%s739 + $0x3a4] sm:$0xf]
        %v3395 = vld [vmem:[%s739 + $0x3a8] sm:$0xf]
        %v3396 = vld [vmem:[%s739 + $0x3ac] sm:$0xf]
        %v3397 = vld [vmem:[%s739 + $0x3b0] sm:$0xf]
        %v3398 = vld [vmem:[%s739 + $0x3b4] sm:$0xf]
        %v3399 = vld [vmem:[%s739 + $0x3b8] sm:$0xf]
        %v3400 = vld [vmem:[%s739 + $0x3bc] sm:$0xf]
        %v3401 = vld [vmem:[%s739 + $0x3c0] sm:$0xf]
        %v3402 = vld [vmem:[%s739 + $0x3c4] sm:$0xf]
        %v3403 = vld [vmem:[%s739 + $0x3c8] sm:$0xf]
        %v3404 = vld [vmem:[%s739 + $0x3cc] sm:$0xf]
        %v3405 = vld [vmem:[%s739 + $0x3d0] sm:$0xf]
        %v3406 = vld [vmem:[%s739 + $0x3d4] sm:$0xf]
        %v3407 = vld [vmem:[%s739 + $0x3d8] sm:$0xf]
        %v3408 = vld [vmem:[%s739 + $0x3dc] sm:$0xf]
        %v3409 = vld [vmem:[%s739 + $0x3e0] sm:$0xf]
        %v3410 = vld [vmem:[%s739 + $0x3e4] sm:$0xf]
        %v3411 = vld [vmem:[%s739 + $0x3e8] sm:$0xf]
        %v3412 = vld [vmem:[%s739 + $0x3ec] sm:$0xf]
        %v3413 = vld [vmem:[%s739 + $0x3f0] sm:$0xf]
        %v3414 = vld [vmem:[%s739 + $0x3f4] sm:$0xf]
        %v3415 = vld [vmem:[%s739 + $0x3f8] sm:$0xf]
        %v3416 = vld [vmem:[%s739 + $0x3fc] sm:$0xf]
        %v3417 = vld [vmem:[%s742] sm:$0x1]
        %v3419 = vlaneseq
        %v3420 = vshrl.u32 %v3419, 7
        %v3421 = vsub.s32 0, %v3420
        %v3422 = vrot.slane %v3417, %v3421
        %v3680 = vunpack.c.l.b16 %v3161
        %v3681 = vunpack.c.l.b16 %v3162
        %v3682 = vunpack.c.l.b16 %v3163
        %v3683 = vunpack.c.l.b16 %v3164
        %v3684 = vunpack.c.l.b16 %v3165
        %v3685 = vunpack.c.l.b16 %v3166
        %v3686 = vunpack.c.l.b16 %v3167
        %v3687 = vunpack.c.l.b16 %v3168
        %v3688 = vunpack.c.l.b16 %v3169
        %v3689 = vunpack.c.l.b16 %v3170
        %v3690 = vunpack.c.l.b16 %v3171
        %v3691 = vunpack.c.l.b16 %v3172
        %v3692 = vunpack.c.l.b16 %v3173
        %v3693 = vunpack.c.l.b16 %v3174
        %v3694 = vunpack.c.l.b16 %v3175
        %v3695 = vunpack.c.l.b16 %v3176
        %v3696 = vunpack.c.l.b16 %v3177
        %v3697 = vunpack.c.l.b16 %v3178
        %v3698 = vunpack.c.l.b16 %v3179
        %v3699 = vunpack.c.l.b16 %v3180
        %v3700 = vunpack.c.l.b16 %v3181
        %v3701 = vunpack.c.l.b16 %v3182
        %v3702 = vunpack.c.l.b16 %v3183
        %v3703 = vunpack.c.l.b16 %v3184
        %v3704 = vunpack.c.l.b16 %v3185
        %v3705 = vunpack.c.l.b16 %v3186
        %v3706 = vunpack.c.l.b16 %v3187
        %v3707 = vunpack.c.l.b16 %v3188
        %v3708 = vunpack.c.l.b16 %v3189
        %v3709 = vunpack.c.l.b16 %v3190
        %v3710 = vunpack.c.l.b16 %v3191
        %v3711 = vunpack.c.l.b16 %v3192
        %v3712 = vunpack.c.l.b16 %v3193
        %v3713 = vunpack.c.l.b16 %v3194
        %v3714 = vunpack.c.l.b16 %v3195
        %v3715 = vunpack.c.l.b16 %v3196
        %v3716 = vunpack.c.l.b16 %v3197
        %v3717 = vunpack.c.l.b16 %v3198
        %v3718 = vunpack.c.l.b16 %v3199
        %v3719 = vunpack.c.l.b16 %v3200
        %v3720 = vunpack.c.l.b16 %v3201
        %v3721 = vunpack.c.l.b16 %v3202
        %v3722 = vunpack.c.l.b16 %v3203
        %v3723 = vunpack.c.l.b16 %v3204
        %v3724 = vunpack.c.l.b16 %v3205
        %v3725 = vunpack.c.l.b16 %v3206
        %v3726 = vunpack.c.l.b16 %v3207
        %v3727 = vunpack.c.l.b16 %v3208
        %v3728 = vunpack.c.l.b16 %v3209
        %v3729 = vunpack.c.l.b16 %v3210
        %v3730 = vunpack.c.l.b16 %v3211
        %v3731 = vunpack.c.l.b16 %v3212
        %v3732 = vunpack.c.l.b16 %v3213
        %v3733 = vunpack.c.l.b16 %v3214
        %v3734 = vunpack.c.l.b16 %v3215
        %v3735 = vunpack.c.l.b16 %v3216
        %v3736 = vunpack.c.l.b16 %v3217
        %v3737 = vunpack.c.l.b16 %v3218
        %v3738 = vunpack.c.l.b16 %v3219
        %v3739 = vunpack.c.l.b16 %v3220
        %v3740 = vunpack.c.l.b16 %v3221
        %v3741 = vunpack.c.l.b16 %v3222
        %v3742 = vunpack.c.l.b16 %v3223
        %v3743 = vunpack.c.l.b16 %v3224
        %v3744 = vunpack.c.l.b16 %v3225
        %v3745 = vunpack.c.l.b16 %v3226
        %v3746 = vunpack.c.l.b16 %v3227
        %v3747 = vunpack.c.l.b16 %v3228
        %v3748 = vunpack.c.l.b16 %v3229
        %v3749 = vunpack.c.l.b16 %v3230
        %v3750 = vunpack.c.l.b16 %v3231
        %v3751 = vunpack.c.l.b16 %v3232
        %v3752 = vunpack.c.l.b16 %v3233
        %v3753 = vunpack.c.l.b16 %v3234
        %v3754 = vunpack.c.l.b16 %v3235
        %v3755 = vunpack.c.l.b16 %v3236
        %v3756 = vunpack.c.l.b16 %v3237
        %v3757 = vunpack.c.l.b16 %v3238
        %v3758 = vunpack.c.l.b16 %v3239
        %v3759 = vunpack.c.l.b16 %v3240
        %v3760 = vunpack.c.l.b16 %v3241
        %v3761 = vunpack.c.l.b16 %v3242
        %v3762 = vunpack.c.l.b16 %v3243
        %v3763 = vunpack.c.l.b16 %v3244
        %v3764 = vunpack.c.l.b16 %v3245
        %v3765 = vunpack.c.l.b16 %v3246
        %v3766 = vunpack.c.l.b16 %v3247
        %v3767 = vunpack.c.l.b16 %v3248
        %v3768 = vunpack.c.l.b16 %v3249
        %v3769 = vunpack.c.l.b16 %v3250
        %v3770 = vunpack.c.l.b16 %v3251
        %v3771 = vunpack.c.l.b16 %v3252
        %v3772 = vunpack.c.l.b16 %v3253
        %v3773 = vunpack.c.l.b16 %v3254
        %v3774 = vunpack.c.l.b16 %v3255
        %v3775 = vunpack.c.l.b16 %v3256
        %v3776 = vunpack.c.l.b16 %v3257
        %v3777 = vunpack.c.l.b16 %v3258
        %v3778 = vunpack.c.l.b16 %v3259
        %v3779 = vunpack.c.l.b16 %v3260
        %v3780 = vunpack.c.l.b16 %v3261
        %v3781 = vunpack.c.l.b16 %v3262
        %v3782 = vunpack.c.l.b16 %v3263
        %v3783 = vunpack.c.l.b16 %v3264
        %v3784 = vunpack.c.l.b16 %v3265
        %v3785 = vunpack.c.l.b16 %v3266
        %v3786 = vunpack.c.l.b16 %v3267
        %v3787 = vunpack.c.l.b16 %v3268
        %v3788 = vunpack.c.l.b16 %v3269
        %v3789 = vunpack.c.l.b16 %v3270
        %v3790 = vunpack.c.l.b16 %v3271
        %v3791 = vunpack.c.l.b16 %v3272
        %v3792 = vunpack.c.l.b16 %v3273
        %v3793 = vunpack.c.l.b16 %v3274
        %v3794 = vunpack.c.l.b16 %v3275
        %v3795 = vunpack.c.l.b16 %v3276
        %v3796 = vunpack.c.l.b16 %v3277
        %v3797 = vunpack.c.l.b16 %v3278
        %v3798 = vunpack.c.l.b16 %v3279
        %v3799 = vunpack.c.l.b16 %v3280
        %v3800 = vunpack.c.l.b16 %v3281
        %v3801 = vunpack.c.l.b16 %v3282
        %v3802 = vunpack.c.l.b16 %v3283
        %v3803 = vunpack.c.l.b16 %v3284
        %v3804 = vunpack.c.l.b16 %v3285
        %v3805 = vunpack.c.l.b16 %v3286
        %v3806 = vunpack.c.l.b16 %v3287
        %v3807 = vunpack.c.l.b16 %v3288
        %v3808 = vunpack.c.l.b16 %v3289
        %v3809 = vunpack.c.l.b16 %v3290
        %v3810 = vunpack.c.l.b16 %v3291
        %v3811 = vunpack.c.l.b16 %v3292
        %v3812 = vunpack.c.l.b16 %v3293
        %v3813 = vunpack.c.l.b16 %v3294
        %v3814 = vunpack.c.l.b16 %v3295
        %v3815 = vunpack.c.l.b16 %v3296
        %v3816 = vunpack.c.l.b16 %v3297
        %v3817 = vunpack.c.l.b16 %v3298
        %v3818 = vunpack.c.l.b16 %v3299
        %v3819 = vunpack.c.l.b16 %v3300
        %v3820 = vunpack.c.l.b16 %v3301
        %v3821 = vunpack.c.l.b16 %v3302
        %v3822 = vunpack.c.l.b16 %v3303
        %v3823 = vunpack.c.l.b16 %v3304
        %v3824 = vunpack.c.l.b16 %v3305
        %v3825 = vunpack.c.l.b16 %v3306
        %v3826 = vunpack.c.l.b16 %v3307
        %v3827 = vunpack.c.l.b16 %v3308
        %v3828 = vunpack.c.l.b16 %v3309
        %v3829 = vunpack.c.l.b16 %v3310
        %v3830 = vunpack.c.l.b16 %v3311
        %v3831 = vunpack.c.l.b16 %v3312
        %v3832 = vunpack.c.l.b16 %v3313
        %v3833 = vunpack.c.l.b16 %v3314
        %v3834 = vunpack.c.l.b16 %v3315
        %v3835 = vunpack.c.l.b16 %v3316
        %v3836 = vunpack.c.l.b16 %v3317
        %v3837 = vunpack.c.l.b16 %v3318
        %v3838 = vunpack.c.l.b16 %v3319
        %v3839 = vunpack.c.l.b16 %v3320
        %v3840 = vunpack.c.l.b16 %v3321
        %v3841 = vunpack.c.l.b16 %v3322
        %v3842 = vunpack.c.l.b16 %v3323
        %v3843 = vunpack.c.l.b16 %v3324
        %v3844 = vunpack.c.l.b16 %v3325
        %v3845 = vunpack.c.l.b16 %v3326
        %v3846 = vunpack.c.l.b16 %v3327
        %v3847 = vunpack.c.l.b16 %v3328
        %v3848 = vunpack.c.l.b16 %v3329
        %v3849 = vunpack.c.l.b16 %v3330
        %v3850 = vunpack.c.l.b16 %v3331
        %v3851 = vunpack.c.l.b16 %v3332
        %v3852 = vunpack.c.l.b16 %v3333
        %v3853 = vunpack.c.l.b16 %v3334
        %v3854 = vunpack.c.l.b16 %v3335
        %v3855 = vunpack.c.l.b16 %v3336
        %v3856 = vunpack.c.l.b16 %v3337
        %v3857 = vunpack.c.l.b16 %v3338
        %v3858 = vunpack.c.l.b16 %v3339
        %v3859 = vunpack.c.l.b16 %v3340
        %v3860 = vunpack.c.l.b16 %v3341
        %v3861 = vunpack.c.l.b16 %v3342
        %v3862 = vunpack.c.l.b16 %v3343
        %v3863 = vunpack.c.l.b16 %v3344
        %v3864 = vunpack.c.l.b16 %v3345
        %v3865 = vunpack.c.l.b16 %v3346
        %v3866 = vunpack.c.l.b16 %v3347
        %v3867 = vunpack.c.l.b16 %v3348
        %v3868 = vunpack.c.l.b16 %v3349
        %v3869 = vunpack.c.l.b16 %v3350
        %v3870 = vunpack.c.l.b16 %v3351
        %v3871 = vunpack.c.l.b16 %v3352
        %v3872 = vunpack.c.l.b16 %v3353
        %v3873 = vunpack.c.l.b16 %v3354
        %v3874 = vunpack.c.l.b16 %v3355
        %v3875 = vunpack.c.l.b16 %v3356
        %v3876 = vunpack.c.l.b16 %v3357
        %v3877 = vunpack.c.l.b16 %v3358
        %v3878 = vunpack.c.l.b16 %v3359
        %v3879 = vunpack.c.l.b16 %v3360
        %v3880 = vunpack.c.l.b16 %v3361
        %v3881 = vunpack.c.l.b16 %v3362
        %v3882 = vunpack.c.l.b16 %v3363
        %v3883 = vunpack.c.l.b16 %v3364
        %v3884 = vunpack.c.l.b16 %v3365
        %v3885 = vunpack.c.l.b16 %v3366
        %v3886 = vunpack.c.l.b16 %v3367
        %v3887 = vunpack.c.l.b16 %v3368
        %v3888 = vunpack.c.l.b16 %v3369
        %v3889 = vunpack.c.l.b16 %v3370
        %v3890 = vunpack.c.l.b16 %v3371
        %v3891 = vunpack.c.l.b16 %v3372
        %v3892 = vunpack.c.l.b16 %v3373
        %v3893 = vunpack.c.l.b16 %v3374
        %v3894 = vunpack.c.l.b16 %v3375
        %v3895 = vunpack.c.l.b16 %v3376
        %v3896 = vunpack.c.l.b16 %v3377
        %v3897 = vunpack.c.l.b16 %v3378
        %v3898 = vunpack.c.l.b16 %v3379
        %v3899 = vunpack.c.l.b16 %v3380
        %v3900 = vunpack.c.l.b16 %v3381
        %v3901 = vunpack.c.l.b16 %v3382
        %v3902 = vunpack.c.l.b16 %v3383
        %v3903 = vunpack.c.l.b16 %v3384
        %v3904 = vunpack.c.l.b16 %v3385
        %v3905 = vunpack.c.l.b16 %v3386
        %v3906 = vunpack.c.l.b16 %v3387
        %v3907 = vunpack.c.l.b16 %v3388
        %v3908 = vunpack.c.l.b16 %v3389
        %v3909 = vunpack.c.l.b16 %v3390
        %v3910 = vunpack.c.l.b16 %v3391
        %v3911 = vunpack.c.l.b16 %v3392
        %v3912 = vunpack.c.l.b16 %v3393
        %v3913 = vunpack.c.l.b16 %v3394
        %v3914 = vunpack.c.l.b16 %v3395
        %v3915 = vunpack.c.l.b16 %v3396
        %v3916 = vunpack.c.l.b16 %v3397
        %v3917 = vunpack.c.l.b16 %v3398
        %v3918 = vunpack.c.l.b16 %v3399
        %v3919 = vunpack.c.l.b16 %v3400
        %v3920 = vunpack.c.l.b16 %v3401
        %v3921 = vunpack.c.l.b16 %v3402
        %v3922 = vunpack.c.l.b16 %v3403
        %v3923 = vunpack.c.l.b16 %v3404
        %v3924 = vunpack.c.l.b16 %v3405
        %v3925 = vunpack.c.l.b16 %v3406
        %v3926 = vunpack.c.l.b16 %v3407
        %v3927 = vunpack.c.l.b16 %v3408
        %v3928 = vunpack.c.l.b16 %v3409
        %v3929 = vunpack.c.l.b16 %v3410
        %v3930 = vunpack.c.l.b16 %v3411
        %v3931 = vunpack.c.l.b16 %v3412
        %v3932 = vunpack.c.l.b16 %v3413
        %v3933 = vunpack.c.l.b16 %v3414
        %v3934 = vunpack.c.l.b16 %v3415
        %v3935 = vunpack.c.l.b16 %v3416
        %v3936 = vpack.c.b16 %v3681, %v3680
        %v3937 = vpack.c.b16 %v3683, %v3682
        %v3938 = vpack.c.b16 %v3685, %v3684
        %v3939 = vpack.c.b16 %v3687, %v3686
        %v3940 = vpack.c.b16 %v3689, %v3688
        %v3941 = vpack.c.b16 %v3691, %v3690
        %v3942 = vpack.c.b16 %v3693, %v3692
        %v3943 = vpack.c.b16 %v3695, %v3694
        %v3944 = vpack.c.b16 %v3697, %v3696
        %v3945 = vpack.c.b16 %v3699, %v3698
        %v3946 = vpack.c.b16 %v3701, %v3700
        %v3947 = vpack.c.b16 %v3703, %v3702
        %v3948 = vpack.c.b16 %v3705, %v3704
        %v3949 = vpack.c.b16 %v3707, %v3706
        %v3950 = vpack.c.b16 %v3709, %v3708
        %v3951 = vpack.c.b16 %v3711, %v3710
        %v3952 = vpack.c.b16 %v3713, %v3712
        %v3953 = vpack.c.b16 %v3715, %v3714
        %v3954 = vpack.c.b16 %v3717, %v3716
        %v3955 = vpack.c.b16 %v3719, %v3718
        %v3956 = vpack.c.b16 %v3721, %v3720
        %v3957 = vpack.c.b16 %v3723, %v3722
        %v3958 = vpack.c.b16 %v3725, %v3724
        %v3959 = vpack.c.b16 %v3727, %v3726
        %v3960 = vpack.c.b16 %v3729, %v3728
        %v3961 = vpack.c.b16 %v3731, %v3730
        %v3962 = vpack.c.b16 %v3733, %v3732
        %v3963 = vpack.c.b16 %v3735, %v3734
        %v3964 = vpack.c.b16 %v3737, %v3736
        %v3965 = vpack.c.b16 %v3739, %v3738
        %v3966 = vpack.c.b16 %v3741, %v3740
        %v3967 = vpack.c.b16 %v3743, %v3742
        %v3968 = vpack.c.b16 %v3745, %v3744
        %v3969 = vpack.c.b16 %v3747, %v3746
        %v3970 = vpack.c.b16 %v3749, %v3748
        %v3971 = vpack.c.b16 %v3751, %v3750
        %v3972 = vpack.c.b16 %v3753, %v3752
        %v3973 = vpack.c.b16 %v3755, %v3754
        %v3974 = vpack.c.b16 %v3757, %v3756
        %v3975 = vpack.c.b16 %v3759, %v3758
        %v3976 = vpack.c.b16 %v3761, %v3760
        %v3977 = vpack.c.b16 %v3763, %v3762
        %v3978 = vpack.c.b16 %v3765, %v3764
        %v3979 = vpack.c.b16 %v3767, %v3766
        %v3980 = vpack.c.b16 %v3769, %v3768
        %v3981 = vpack.c.b16 %v3771, %v3770
        %v3982 = vpack.c.b16 %v3773, %v3772
        %v3983 = vpack.c.b16 %v3775, %v3774
        %v3984 = vpack.c.b16 %v3777, %v3776
        %v3985 = vpack.c.b16 %v3779, %v3778
        %v3986 = vpack.c.b16 %v3781, %v3780
        %v3987 = vpack.c.b16 %v3783, %v3782
        %v3988 = vpack.c.b16 %v3785, %v3784
        %v3989 = vpack.c.b16 %v3787, %v3786
        %v3990 = vpack.c.b16 %v3789, %v3788
        %v3991 = vpack.c.b16 %v3791, %v3790
        %v3992 = vpack.c.b16 %v3793, %v3792
        %v3993 = vpack.c.b16 %v3795, %v3794
        %v3994 = vpack.c.b16 %v3797, %v3796
        %v3995 = vpack.c.b16 %v3799, %v3798
        %v3996 = vpack.c.b16 %v3801, %v3800
        %v3997 = vpack.c.b16 %v3803, %v3802
        %v3998 = vpack.c.b16 %v3805, %v3804
        %v3999 = vpack.c.b16 %v3807, %v3806
        %v4000 = vpack.c.b16 %v3809, %v3808
        %v4001 = vpack.c.b16 %v3811, %v3810
        %v4002 = vpack.c.b16 %v3813, %v3812
        %v4003 = vpack.c.b16 %v3815, %v3814
        %v4004 = vpack.c.b16 %v3817, %v3816
        %v4005 = vpack.c.b16 %v3819, %v3818
        %v4006 = vpack.c.b16 %v3821, %v3820
        %v4007 = vpack.c.b16 %v3823, %v3822
        %v4008 = vpack.c.b16 %v3825, %v3824
        %v4009 = vpack.c.b16 %v3827, %v3826
        %v4010 = vpack.c.b16 %v3829, %v3828
        %v4011 = vpack.c.b16 %v3831, %v3830
        %v4012 = vpack.c.b16 %v3833, %v3832
        %v4013 = vpack.c.b16 %v3835, %v3834
        %v4014 = vpack.c.b16 %v3837, %v3836
        %v4015 = vpack.c.b16 %v3839, %v3838
        %v4016 = vpack.c.b16 %v3841, %v3840
        %v4017 = vpack.c.b16 %v3843, %v3842
        %v4018 = vpack.c.b16 %v3845, %v3844
        %v4019 = vpack.c.b16 %v3847, %v3846
        %v4020 = vpack.c.b16 %v3849, %v3848
        %v4021 = vpack.c.b16 %v3851, %v3850
        %v4022 = vpack.c.b16 %v3853, %v3852
        %v4023 = vpack.c.b16 %v3855, %v3854
        %v4024 = vpack.c.b16 %v3857, %v3856
        %v4025 = vpack.c.b16 %v3859, %v3858
        %v4026 = vpack.c.b16 %v3861, %v3860
        %v4027 = vpack.c.b16 %v3863, %v3862
        %v4028 = vpack.c.b16 %v3865, %v3864
        %v4029 = vpack.c.b16 %v3867, %v3866
        %v4030 = vpack.c.b16 %v3869, %v3868
        %v4031 = vpack.c.b16 %v3871, %v3870
        %v4032 = vpack.c.b16 %v3873, %v3872
        %v4033 = vpack.c.b16 %v3875, %v3874
        %v4034 = vpack.c.b16 %v3877, %v3876
        %v4035 = vpack.c.b16 %v3879, %v3878
        %v4036 = vpack.c.b16 %v3881, %v3880
        %v4037 = vpack.c.b16 %v3883, %v3882
        %v4038 = vpack.c.b16 %v3885, %v3884
        %v4039 = vpack.c.b16 %v3887, %v3886
        %v4040 = vpack.c.b16 %v3889, %v3888
        %v4041 = vpack.c.b16 %v3891, %v3890
        %v4042 = vpack.c.b16 %v3893, %v3892
        %v4043 = vpack.c.b16 %v3895, %v3894
        %v4044 = vpack.c.b16 %v3897, %v3896
        %v4045 = vpack.c.b16 %v3899, %v3898
        %v4046 = vpack.c.b16 %v3901, %v3900
        %v4047 = vpack.c.b16 %v3903, %v3902
        %v4048 = vpack.c.b16 %v3905, %v3904
        %v4049 = vpack.c.b16 %v3907, %v3906
        %v4050 = vpack.c.b16 %v3909, %v3908
        %v4051 = vpack.c.b16 %v3911, %v3910
        %v4052 = vpack.c.b16 %v3913, %v3912
        %v4053 = vpack.c.b16 %v3915, %v3914
        %v4054 = vpack.c.b16 %v3917, %v3916
        %v4055 = vpack.c.b16 %v3919, %v3918
        %v4056 = vpack.c.b16 %v3921, %v3920
        %v4057 = vpack.c.b16 %v3923, %v3922
        %v4058 = vpack.c.b16 %v3925, %v3924
        %v4059 = vpack.c.b16 %v3927, %v3926
        %v4060 = vpack.c.b16 %v3929, %v3928
        %v4061 = vpack.c.b16 %v3931, %v3930
        %v4062 = vpack.c.b16 %v3933, %v3932
        %v4063 = vpack.c.b16 %v3935, %v3934
        %4192 = vmatprep.subr.bf16.mxu0 0
        %4193 = vmatpush1.bf16.msra.mxu0 %v3943
        %4194 = vmatprep.subr.bf16.mxu0 0
        %4195 = vmatpush1.bf16.msra.mxu0 %v3942
        %4196 = vmatprep.subr.bf16.mxu0 0
        %4197 = vmatpush1.bf16.msra.mxu0 %v3941
        %4198 = vmatprep.subr.bf16.mxu0 0
        %4199 = vmatpush1.bf16.msra.mxu0 %v3940
        %4200 = vmatprep.subr.bf16.mxu0 0
        %4201 = vmatpush1.bf16.msra.mxu0 %v3939
        %4202 = vmatprep.subr.bf16.mxu0 0
        %4203 = vmatpush1.bf16.msra.mxu0 %v3938
        %4204 = vmatprep.subr.bf16.mxu0 0
        %4205 = vmatpush1.bf16.msra.mxu0 %v3937
        %4206 = vmatprep.subr.bf16.mxu0 0
        %4207 = vmatpush1.bf16.msra.mxu0 %v3936
        %4208 = vmatprep.subr.bf16.mxu0 0
        %4209 = vmatpush2.bf16.msra.mxu0 %v3951
        %4210 = vmatprep.subr.bf16.mxu0 0
        %4211 = vmatpush2.bf16.msra.mxu0 %v3950
        %4212 = vmatprep.subr.bf16.mxu0 0
        %4213 = vmatpush2.bf16.msra.mxu0 %v3949
        %4214 = vmatprep.subr.bf16.mxu0 0
        %4215 = vmatpush2.bf16.msra.mxu0 %v3948
        %4216 = vmatprep.subr.bf16.mxu0 0
        %4217 = vmatpush2.bf16.msra.mxu0 %v3947
        %4218 = vmatprep.subr.bf16.mxu0 0
        %4219 = vmatpush2.bf16.msra.mxu0 %v3946
        %4220 = vmatprep.subr.bf16.mxu0 0
        %4221 = vmatpush2.bf16.msra.mxu0 %v3945
        %4222 = vmatprep.subr.bf16.mxu0 0
        %4223 = vmatpush2.bf16.msra.mxu0 %v3944
        %4224 = vmatprep.mubr.bf16.mxu0 %v3146
        %4225 = vmatmul.mubr.bf16.gmra.mxu0 %v3145
        %v4226 = vpop.f32.mrf.mxu0
        %v4227 = vadd.f32 %v3422, %v4226
        %v4228 = vpop.f32.mrf.mxu0
        %v4229 = vpop.f32.mrf.mxu0
        %v4230 = vadd.f32 %v3422, %v4229
        %v4231 = vpop.f32.mrf.mxu0
        %4232 = vdwg.mxu0
        %4233 = vmatprep.subr.bf16.mxu0 0
        %4234 = vmatpush1.bf16.msra.mxu0 %v3959
        %4235 = vmatprep.subr.bf16.mxu0 0
        %4236 = vmatpush1.bf16.msra.mxu0 %v3958
        %4237 = vmatprep.subr.bf16.mxu0 0
        %4238 = vmatpush1.bf16.msra.mxu0 %v3957
        %4239 = vmatprep.subr.bf16.mxu0 0
        %4240 = vmatpush1.bf16.msra.mxu0 %v3956
        %4241 = vmatprep.subr.bf16.mxu0 0
        %4242 = vmatpush1.bf16.msra.mxu0 %v3955
        %4243 = vmatprep.subr.bf16.mxu0 0
        %4244 = vmatpush1.bf16.msra.mxu0 %v3954
        %4245 = vmatprep.subr.bf16.mxu0 0
        %4246 = vmatpush1.bf16.msra.mxu0 %v3953
        %4247 = vmatprep.subr.bf16.mxu0 0
        %4248 = vmatpush1.bf16.msra.mxu0 %v3952
        %4249 = vmatprep.subr.bf16.mxu0 0
        %4250 = vmatpush2.bf16.msra.mxu0 %v3967
        %4251 = vmatprep.subr.bf16.mxu0 0
        %4252 = vmatpush2.bf16.msra.mxu0 %v3966
        %4253 = vmatprep.subr.bf16.mxu0 0
        %4254 = vmatpush2.bf16.msra.mxu0 %v3965
        %4255 = vmatprep.subr.bf16.mxu0 0
        %4256 = vmatpush2.bf16.msra.mxu0 %v3964
        %4257 = vmatprep.subr.bf16.mxu0 0
        %4258 = vmatpush2.bf16.msra.mxu0 %v3963
        %4259 = vmatprep.subr.bf16.mxu0 0
        %4260 = vmatpush2.bf16.msra.mxu0 %v3962
        %4261 = vmatprep.subr.bf16.mxu0 0
        %4262 = vmatpush2.bf16.msra.mxu0 %v3961
        %4263 = vmatprep.subr.bf16.mxu0 0
        %4264 = vmatpush2.bf16.msra.mxu0 %v3960
        %4265 = vmatprep.mubr.bf16.mxu0 %v3148
        %4266 = vmatmul.mubr.bf16.gmra.mxu0 %v3147
        %v4267 = vpop.f32.mrf.mxu0
        %v4268 = vadd.f32 %v4227, %v4267
        %v4269 = vpop.f32.mrf.mxu0
        %v4270 = vpop.f32.mrf.mxu0
        %v4271 = vadd.f32 %v4230, %v4270
        %v4272 = vpop.f32.mrf.mxu0
        %4273 = vdwg.mxu0
        %4274 = vmatprep.subr.bf16.mxu0 0
        %4275 = vmatpush1.bf16.msra.mxu0 %v3975
        %4276 = vmatprep.subr.bf16.mxu0 0
        %4277 = vmatpush1.bf16.msra.mxu0 %v3974
        %4278 = vmatprep.subr.bf16.mxu0 0
        %4279 = vmatpush1.bf16.msra.mxu0 %v3973
        %4280 = vmatprep.subr.bf16.mxu0 0
        %4281 = vmatpush1.bf16.msra.mxu0 %v3972
        %4282 = vmatprep.subr.bf16.mxu0 0
        %4283 = vmatpush1.bf16.msra.mxu0 %v3971
        %4284 = vmatprep.subr.bf16.mxu0 0
        %4285 = vmatpush1.bf16.msra.mxu0 %v3970
        %4286 = vmatprep.subr.bf16.mxu0 0
        %4287 = vmatpush1.bf16.msra.mxu0 %v3969
        %4288 = vmatprep.subr.bf16.mxu0 0
        %4289 = vmatpush1.bf16.msra.mxu0 %v3968
        %4290 = vmatprep.subr.bf16.mxu0 0
        %4291 = vmatpush2.bf16.msra.mxu0 %v3983
        %4292 = vmatprep.subr.bf16.mxu0 0
        %4293 = vmatpush2.bf16.msra.mxu0 %v3982
        %4294 = vmatprep.subr.bf16.mxu0 0
        %4295 = vmatpush2.bf16.msra.mxu0 %v3981
        %4296 = vmatprep.subr.bf16.mxu0 0
        %4297 = vmatpush2.bf16.msra.mxu0 %v3980
        %4298 = vmatprep.subr.bf16.mxu0 0
        %4299 = vmatpush2.bf16.msra.mxu0 %v3979
        %4300 = vmatprep.subr.bf16.mxu0 0
        %4301 = vmatpush2.bf16.msra.mxu0 %v3978
        %4302 = vmatprep.subr.bf16.mxu0 0
        %4303 = vmatpush2.bf16.msra.mxu0 %v3977
        %4304 = vmatprep.subr.bf16.mxu0 0
        %4305 = vmatpush2.bf16.msra.mxu0 %v3976
        %4306 = vmatprep.mubr.bf16.mxu0 %v3150
        %4307 = vmatmul.mubr.bf16.gmra.mxu0 %v3149
        %v4308 = vpop.f32.mrf.mxu0
        %v4309 = vadd.f32 %v4268, %v4308
        %v4310 = vpop.f32.mrf.mxu0
        %v4311 = vpop.f32.mrf.mxu0
        %v4312 = vadd.f32 %v4271, %v4311
        %v4313 = vpop.f32.mrf.mxu0
        %4314 = vdwg.mxu0
        %4315 = vmatprep.subr.bf16.mxu0 0
        %4316 = vmatpush1.bf16.msra.mxu0 %v3991
        %4317 = vmatprep.subr.bf16.mxu0 0
        %4318 = vmatpush1.bf16.msra.mxu0 %v3990
        %4319 = vmatprep.subr.bf16.mxu0 0
        %4320 = vmatpush1.bf16.msra.mxu0 %v3989
        %4321 = vmatprep.subr.bf16.mxu0 0
        %4322 = vmatpush1.bf16.msra.mxu0 %v3988
        %4323 = vmatprep.subr.bf16.mxu0 0
        %4324 = vmatpush1.bf16.msra.mxu0 %v3987
        %4325 = vmatprep.subr.bf16.mxu0 0
        %4326 = vmatpush1.bf16.msra.mxu0 %v3986
        %4327 = vmatprep.subr.bf16.mxu0 0
        %4328 = vmatpush1.bf16.msra.mxu0 %v3985
        %4329 = vmatprep.subr.bf16.mxu0 0
        %4330 = vmatpush1.bf16.msra.mxu0 %v3984
        %4331 = vmatprep.subr.bf16.mxu0 0
        %4332 = vmatpush2.bf16.msra.mxu0 %v3999
        %4333 = vmatprep.subr.bf16.mxu0 0
        %4334 = vmatpush2.bf16.msra.mxu0 %v3998
        %4335 = vmatprep.subr.bf16.mxu0 0
        %4336 = vmatpush2.bf16.msra.mxu0 %v3997
        %4337 = vmatprep.subr.bf16.mxu0 0
        %4338 = vmatpush2.bf16.msra.mxu0 %v3996
        %4339 = vmatprep.subr.bf16.mxu0 0
        %4340 = vmatpush2.bf16.msra.mxu0 %v3995
        %4341 = vmatprep.subr.bf16.mxu0 0
        %4342 = vmatpush2.bf16.msra.mxu0 %v3994
        %4343 = vmatprep.subr.bf16.mxu0 0
        %4344 = vmatpush2.bf16.msra.mxu0 %v3993
        %4345 = vmatprep.subr.bf16.mxu0 0
        %4346 = vmatpush2.bf16.msra.mxu0 %v3992
        %4347 = vmatprep.mubr.bf16.mxu0 %v3152
        %4348 = vmatmul.mubr.bf16.gmra.mxu0 %v3151
        %v4349 = vpop.f32.mrf.mxu0
        %v4350 = vadd.f32 %v4309, %v4349
        %v4351 = vpop.f32.mrf.mxu0
        %v4352 = vpop.f32.mrf.mxu0
        %v4353 = vadd.f32 %v4312, %v4352
        %v4354 = vpop.f32.mrf.mxu0
        %4355 = vdwg.mxu0
        %4356 = vmatprep.subr.bf16.mxu0 0
        %4357 = vmatpush1.bf16.msra.mxu0 %v4007
        %4358 = vmatprep.subr.bf16.mxu0 0
        %4359 = vmatpush1.bf16.msra.mxu0 %v4006
        %4360 = vmatprep.subr.bf16.mxu0 0
        %4361 = vmatpush1.bf16.msra.mxu0 %v4005
        %4362 = vmatprep.subr.bf16.mxu0 0
        %4363 = vmatpush1.bf16.msra.mxu0 %v4004
        %4364 = vmatprep.subr.bf16.mxu0 0
        %4365 = vmatpush1.bf16.msra.mxu0 %v4003
        %4366 = vmatprep.subr.bf16.mxu0 0
        %4367 = vmatpush1.bf16.msra.mxu0 %v4002
        %4368 = vmatprep.subr.bf16.mxu0 0
        %4369 = vmatpush1.bf16.msra.mxu0 %v4001
        %4370 = vmatprep.subr.bf16.mxu0 0
        %4371 = vmatpush1.bf16.msra.mxu0 %v4000
        %4372 = vmatprep.subr.bf16.mxu0 0
        %4373 = vmatpush2.bf16.msra.mxu0 %v4015
        %4374 = vmatprep.subr.bf16.mxu0 0
        %4375 = vmatpush2.bf16.msra.mxu0 %v4014
        %4376 = vmatprep.subr.bf16.mxu0 0
        %4377 = vmatpush2.bf16.msra.mxu0 %v4013
        %4378 = vmatprep.subr.bf16.mxu0 0
        %4379 = vmatpush2.bf16.msra.mxu0 %v4012
        %4380 = vmatprep.subr.bf16.mxu0 0
        %4381 = vmatpush2.bf16.msra.mxu0 %v4011
        %4382 = vmatprep.subr.bf16.mxu0 0
        %4383 = vmatpush2.bf16.msra.mxu0 %v4010
        %4384 = vmatprep.subr.bf16.mxu0 0
        %4385 = vmatpush2.bf16.msra.mxu0 %v4009
        %4386 = vmatprep.subr.bf16.mxu0 0
        %4387 = vmatpush2.bf16.msra.mxu0 %v4008
        %4388 = vmatprep.mubr.bf16.mxu0 %v3154
        %4389 = vmatmul.mubr.bf16.gmra.mxu0 %v3153
        %v4390 = vpop.f32.mrf.mxu0
        %v4391 = vadd.f32 %v4350, %v4390
        %v4392 = vpop.f32.mrf.mxu0
        %v4393 = vpop.f32.mrf.mxu0
        %v4394 = vadd.f32 %v4353, %v4393
        %v4395 = vpop.f32.mrf.mxu0
        %4396 = vdwg.mxu0
        %4397 = vmatprep.subr.bf16.mxu0 0
        %4398 = vmatpush1.bf16.msra.mxu0 %v4023
        %4399 = vmatprep.subr.bf16.mxu0 0
        %4400 = vmatpush1.bf16.msra.mxu0 %v4022
        %4401 = vmatprep.subr.bf16.mxu0 0
        %4402 = vmatpush1.bf16.msra.mxu0 %v4021
        %4403 = vmatprep.subr.bf16.mxu0 0
        %4404 = vmatpush1.bf16.msra.mxu0 %v4020
        %4405 = vmatprep.subr.bf16.mxu0 0
        %4406 = vmatpush1.bf16.msra.mxu0 %v4019
        %4407 = vmatprep.subr.bf16.mxu0 0
        %4408 = vmatpush1.bf16.msra.mxu0 %v4018
        %4409 = vmatprep.subr.bf16.mxu0 0
        %4410 = vmatpush1.bf16.msra.mxu0 %v4017
        %4411 = vmatprep.subr.bf16.mxu0 0
        %4412 = vmatpush1.bf16.msra.mxu0 %v4016
        %4413 = vmatprep.subr.bf16.mxu0 0
        %4414 = vmatpush2.bf16.msra.mxu0 %v4031
        %4415 = vmatprep.subr.bf16.mxu0 0
        %4416 = vmatpush2.bf16.msra.mxu0 %v4030
        %4417 = vmatprep.subr.bf16.mxu0 0
        %4418 = vmatpush2.bf16.msra.mxu0 %v4029
        %4419 = vmatprep.subr.bf16.mxu0 0
        %4420 = vmatpush2.bf16.msra.mxu0 %v4028
        %4421 = vmatprep.subr.bf16.mxu0 0
        %4422 = vmatpush2.bf16.msra.mxu0 %v4027
        %4423 = vmatprep.subr.bf16.mxu0 0
        %4424 = vmatpush2.bf16.msra.mxu0 %v4026
        %4425 = vmatprep.subr.bf16.mxu0 0
        %4426 = vmatpush2.bf16.msra.mxu0 %v4025
        %4427 = vmatprep.subr.bf16.mxu0 0
        %4428 = vmatpush2.bf16.msra.mxu0 %v4024
        %4429 = vmatprep.mubr.bf16.mxu0 %v3156
        %4430 = vmatmul.mubr.bf16.gmra.mxu0 %v3155
        %v4431 = vpop.f32.mrf.mxu0
        %v4432 = vadd.f32 %v4391, %v4431
        %v4433 = vpop.f32.mrf.mxu0
        %v4434 = vpop.f32.mrf.mxu0
        %v4435 = vadd.f32 %v4394, %v4434
        %v4436 = vpop.f32.mrf.mxu0
        %4437 = vdwg.mxu0
        %4438 = vmatprep.subr.bf16.mxu0 0
        %4439 = vmatpush1.bf16.msra.mxu0 %v4039
        %4440 = vmatprep.subr.bf16.mxu0 0
        %4441 = vmatpush1.bf16.msra.mxu0 %v4038
        %4442 = vmatprep.subr.bf16.mxu0 0
        %4443 = vmatpush1.bf16.msra.mxu0 %v4037
        %4444 = vmatprep.subr.bf16.mxu0 0
        %4445 = vmatpush1.bf16.msra.mxu0 %v4036
        %4446 = vmatprep.subr.bf16.mxu0 0
        %4447 = vmatpush1.bf16.msra.mxu0 %v4035
        %4448 = vmatprep.subr.bf16.mxu0 0
        %4449 = vmatpush1.bf16.msra.mxu0 %v4034
        %4450 = vmatprep.subr.bf16.mxu0 0
        %4451 = vmatpush1.bf16.msra.mxu0 %v4033
        %4452 = vmatprep.subr.bf16.mxu0 0
        %4453 = vmatpush1.bf16.msra.mxu0 %v4032
        %4454 = vmatprep.subr.bf16.mxu0 0
        %4455 = vmatpush2.bf16.msra.mxu0 %v4047
        %4456 = vmatprep.subr.bf16.mxu0 0
        %4457 = vmatpush2.bf16.msra.mxu0 %v4046
        %4458 = vmatprep.subr.bf16.mxu0 0
        %4459 = vmatpush2.bf16.msra.mxu0 %v4045
        %4460 = vmatprep.subr.bf16.mxu0 0
        %4461 = vmatpush2.bf16.msra.mxu0 %v4044
        %4462 = vmatprep.subr.bf16.mxu0 0
        %4463 = vmatpush2.bf16.msra.mxu0 %v4043
        %4464 = vmatprep.subr.bf16.mxu0 0
        %4465 = vmatpush2.bf16.msra.mxu0 %v4042
        %4466 = vmatprep.subr.bf16.mxu0 0
        %4467 = vmatpush2.bf16.msra.mxu0 %v4041
        %4468 = vmatprep.subr.bf16.mxu0 0
        %4469 = vmatpush2.bf16.msra.mxu0 %v4040
        %4470 = vmatprep.mubr.bf16.mxu0 %v3158
        %4471 = vmatmul.mubr.bf16.gmra.mxu0 %v3157
        %v4472 = vpop.f32.mrf.mxu0
        %v4473 = vadd.f32 %v4432, %v4472
        %v4474 = vpop.f32.mrf.mxu0
        %v4475 = vpop.f32.mrf.mxu0
        %v4476 = vadd.f32 %v4435, %v4475
        %v4477 = vpop.f32.mrf.mxu0
        %4478 = vdwg.mxu0
        %4479 = vmatprep.subr.bf16.mxu0 0
        %4480 = vmatpush1.bf16.msra.mxu0 %v4055
        %4481 = vmatprep.subr.bf16.mxu0 0
        %4482 = vmatpush1.bf16.msra.mxu0 %v4054
        %4483 = vmatprep.subr.bf16.mxu0 0
        %4484 = vmatpush1.bf16.msra.mxu0 %v4053
        %4485 = vmatprep.subr.bf16.mxu0 0
        %4486 = vmatpush1.bf16.msra.mxu0 %v4052
        %4487 = vmatprep.subr.bf16.mxu0 0
        %4488 = vmatpush1.bf16.msra.mxu0 %v4051
        %4489 = vmatprep.subr.bf16.mxu0 0
        %4490 = vmatpush1.bf16.msra.mxu0 %v4050
        %4491 = vmatprep.subr.bf16.mxu0 0
        %4492 = vmatpush1.bf16.msra.mxu0 %v4049
        %4493 = vmatprep.subr.bf16.mxu0 0
        %4494 = vmatpush1.bf16.msra.mxu0 %v4048
        %4495 = vmatprep.subr.bf16.mxu0 0
        %4496 = vmatpush2.bf16.msra.mxu0 %v4063
        %4497 = vmatprep.subr.bf16.mxu0 0
        %4498 = vmatpush2.bf16.msra.mxu0 %v4062
        %4499 = vmatprep.subr.bf16.mxu0 0
        %4500 = vmatpush2.bf16.msra.mxu0 %v4061
        %4501 = vmatprep.subr.bf16.mxu0 0
        %4502 = vmatpush2.bf16.msra.mxu0 %v4060
        %4503 = vmatprep.subr.bf16.mxu0 0
        %4504 = vmatpush2.bf16.msra.mxu0 %v4059
        %4505 = vmatprep.subr.bf16.mxu0 0
        %4506 = vmatpush2.bf16.msra.mxu0 %v4058
        %4507 = vmatprep.subr.bf16.mxu0 0
        %4508 = vmatpush2.bf16.msra.mxu0 %v4057
        %4509 = vmatprep.subr.bf16.mxu0 0
        %4510 = vmatpush2.bf16.msra.mxu0 %v4056
        %4511 = vmatprep.mubr.bf16.mxu0 %v3160
        %4512 = vmatmul.mubr.bf16.gmra.mxu0 %v3159
        %v4513 = vpop.f32.mrf.mxu0
        %v4514 = vadd.f32 %v4473, %v4513
        %v4515 = vpop.f32.mrf.mxu0
        %v4516 = vpop.f32.mrf.mxu0
        %v4517 = vadd.f32 %v4476, %v4516
        %v4518 = vpop.f32.mrf.mxu0
        %4519 = vdwg.mxu0
        %v4520 = vadd.f32 %v2487, %v4514
        %v4521 = vadd.f32 %v2488, %v4517
        %v4522 = vld [vmem:[%s745] sm:$0x1]
        %v4523 = vld [vmem:[%s748] sm:$0x1]
        %v4524 = vsel %vm858, %v4520, 0.0
        %4525 = vadd.xlane.f32.xlu0 %v4524
        %v4526 = vpop.xlane.xlu0 %4525
        %v4527 = vsel %vm858, %v4521, 0.0
        %4528 = vadd.xlane.f32.xlu0 %v4527
        %v4529 = vpop.xlane.xlu0 %4528
        %v4530 = vmul.f32 %v4526, %v2452
        %v4531 = vmul.f32 %v4529, %v2452
        %v4532 = vsub.f32 %v4520, %v4530
        %v4533 = vsub.f32 %v4521, %v4531
        %v4534 = vmul.f32 %v4532, %v4532
        %v4535 = vmul.f32 %v4533, %v4533
        %v4536 = vsel %vm858, %v4534, 0.0
        %4537 = vadd.xlane.f32.xlu0 %v4536
        %v4538 = vpop.xlane.xlu0 %4537
        %v4539 = vsel %vm858, %v4535, 0.0
        %4540 = vadd.xlane.f32.xlu0 %v4539
        %v4541 = vpop.xlane.xlu0 %4540
        %v4542 = vmul.f32 %v4538, %v2452
        %v4543 = vmul.f32 %v4541, %v2452
        %v4544 = vadd.f32 %v4542, 1e-05
        %v4545 = vadd.f32 %v4543, 1e-05
        %v4546 = vrsqrt.pop %v4544
        %v4547 = vrsqrt.pop %v4545
        %v4548 = vmul.f32 %v4532, %v4546
        %v4549 = vmul.f32 %v4533, %v4547
        %v4551 = vlaneseq
        %v4552 = vshrl.u32 %v4551, 7
        %v4553 = vsub.s32 0, %v4552
        %v4554 = vrot.slane %v4522, %v4553
        %v4556 = vmul.f32 %v4548, %v4554
        %v4557 = vmul.f32 %v4549, %v4554
        %v4559 = vlaneseq
        %v4560 = vshrl.u32 %v4559, 7
        %v4561 = vsub.s32 0, %v4560
        %v4562 = vrot.slane %v4523, %v4561
        %v4564 = vadd.f32 %v4556, %v4562
        %v4565 = vadd.f32 %v4557, %v4562
        %v4566 = vpack.c.bf16 %v4565, %v4564
        %v4568 = vunpack.c.l.b16 %v4566
        %v4569 = vunpack.c.h.b16 %v4566
        %v4570 = vpack.c.b16 %v4568, %v4568
        %v4571 = vpack.c.b16 %v4569, %v4569
        %vm4574 = vcmask 257024
        %4575 = vst.msk [vmem:[#allocation2] sm:$0xf] %vm4574, %v4570
        %4576 = vst.msk [vmem:[#allocation2 + $0x4] sm:$0xf] %vm4574, %v4571
        %p4577 = scmp.eq.s32.totalorder %s34, 1
        // Predicated region
        $region93: #{tpu_custom_call.1} parent=87 // pred_check
          %p4578 = pneg %p4577
        $region94: #{tpu_custom_call.1} parent=87 // pred_check_branch
          %4580 = sbr.rel (%p4578) target = $region96
        $region95: #{tpu_custom_call.1} parent=87 // pred_region
          %v4581 = vld [vmem:[#allocation2] sm:$0x8]
          %v4582 = vld [vmem:[#allocation2 + $0x4] sm:$0x8]
          %v4583 = vld [vmem:[%s3] sm:$0xf]
          %v4584 = vld [vmem:[%s3 + $0x4] sm:$0xf]
          %v4585 = vld [vmem:[%s3 + $0x8] sm:$0xf]
          %v4586 = vld [vmem:[%s3 + $0xc] sm:$0xf]
          %v4587 = vld [vmem:[%s4] sm:$0x1]
          %v4589 = vlaneseq
          %v4590 = vshrl.u32 %v4589, 7
          %v4591 = vsub.s32 0, %v4590
          %v4592 = vrot.slane %v4587, %v4591
          %v4596 = vunpack.c.l.b16 %v4581
          %v4597 = vunpack.c.l.b16 %v4582
          %v4598 = vpack.c.b16 %v4596, %v4596
          %v4599 = vpack.c.b16 %v4597, %v4597
          %v4600 = vunpack.c.l.b16 %v4598
          %v4601 = vunpack.c.l.b16 %v4599
          %v4602 = vrot.slane %v4600, 7
          %v4603 = vrot.slane %v4601, 6
          %vm4604 = vcmask 1041409
          %v4605 = vsel %vm4604, %v4603, %v4602
          %v4606 = vpack.c.b16 %v4605, %v4605
          %v4611 = vunpack.c.l.b16 %v4583
          %v4612 = vunpack.c.l.b16 %v4584
          %v4613 = vunpack.c.l.b16 %v4585
          %v4614 = vunpack.c.l.b16 %v4586
          %v4615 = vpack.c.b16 %v4612, %v4611
          %v4616 = vpack.c.b16 %v4614, %v4613
          %v4620 = vsel %vm858, %v4606, 0
          %4622 = vmatprep.subr.bf16.mxu0 0
          %4623 = vmatpush1.bf16.msra.mxu0 0
          %4624 = vmatprep.subr.bf16.mxu0 0
          %4625 = vmatpush1.bf16.msra.mxu0 0
          %4626 = vmatprep.subr.bf16.mxu0 0
          %4627 = vmatpush1.bf16.msra.mxu0 0
          %4628 = vmatprep.subr.bf16.mxu0 0
          %4629 = vmatpush1.bf16.msra.mxu0 0
          %4630 = vmatprep.subr.bf16.mxu0 0
          %4631 = vmatpush1.bf16.msra.mxu0 0
          %4632 = vmatprep.subr.bf16.mxu0 0
          %4633 = vmatpush1.bf16.msra.mxu0 0
          %4634 = vmatprep.subr.bf16.mxu0 0
          %4635 = vmatpush1.bf16.msra.mxu0 %v4616
          %4636 = vmatprep.subr.bf16.mxu0 0
          %4637 = vmatpush1.bf16.msra.mxu0 %v4615
          %4638 = vmatprep.subr.bf16.mxu0 0
          %4639 = vmatpush2.bf16.msra.mxu0 0
          %4640 = vmatprep.subr.bf16.mxu0 0
          %4641 = vmatpush2.bf16.msra.mxu0 0
          %4642 = vmatprep.subr.bf16.mxu0 0
          %4643 = vmatpush2.bf16.msra.mxu0 0
          %4644 = vmatprep.subr.bf16.mxu0 0
          %4645 = vmatpush2.bf16.msra.mxu0 0
          %4646 = vmatprep.subr.bf16.mxu0 0
          %4647 = vmatpush2.bf16.msra.mxu0 0
          %4648 = vmatprep.subr.bf16.mxu0 0
          %4649 = vmatpush2.bf16.msra.mxu0 0
          %4650 = vmatprep.subr.bf16.mxu0 0
          %4651 = vmatpush2.bf16.msra.mxu0 0
          %4652 = vmatprep.subr.bf16.mxu0 0
          %4653 = vmatpush2.bf16.msra.mxu0 0
          %4654 = vmatprep.mubr.bf16.mxu0 0
          %4655 = vmatmul.mubr.bf16.gmra.mxu0 %v4620
          %v4656 = vpop.f32.mrf.mxu0
          %v4657 = vadd.f32 %v4592, %v4656
          %v4658 = vpop.f32.mrf.mxu0
          %v4659 = vpop.f32.mrf.mxu0
          %v4660 = vpop.f32.mrf.mxu0
          %4661 = vdwg.mxu0
          %vm4662 = vcmask 25600
          %4663 = vst.msk [vmem:[#allocation3] sm:$0x3] %vm4662, %v4657
        $region96: #{tpu_custom_call.1} parent=87 // pred_fallthru
          _
        // Predicated region
        $region97: #{tpu_custom_call.1} parent=87 // pred_check
          %p4664 = pneg %p481
        $region98: #{tpu_custom_call.1} parent=87 // pred_check_branch
          %4666 = sbr.rel (%p4664) target = $region100
        $region99: #{tpu_custom_call.1} parent=87 // pred_region
          %s4668 = ssub.s32 32, 32
          %4669 = vsyncadd [#allocation4], %s4668
          %s4670 = smul.addr %s33, 32
          %s4671 = scalar_lea.hbm %s17, %s4670
          %s4673 = sshll.u32 [#allocation3], 4
          %s4674 = int_to_ptr.vmem [resolvable:$true] %s4673
          %4676 = dma.vmem_to_hbm [thread:$0]  %s4674, 32, %s4671, [#allocation4]
        $region100: #{tpu_custom_call.1} parent=87 // pred_fallthru
          _
        // Predicated region
        $region101: #{tpu_custom_call.1} parent=87 // pred_check
          %p4677 = pneg %p481
        $region102: #{tpu_custom_call.1} parent=87 // pred_check_branch
          %4679 = sbr.rel (%p4677) target = $region104
        $region103: #{tpu_custom_call.1} parent=87 // pred_region
          %4680 = dma.done [#allocation4], 32
        $region104: #{tpu_custom_call.1} parent=87 // pred_fallthru
          _
      $region88: #{tpu_custom_call.1} parent=5 // pred_fallthru
        _
      %p4681 = scmp.le.s32.totalorder 2, %s24
      // Predicated region
      $region105: #{tpu_custom_call.1} parent=5 // pred_check
        %p4682 = pneg %p4681
      $region106: #{tpu_custom_call.1} parent=5 // pred_check_branch
        %4684 = sbr.rel (%p4682) target = $region108
      $region107: #{tpu_custom_call.1} parent=5 // pred_region
        %s4685 = ssub.s32 %s24, 2
      $region108: #{tpu_custom_call.1} parent=5 // pred_fallthru
        _
    $region6: #{tpu_custom_call.1} parent=1 // loop_footer
      %s28 = sadd.s32 1, %s24
    $region7: #{tpu_custom_call.1} parent=1 // loop_footer_branch
      %23 = sbr.rel target = $region3
    $region8: #{tpu_custom_call.1} parent=1 // loop_exit
      _
    %4686 = vsyncpa [#allocation4], 1
    %s4687 = scalar_lea.sflag [#allocation4], 1
    %4688 = vsyncpa %s4687, 1

</llo_original>
